<compile_context>
chip_gen: v7x
topology: tpu7x:2x2x1
jax: 0.10.0
libtpu: 0.0.40
codegen_flags: <defaults>
</compile_context>

<pallas_src>
import functools

import jax
import jax.numpy as jnp
from jax.experimental import pallas as pl
from jax.experimental.pallas import tpu as pltpu


def _round_up(n, m):
    return ((n + m - 1) // m) * m


def _pad2(a, rows, cols):
    r, c = a.shape
    return jnp.pad(a, ((0, rows - r), (0, cols - c)))


# ---------------------------------------------------------------------------
# Pallas kernel: full VAE forward on one batch tile.
# ---------------------------------------------------------------------------
def vae_kernel(
    x_ref, eps_ref,
    w1_ref, b1_ref,          # encoder linear1 (BN1 folded in)
    w2_ref, b2_ref,          # encoder linear2 (BN2 folded in)
    wh_ref, bh_ref,          # packed [mean | logvar] head
    wd1_ref, bd1_ref,        # decoder linear1 (BN1 folded in)
    wd2_ref, bd2_ref,        # decoder linear2 (BN2 folded in)
    wd3_ref, bd3_ref,        # decoder linear3
    xhat_ref, ml_ref,        # outputs: x_hat, packed [mean | logvar]
    *, latent, head_w,
):
    def lrelu(h):  # LeakyReLU(0.2), f32 VPU math
        return jnp.where(h > 0, h, 0.2 * h)

    def dense(h_bf16, w_ref, b_ref):
        # bf16 MXU operands, f32 accumulation, f32 bias.
        return jnp.dot(h_bf16, w_ref[...],
                       preferred_element_type=jnp.float32) + b_ref[...]

    # ----- Encoder (dropout = identity in eval) -----
    h = lrelu(dense(x_ref[...], w1_ref, b1_ref)).astype(jnp.bfloat16)
    h = lrelu(dense(h, w2_ref, b2_ref)).astype(jnp.bfloat16)
    ml = dense(h, wh_ref, bh_ref)            # (TB, head_w): mean | logvar | 0

    mean = ml[:, :latent]
    # Realign logvar (lanes [latent, 2*latent)) onto lanes [0, latent) with an
    # XLU lane rotation (off the VALU critical slot), then take the prefix.
    logvar = pltpu.roll(ml, shift=head_w - latent, axis=1)[:, :latent]

    # ----- Reparameterization -----
    z = mean + eps_ref[...] * jnp.exp(0.5 * logvar)      # (TB, latent) f32

    # ----- Decoder -----
    d = lrelu(dense(z.astype(jnp.bfloat16), wd1_ref, bd1_ref)).astype(jnp.bfloat16)
    d = lrelu(dense(d, wd2_ref, bd2_ref)).astype(jnp.bfloat16)
    d = dense(d, wd3_ref, bd3_ref)

    xhat_ref[...] = jax.nn.sigmoid(d)
    ml_ref[...] = ml


# ---------------------------------------------------------------------------
# Parameter preparation (outside the kernel): BN fold, head packing, padding
# of lane dims to 128 (K dims kept at true width), bf16 cast of matmul weights.
# ---------------------------------------------------------------------------
def fold_params(p):
    """Fold eval-mode BatchNorm (scale s, shift t) into adjacent Linear."""
    def fold(w, b, s, t):
        return w * s, b * s + t

    fp = {}
    fp["w1"], fp["b1"] = fold(p["w1"], p["b1"], p["s1"], p["t1"])
    fp["w2"], fp["b2"] = fold(p["w2"], p["b2"], p["s2"], p["t2"])
    fp["wm"], fp["bm"] = p["wm"], p["bm"]
    fp["wv"], fp["bv"] = p["wv"], p["bv"]
    fp["wd1"], fp["bd1"] = fold(p["wd1"], p["bd1"], p["sd1"], p["td1"])
    fp["wd2"], fp["bd2"] = fold(p["wd2"], p["bd2"], p["sd2"], p["td2"])
    fp["wd3"], fp["bd3"] = p["wd3"], p["bd3"]
    return fp


def prepare_params(p, input_dim, hidden_dims, latent_dim):
    h0, h1 = hidden_dims
    Dp = _round_up(input_dim, 128)
    H0p = _round_up(h0, 128)
    H1p = _round_up(h1, 128)
    Mw = _round_up(2 * latent_dim, 128)      # packed [mean | logvar] lane width

    fp = fold_params(p)

    def wpad(w, rows, cols):
        return _pad2(w, rows, cols).astype(jnp.bfloat16)

    def bpad(b, cols):
        return _pad2(b, 1, cols).astype(jnp.float32)

    # Packed head: mean in lanes [0, latent), logvar in lanes [latent, 2*latent),
    # zero-padded to Mw lanes -> one dot, half the ml writeback vs 2*Lp padding.
    wh = _pad2(jnp.concatenate([fp["wm"], fp["wv"]], axis=1),
               H1p, Mw).astype(jnp.bfloat16)
    bh = _pad2(jnp.concatenate([fp["bm"], fp["bv"]], axis=1),
               1, Mw).astype(jnp.float32)

    arrays = (
        wpad(fp["w1"], input_dim, H0p), bpad(fp["b1"], H0p),   # true K (unpadded x)
        wpad(fp["w2"], H0p, H1p), bpad(fp["b2"], H1p),
        wh, bh,
        wpad(fp["wd1"], latent_dim, H1p), bpad(fp["bd1"], H1p),  # true K (unpadded z)
        wpad(fp["wd2"], H1p, H0p), bpad(fp["bd2"], H0p),
        wpad(fp["wd3"], H0p, Dp), bpad(fp["bd3"], Dp),
    )
    dims = dict(Dp=Dp, H0p=H0p, H1p=H1p, Mw=Mw)
    return arrays, dims


# ---------------------------------------------------------------------------
# Wrapper: batch-tiled pallas_call with resident (constant index_map) weights.
# ---------------------------------------------------------------------------
def vae1_forward(x, eps, prep_arrays, prep_dims, *, block_b=512):
    (w1, b1, w2, b2, wh, bh, wd1, bd1, wd2, bd2, wd3, bd3) = prep_arrays
    Dp, Mw = prep_dims["Dp"], prep_dims["Mw"]

    B, input_dim = x.shape
    latent_dim = eps.shape[1]

    # Batch tile: big to amortize per-grid-step overhead on single-TC v5e/v6e,
    # but keep >= 2 grid steps when the batch allows so the 2nd TensorCore on
    # v7x gets work.  16-aligned so the bf16 x tile is sublane-legal.
    Bp16 = _round_up(B, 16)
    TB = min(block_b, Bp16)
    if TB >= Bp16 and Bp16 >= 32:
        TB = _round_up((Bp16 + 1) // 2, 16)
    Bp = _round_up(B, TB)

    # x is only an MXU operand -> bf16 (halves its HBM read); eps stays f32.
    # No feature-dim padding; pad batch only when TB does not divide B.
    xb = x.astype(jnp.bfloat16)
    epsb = eps.astype(jnp.float32)
    if Bp != B:
        xb = jnp.pad(xb, ((0, Bp - B), (0, 0)))
        epsb = jnp.pad(epsb, ((0, Bp - B), (0, 0)))

    grid = (Bp // TB,)

    def resident(a):
        return pl.BlockSpec(a.shape, lambda i: (0, 0))

    in_specs = [
        pl.BlockSpec((TB, input_dim), lambda i: (i, 0)),    # x tile (bf16, true width)
        pl.BlockSpec((TB, latent_dim), lambda i: (i, 0)),   # eps tile (f32, true width)
    ] + [resident(a) for a in (w1, b1, w2, b2, wh, bh,
                               wd1, bd1, wd2, bd2, wd3, bd3)]

    out_specs = (
        pl.BlockSpec((TB, Dp), lambda i: (i, 0)),      # x_hat (lane-dense, >=128)
        pl.BlockSpec((TB, Mw), lambda i: (i, 0)),      # packed [mean | logvar]
    )
    out_shape = (
        jax.ShapeDtypeStruct((Bp, Dp), jnp.float32),
        jax.ShapeDtypeStruct((Bp, Mw), jnp.float32),
    )

    kernel = functools.partial(vae_kernel, latent=latent_dim, head_w=Mw)

    f = pl.pallas_call(
        kernel,
        out_shape=out_shape,
        grid=grid,
        in_specs=in_specs,
        out_specs=out_specs,
        compiler_params=pltpu.CompilerParams(
            dimension_semantics=("parallel",),      # megacore-shard batch (v7x)
        ),
    )
    xhat_p, ml_p = f(xb, epsb, w1, b1, w2, b2, wh, bh,
                     wd1, bd1, wd2, bd2, wd3, bd3)

    x_hat = xhat_p[:B, :input_dim]
    mean = ml_p[:B, :latent_dim]
    logvar = ml_p[:B, latent_dim:2 * latent_dim]
    return x_hat, mean, logvar


# ---------------------------------------------------------------------------
# Deterministic parameter construction (mirrors nn.Linear / nn.BatchNorm1d
# shapes from the module's __init__).  BN params are expressed as per-feature
# scale/shift (eval mode).
# ---------------------------------------------------------------------------
def make_params(key, input_dim, hidden_dims, latent_dim):
    h0, h1 = hidden_dims
    ks = iter(jax.random.split(key, 32))

    def linear(fan_in, fan_out):
        bound = 1.0 / jnp.sqrt(fan_in)
        w = jax.random.uniform(next(ks), (fan_in, fan_out), jnp.float32, -bound, bound)
        b = jax.random.uniform(next(ks), (1, fan_out), jnp.float32, -bound, bound)
        return w, b

    def bn_fold(n):
        gamma = 1.0 + 0.1 * jax.random.normal(next(ks), (1, n), jnp.float32)
        beta = 0.1 * jax.random.normal(next(ks), (1, n), jnp.float32)
        rmean = 0.05 * jax.random.normal(next(ks), (1, n), jnp.float32)
        rvar = 1.0 + 0.1 * jax.random.uniform(next(ks), (1, n), jnp.float32)
        scale = gamma / jnp.sqrt(rvar + 1e-5)
        shift = beta - rmean * scale
        return scale, shift

    p = {}
    # Encoder
    p["w1"], p["b1"] = linear(input_dim, h0)
    p["s1"], p["t1"] = bn_fold(h0)
    p["w2"], p["b2"] = linear(h0, h1)
    p["s2"], p["t2"] = bn_fold(h1)
    p["wm"], p["bm"] = linear(h1, latent_dim)
    p["wv"], p["bv"] = linear(h1, latent_dim)
    # Decoder
    p["wd1"], p["bd1"] = linear(latent_dim, h1)
    p["sd1"], p["td1"] = bn_fold(h1)
    p["wd2"], p["bd2"] = linear(h1, h0)
    p["sd2"], p["td2"] = bn_fold(h0)
    p["wd3"], p["bd3"] = linear(h0, input_dim)
    return p


# Pure-JAX references for sanity checks.
def vae1_ref(x, eps, p):
    """f32, unfolded parameters — exact eval-mode module semantics."""
    lrelu = lambda h: jnp.where(h > 0, h, 0.2 * h)
    h = lrelu((x @ p["w1"] + p["b1"]) * p["s1"] + p["t1"])
    h = lrelu((h @ p["w2"] + p["b2"]) * p["s2"] + p["t2"])
    mean = h @ p["wm"] + p["bm"]
    logvar = h @ p["wv"] + p["bv"]
    z = mean + eps * jnp.exp(0.5 * logvar)
    d = lrelu((z @ p["wd1"] + p["bd1"]) * p["sd1"] + p["td1"])
    d = lrelu((d @ p["wd2"] + p["bd2"]) * p["sd2"] + p["td2"])
    x_hat = jax.nn.sigmoid(d @ p["wd3"] + p["bd3"])
    return x_hat, mean, logvar


def vae1_ref_bf16(x, eps, fp):
    """Folded params, bf16 matmul operands, f32 accumulation — matches kernel math."""
    bdot = lambda a, w: jnp.dot(a.astype(jnp.bfloat16), w.astype(jnp.bfloat16),
                                preferred_element_type=jnp.float32)
    lrelu = lambda h: jnp.where(h > 0, h, 0.2 * h)
    h = lrelu(bdot(x, fp["w1"]) + fp["b1"])
    h = lrelu(bdot(h, fp["w2"]) + fp["b2"])
    mean = bdot(h, fp["wm"]) + fp["bm"]
    logvar = bdot(h, fp["wv"]) + fp["bv"]
    z = mean + eps * jnp.exp(0.5 * logvar)
    d = lrelu(bdot(z, fp["wd1"]) + fp["bd1"])
    d = lrelu(bdot(d, fp["wd2"]) + fp["bd2"])
    x_hat = jax.nn.sigmoid(bdot(d, fp["wd3"]) + fp["bd3"])
    return x_hat, mean, logvar


if __name__ == "__main__":
    # Small, module-consistent shapes; batch large enough to exercise the
    # 2-step ("parallel") batch grid with TB=256.
    B, input_dim, hidden_dims, latent_dim = 512, 32, (64, 32), 16
    dropout_rate = 0.1  # unused in eval-mode forward

    key = jax.random.PRNGKey(0)
    kx, keps, kp = jax.random.split(key, 3)
    x = jax.random.normal(kx, (B, input_dim), jnp.float32)
    eps = jax.random.normal(keps, (B, latent_dim), jnp.float32)
    params = make_params(kp, input_dim, hidden_dims, latent_dim)

    prep_arrays, prep_dims = prepare_params(params, input_dim, hidden_dims, latent_dim)

    x_hat, mean, logvar = jax.block_until_ready(
        vae1_forward(x, eps, prep_arrays, prep_dims, block_b=512))

    # Tight check against a bf16-matched reference (same math as the kernel).
    folded = fold_params(params)
    mx, mm, mv = vae1_ref_bf16(x, eps, folded)
    assert jnp.allclose(x_hat, mx, atol=1e-3, rtol=1e-3), "x_hat mismatch (bf16 ref)"
    assert jnp.allclose(mean, mm, atol=1e-3, rtol=1e-3), "mean mismatch (bf16 ref)"
    assert jnp.allclose(logvar, mv, atol=1e-3, rtol=1e-3), "logvar mismatch (bf16 ref)"

    # Loose semantics check against the pure-f32 unfolded reference.
    rx, rm, rv = vae1_ref(x, eps, params)
    assert jnp.allclose(x_hat, rx, atol=1e-1), "x_hat mismatch (f32 ref)"
    assert jnp.allclose(mean, rm, atol=1e-1), "mean mismatch (f32 ref)"
    assert jnp.allclose(logvar, rv, atol=1e-1), "logvar mismatch (f32 ref)"

    print("KERNEL_OK")
</pallas_src>

<mosaic_0001>
module attributes {stable_mosaic.version = 11 : i64} {
  func.func @vae_kernel(%arg0: i32, %arg1: memref<256x32xbf16, #tpu.memory_space<vmem>>, %arg2: memref<256x16xf32, #tpu.memory_space<vmem>>, %arg3: memref<32x128xbf16, #tpu.memory_space<vmem>>, %arg4: memref<1x128xf32, #tpu.memory_space<vmem>>, %arg5: memref<128x128xbf16, #tpu.memory_space<vmem>>, %arg6: memref<1x128xf32, #tpu.memory_space<vmem>>, %arg7: memref<128x128xbf16, #tpu.memory_space<vmem>>, %arg8: memref<1x128xf32, #tpu.memory_space<vmem>>, %arg9: memref<16x128xbf16, #tpu.memory_space<vmem>>, %arg10: memref<1x128xf32, #tpu.memory_space<vmem>>, %arg11: memref<128x128xbf16, #tpu.memory_space<vmem>>, %arg12: memref<1x128xf32, #tpu.memory_space<vmem>>, %arg13: memref<128x128xbf16, #tpu.memory_space<vmem>>, %arg14: memref<1x128xf32, #tpu.memory_space<vmem>>, %arg15: memref<256x128xf32, #tpu.memory_space<vmem>>, %arg16: memref<256x128xf32, #tpu.memory_space<vmem>>) attributes {dimension_semantics = [#tpu.dimension_semantics<parallel>], iteration_bounds = array<i64: 2>, scalar_prefetch = 0 : i64, scratch_operands = 0 : i64, tpu.core_type = #tpu.core_type<tc>, window_params = [{transform_indices = @transform_0, window_bounds = array<i64: 256, 32>}, {transform_indices = @transform_1, window_bounds = array<i64: 256, 16>}, {pipeline_mode = #tpu.pipeline_mode<synchronous>, transform_indices = @transform_2, window_bounds = array<i64: 32, 128>}, {pipeline_mode = #tpu.pipeline_mode<synchronous>, transform_indices = @transform_3, window_bounds = array<i64: 1, 128>}, {pipeline_mode = #tpu.pipeline_mode<synchronous>, transform_indices = @transform_4, window_bounds = array<i64: 128, 128>}, {pipeline_mode = #tpu.pipeline_mode<synchronous>, transform_indices = @transform_5, window_bounds = array<i64: 1, 128>}, {pipeline_mode = #tpu.pipeline_mode<synchronous>, transform_indices = @transform_6, window_bounds = array<i64: 128, 128>}, {pipeline_mode = #tpu.pipeline_mode<synchronous>, transform_indices = @transform_7, window_bounds = array<i64: 1, 128>}, {pipeline_mode = #tpu.pipeline_mode<synchronous>, transform_indices = @transform_8, window_bounds = array<i64: 16, 128>}, {pipeline_mode = #tpu.pipeline_mode<synchronous>, transform_indices = @transform_9, window_bounds = array<i64: 1, 128>}, {pipeline_mode = #tpu.pipeline_mode<synchronous>, transform_indices = @transform_10, window_bounds = array<i64: 128, 128>}, {pipeline_mode = #tpu.pipeline_mode<synchronous>, transform_indices = @transform_11, window_bounds = array<i64: 1, 128>}, {pipeline_mode = #tpu.pipeline_mode<synchronous>, transform_indices = @transform_12, window_bounds = array<i64: 128, 128>}, {pipeline_mode = #tpu.pipeline_mode<synchronous>, transform_indices = @transform_13, window_bounds = array<i64: 1, 128>}, {transform_indices = @transform_14, window_bounds = array<i64: 256, 128>}, {transform_indices = @transform_15, window_bounds = array<i64: 256, 128>}]} {
    %c0 = arith.constant 0 : index
    %c0_0 = arith.constant 0 : index
    %0 = vector.load %arg1[%c0, %c0_0] : memref<256x32xbf16, #tpu.memory_space<vmem>>, vector<256x32xbf16>
    %c0_1 = arith.constant 0 : index
    %c0_2 = arith.constant 0 : index
    %1 = vector.load %arg3[%c0_1, %c0_2] : memref<32x128xbf16, #tpu.memory_space<vmem>>, vector<32x128xbf16>
    %cst = arith.constant dense<0.000000e+00> : vector<256x128xf32>
    %2 = tpu.matmul %0, %1, %cst {dimension_numbers = #tpu.dot_dimension_numbers<[1], [0], [0], [1], [0, 0, 1, 1], [], []>} : vector<256x32xbf16>, vector<32x128xbf16>, vector<256x128xf32> -> vector<256x128xf32>
    %c0_3 = arith.constant 0 : index
    %c0_4 = arith.constant 0 : index
    %3 = vector.load %arg4[%c0_3, %c0_4] : memref<1x128xf32, #tpu.memory_space<vmem>>, vector<1x128xf32>
    %4 = vector.broadcast %3 : vector<1x128xf32> to vector<256x128xf32>
    %5 = arith.addf %2, %4 : vector<256x128xf32>
    %cst_5 = arith.constant 0.000000e+00 : f32
    %6 = vector.broadcast %cst_5 : f32 to vector<256x128xf32>
    %7 = arith.cmpf ogt, %5, %6 : vector<256x128xf32>
    %cst_6 = arith.constant 2.000000e-01 : f32
    %8 = vector.broadcast %cst_6 : f32 to vector<256x128xf32>
    %9 = arith.mulf %8, %5 : vector<256x128xf32>
    %10 = arith.select %7, %5, %9 : vector<256x128xi1>, vector<256x128xf32>
    %11 = arith.truncf %10 : vector<256x128xf32> to vector<256x128xbf16>
    %c0_7 = arith.constant 0 : index
    %c0_8 = arith.constant 0 : index
    %12 = vector.load %arg5[%c0_7, %c0_8] : memref<128x128xbf16, #tpu.memory_space<vmem>>, vector<128x128xbf16>
    %cst_9 = arith.constant dense<0.000000e+00> : vector<256x128xf32>
    %13 = tpu.matmul %11, %12, %cst_9 {dimension_numbers = #tpu.dot_dimension_numbers<[1], [0], [0], [1], [0, 0, 1, 1], [], []>} : vector<256x128xbf16>, vector<128x128xbf16>, vector<256x128xf32> -> vector<256x128xf32>
    %c0_10 = arith.constant 0 : index
    %c0_11 = arith.constant 0 : index
    %14 = vector.load %arg6[%c0_10, %c0_11] : memref<1x128xf32, #tpu.memory_space<vmem>>, vector<1x128xf32>
    %15 = vector.broadcast %14 : vector<1x128xf32> to vector<256x128xf32>
    %16 = arith.addf %13, %15 : vector<256x128xf32>
    %cst_12 = arith.constant 0.000000e+00 : f32
    %17 = vector.broadcast %cst_12 : f32 to vector<256x128xf32>
    %18 = arith.cmpf ogt, %16, %17 : vector<256x128xf32>
    %cst_13 = arith.constant 2.000000e-01 : f32
    %19 = vector.broadcast %cst_13 : f32 to vector<256x128xf32>
    %20 = arith.mulf %19, %16 : vector<256x128xf32>
    %21 = arith.select %18, %16, %20 : vector<256x128xi1>, vector<256x128xf32>
    %22 = arith.truncf %21 : vector<256x128xf32> to vector<256x128xbf16>
    %c0_14 = arith.constant 0 : index
    %c0_15 = arith.constant 0 : index
    %23 = vector.load %arg7[%c0_14, %c0_15] : memref<128x128xbf16, #tpu.memory_space<vmem>>, vector<128x128xbf16>
    %cst_16 = arith.constant dense<0.000000e+00> : vector<256x128xf32>
    %24 = tpu.matmul %22, %23, %cst_16 {dimension_numbers = #tpu.dot_dimension_numbers<[1], [0], [0], [1], [0, 0, 1, 1], [], []>} : vector<256x128xbf16>, vector<128x128xbf16>, vector<256x128xf32> -> vector<256x128xf32>
    %c0_17 = arith.constant 0 : index
    %c0_18 = arith.constant 0 : index
    %25 = vector.load %arg8[%c0_17, %c0_18] : memref<1x128xf32, #tpu.memory_space<vmem>>, vector<1x128xf32>
    %26 = vector.broadcast %25 : vector<1x128xf32> to vector<256x128xf32>
    %27 = arith.addf %24, %26 : vector<256x128xf32>
    %28 = vector.extract_strided_slice %27 {offsets = [0, 0], sizes = [256, 16], strides = [1, 1]} : vector<256x128xf32> to vector<256x16xf32>
    %c112_i32 = arith.constant 112 : i32
    %29 = tpu.dynamic_rotate %27 by %c112_i32 dim 1 : vector<256x128xf32>, i32 -> vector<256x128xf32>
    %30 = vector.extract_strided_slice %29 {offsets = [0, 0], sizes = [256, 16], strides = [1, 1]} : vector<256x128xf32> to vector<256x16xf32>
    %c0_19 = arith.constant 0 : index
    %c0_20 = arith.constant 0 : index
    %31 = vector.load %arg2[%c0_19, %c0_20] : memref<256x16xf32, #tpu.memory_space<vmem>>, vector<256x16xf32>
    %cst_21 = arith.constant 5.000000e-01 : f32
    %32 = vector.broadcast %cst_21 : f32 to vector<256x16xf32>
    %33 = arith.mulf %32, %30 : vector<256x16xf32>
    %34 = math.exp %33 : vector<256x16xf32>
    %35 = arith.mulf %31, %34 : vector<256x16xf32>
    %36 = arith.addf %28, %35 : vector<256x16xf32>
    %37 = arith.truncf %36 : vector<256x16xf32> to vector<256x16xbf16>
    %c0_22 = arith.constant 0 : index
    %c0_23 = arith.constant 0 : index
    %38 = vector.load %arg9[%c0_22, %c0_23] : memref<16x128xbf16, #tpu.memory_space<vmem>>, vector<16x128xbf16>
    %cst_24 = arith.constant dense<0.000000e+00> : vector<256x128xf32>
    %39 = tpu.matmul %37, %38, %cst_24 {dimension_numbers = #tpu.dot_dimension_numbers<[1], [0], [0], [1], [0, 0, 1, 1], [], []>} : vector<256x16xbf16>, vector<16x128xbf16>, vector<256x128xf32> -> vector<256x128xf32>
    %c0_25 = arith.constant 0 : index
    %c0_26 = arith.constant 0 : index
    %40 = vector.load %arg10[%c0_25, %c0_26] : memref<1x128xf32, #tpu.memory_space<vmem>>, vector<1x128xf32>
    %41 = vector.broadcast %40 : vector<1x128xf32> to vector<256x128xf32>
    %42 = arith.addf %39, %41 : vector<256x128xf32>
    %cst_27 = arith.constant 0.000000e+00 : f32
    %43 = vector.broadcast %cst_27 : f32 to vector<256x128xf32>
    %44 = arith.cmpf ogt, %42, %43 : vector<256x128xf32>
    %cst_28 = arith.constant 2.000000e-01 : f32
    %45 = vector.broadcast %cst_28 : f32 to vector<256x128xf32>
    %46 = arith.mulf %45, %42 : vector<256x128xf32>
    %47 = arith.select %44, %42, %46 : vector<256x128xi1>, vector<256x128xf32>
    %48 = arith.truncf %47 : vector<256x128xf32> to vector<256x128xbf16>
    %c0_29 = arith.constant 0 : index
    %c0_30 = arith.constant 0 : index
    %49 = vector.load %arg11[%c0_29, %c0_30] : memref<128x128xbf16, #tpu.memory_space<vmem>>, vector<128x128xbf16>
    %cst_31 = arith.constant dense<0.000000e+00> : vector<256x128xf32>
    %50 = tpu.matmul %48, %49, %cst_31 {dimension_numbers = #tpu.dot_dimension_numbers<[1], [0], [0], [1], [0, 0, 1, 1], [], []>} : vector<256x128xbf16>, vector<128x128xbf16>, vector<256x128xf32> -> vector<256x128xf32>
    %c0_32 = arith.constant 0 : index
    %c0_33 = arith.constant 0 : index
    %51 = vector.load %arg12[%c0_32, %c0_33] : memref<1x128xf32, #tpu.memory_space<vmem>>, vector<1x128xf32>
    %52 = vector.broadcast %51 : vector<1x128xf32> to vector<256x128xf32>
    %53 = arith.addf %50, %52 : vector<256x128xf32>
    %cst_34 = arith.constant 0.000000e+00 : f32
    %54 = vector.broadcast %cst_34 : f32 to vector<256x128xf32>
    %55 = arith.cmpf ogt, %53, %54 : vector<256x128xf32>
    %cst_35 = arith.constant 2.000000e-01 : f32
    %56 = vector.broadcast %cst_35 : f32 to vector<256x128xf32>
    %57 = arith.mulf %56, %53 : vector<256x128xf32>
    %58 = arith.select %55, %53, %57 : vector<256x128xi1>, vector<256x128xf32>
    %59 = arith.truncf %58 : vector<256x128xf32> to vector<256x128xbf16>
    %c0_36 = arith.constant 0 : index
    %c0_37 = arith.constant 0 : index
    %60 = vector.load %arg13[%c0_36, %c0_37] : memref<128x128xbf16, #tpu.memory_space<vmem>>, vector<128x128xbf16>
    %cst_38 = arith.constant dense<0.000000e+00> : vector<256x128xf32>
    %61 = tpu.matmul %59, %60, %cst_38 {dimension_numbers = #tpu.dot_dimension_numbers<[1], [0], [0], [1], [0, 0, 1, 1], [], []>} : vector<256x128xbf16>, vector<128x128xbf16>, vector<256x128xf32> -> vector<256x128xf32>
    %c0_39 = arith.constant 0 : index
    %c0_40 = arith.constant 0 : index
    %62 = vector.load %arg14[%c0_39, %c0_40] : memref<1x128xf32, #tpu.memory_space<vmem>>, vector<1x128xf32>
    %63 = vector.broadcast %62 : vector<1x128xf32> to vector<256x128xf32>
    %64 = arith.addf %61, %63 : vector<256x128xf32>
    %65 = arith.negf %64 : vector<256x128xf32>
    %66 = math.exp %65 : vector<256x128xf32>
    %cst_41 = arith.constant 1.000000e+00 : f32
    %67 = vector.broadcast %cst_41 : f32 to vector<256x128xf32>
    %68 = arith.addf %67, %66 : vector<256x128xf32>
    %69 = arith.divf %67, %68 : vector<256x128xf32>
    %c0_42 = arith.constant 0 : index
    %c0_43 = arith.constant 0 : index
    %70 = vector.load %arg15[%c0_42, %c0_43] : memref<256x128xf32, #tpu.memory_space<vmem>>, vector<256x128xf32>
    tpu.vector_store %arg15[%c0_42, %c0_43], %69 {strides = array<i32>} : memref<256x128xf32, #tpu.memory_space<vmem>>, vector<256x128xf32>,
    %c0_44 = arith.constant 0 : index
    %c0_45 = arith.constant 0 : index
    %71 = vector.load %arg16[%c0_44, %c0_45] : memref<256x128xf32, #tpu.memory_space<vmem>>, vector<256x128xf32>
    tpu.vector_store %arg16[%c0_44, %c0_45], %27 {strides = array<i32>} : memref<256x128xf32, #tpu.memory_space<vmem>>, vector<256x128xf32>,
    return
  }
  func.func @transform_0(%arg0: i32) -> (i32, i32) {
    %c0_i32 = arith.constant 0 : i32
    %c0_i32_0 = arith.constant 0 : i32
    return %arg0, %c0_i32 : i32, i32
  }
  func.func @transform_1(%arg0: i32) -> (i32, i32) {
    %c0_i32 = arith.constant 0 : i32
    %c0_i32_0 = arith.constant 0 : i32
    return %arg0, %c0_i32 : i32, i32
  }
  func.func @transform_2(%arg0: i32) -> (i32, i32) {
    %c0_i32 = arith.constant 0 : i32
    %c0_i32_0 = arith.constant 0 : i32
    %c0_i32_1 = arith.constant 0 : i32
    return %c0_i32, %c0_i32_0 : i32, i32
  }
  func.func @transform_3(%arg0: i32) -> (i32, i32) {
    %c0_i32 = arith.constant 0 : i32
    %c0_i32_0 = arith.constant 0 : i32
    %c0_i32_1 = arith.constant 0 : i32
    return %c0_i32, %c0_i32_0 : i32, i32
  }
  func.func @transform_4(%arg0: i32) -> (i32, i32) {
    %c0_i32 = arith.constant 0 : i32
    %c0_i32_0 = arith.constant 0 : i32
    %c0_i32_1 = arith.constant 0 : i32
    return %c0_i32, %c0_i32_0 : i32, i32
  }
  func.func @transform_5(%arg0: i32) -> (i32, i32) {
    %c0_i32 = arith.constant 0 : i32
    %c0_i32_0 = arith.constant 0 : i32
    %c0_i32_1 = arith.constant 0 : i32
    return %c0_i32, %c0_i32_0 : i32, i32
  }
  func.func @transform_6(%arg0: i32) -> (i32, i32) {
    %c0_i32 = arith.constant 0 : i32
    %c0_i32_0 = arith.constant 0 : i32
    %c0_i32_1 = arith.constant 0 : i32
    return %c0_i32, %c0_i32_0 : i32, i32
  }
  func.func @transform_7(%arg0: i32) -> (i32, i32) {
    %c0_i32 = arith.constant 0 : i32
    %c0_i32_0 = arith.constant 0 : i32
    %c0_i32_1 = arith.constant 0 : i32
    return %c0_i32, %c0_i32_0 : i32, i32
  }
  func.func @transform_8(%arg0: i32) -> (i32, i32) {
    %c0_i32 = arith.constant 0 : i32
    %c0_i32_0 = arith.constant 0 : i32
    %c0_i32_1 = arith.constant 0 : i32
    return %c0_i32, %c0_i32_0 : i32, i32
  }
  func.func @transform_9(%arg0: i32) -> (i32, i32) {
    %c0_i32 = arith.constant 0 : i32
    %c0_i32_0 = arith.constant 0 : i32
    %c0_i32_1 = arith.constant 0 : i32
    return %c0_i32, %c0_i32_0 : i32, i32
  }
  func.func @transform_10(%arg0: i32) -> (i32, i32) {
    %c0_i32 = arith.constant 0 : i32
    %c0_i32_0 = arith.constant 0 : i32
    %c0_i32_1 = arith.constant 0 : i32
    return %c0_i32, %c0_i32_0 : i32, i32
  }
  func.func @transform_11(%arg0: i32) -> (i32, i32) {
    %c0_i32 = arith.constant 0 : i32
    %c0_i32_0 = arith.constant 0 : i32
    %c0_i32_1 = arith.constant 0 : i32
    return %c0_i32, %c0_i32_0 : i32, i32
  }
  func.func @transform_12(%arg0: i32) -> (i32, i32) {
    %c0_i32 = arith.constant 0 : i32
    %c0_i32_0 = arith.constant 0 : i32
    %c0_i32_1 = arith.constant 0 : i32
    return %c0_i32, %c0_i32_0 : i32, i32
  }
  func.func @transform_13(%arg0: i32) -> (i32, i32) {
    %c0_i32 = arith.constant 0 : i32
    %c0_i32_0 = arith.constant 0 : i32
    %c0_i32_1 = arith.constant 0 : i32
    return %c0_i32, %c0_i32_0 : i32, i32
  }
  func.func @transform_14(%arg0: i32) -> (i32, i32) {
    %c0_i32 = arith.constant 0 : i32
    %c0_i32_0 = arith.constant 0 : i32
    return %arg0, %c0_i32 : i32, i32
  }
  func.func @transform_15(%arg0: i32) -> (i32, i32) {
    %c0_i32 = arith.constant 0 : i32
    %c0_i32_0 = arith.constant 0 : i32
    return %arg0, %c0_i32 : i32, i32
  }
}

</mosaic_0001>

<llo_original>
// kernel: tpu_custom_call.1
$region0: #{tpu_custom_call.1}
  #allocation0 [shape = 'u32[]', space=smem, size = 0x4, offset = 0x4, fixed_abs, tag = 'smem constant byte address 0x4 - core index']
  #allocation1 [shape = 'u32[144,128]{1,0:T(1,128)}', space=vmem, size = 0x12000, scoped, tag = 'internal scratch']
  %s0 = inlined_call_operand.vmem [shape: bf16[512,32], index: 0, kind: input, shape index: {}]
  %s1 = inlined_call_operand.vmem [shape: f32[512,16], index: 1, kind: input, shape index: {}]
  %s2 = inlined_call_operand.vmem [shape: bf16[32,128], index: 2, kind: input, shape index: {}]
  %s3 = inlined_call_operand.vmem [shape: f32[1,128], index: 3, kind: input, shape index: {}]
  %s4 = inlined_call_operand.vmem [shape: bf16[128,128], index: 4, kind: input, shape index: {}]
  %s5 = inlined_call_operand.vmem [shape: f32[1,128], index: 5, kind: input, shape index: {}]
  %s6 = inlined_call_operand.vmem [shape: bf16[128,128], index: 6, kind: input, shape index: {}]
  %s7 = inlined_call_operand.vmem [shape: f32[1,128], index: 7, kind: input, shape index: {}]
  %s8 = inlined_call_operand.vmem [shape: bf16[16,128], index: 8, kind: input, shape index: {}]
  %s9 = inlined_call_operand.vmem [shape: f32[1,128], index: 9, kind: input, shape index: {}]
  %s10 = inlined_call_operand.vmem [shape: bf16[128,128], index: 10, kind: input, shape index: {}]
  %s11 = inlined_call_operand.vmem [shape: f32[1,128], index: 11, kind: input, shape index: {}]
  %s12 = inlined_call_operand.vmem [shape: bf16[128,128], index: 12, kind: input, shape index: {}]
  %s13 = inlined_call_operand.vmem [shape: f32[1,128], index: 13, kind: input, shape index: {}]
  %s14 = inlined_call_operand.hbm [shape: f32[512,128], index: 14, kind: output, shape index: {0}]
  %s15 = inlined_call_operand.hbm [shape: f32[512,128], index: 15, kind: output, shape index: {1}]
  %16 = xla_tuple %s14, %s15
  %s17 = sld [smem:[#allocation0]]
  $region97: #{tpu_custom_call.1} parent=0
    _
  %s19 = ssub.s32 1, %s17
  %s20 = scalar_select 0, %s19, %s17
  $region1: #{tpu_custom_call.1} parent=0
    #allocation2 [shape = 'u8[262144]{0}', space=vmem, size = 0x40000, scoped, tag = 'output window, operand 0']
    #allocation3 [shape = 's32[2]{0}', space=sflag, size = 0x8, scoped, tag = 'scoped memory for tpu_custom_call.1']
    #allocation4 [shape = 'u8[262144]{0}', space=vmem, size = 0x40000, scoped, tag = 'output window, operand 1']
    #allocation5 [shape = 's32[2]{0}', space=sflag, size = 0x8, scoped, tag = 'scoped memory for tpu_custom_call.1']
    %21 = vsyncpa [#allocation3], 0
    %s22 = scalar_lea.sflag [#allocation3], 1
    %23 = vsyncpa %s22, 0
    %24 = vsyncpa [#allocation5], 0
    %s25 = scalar_lea.sflag [#allocation5], 1
    %26 = vsyncpa %s25, 0
    loop: start=0, step=1, limit=4
    $region2: #{tpu_custom_call.1} parent=1 // loop_pre_header
      _
    $region3: #{tpu_custom_call.1} parent=1 // loop_header
      %s28 = sphi 0, %s32
      %p29 = scmp.ge.s32.totalorder %s28, 4
      %s38 = sphi 0, %s40
      %s41 = sphi 0, %s38
      %s42 = sphi 0, %s41
      %s58 = sphi 0, %s42
      %s64 = sphi 0, %s66
      %s67 = sphi 0, %s64
      %s68 = sphi 0, %s67
      %s84 = sphi 0, %s68
      %s88 = sphi 0, %s88
      %s90 = sphi 0, %s88
      %s91 = sphi 0, %s90
      %s105 = sphi 0, %s91
      %s109 = sphi 0, %s109
      %s111 = sphi 0, %s109
      %s112 = sphi 0, %s111
      %s126 = sphi 0, %s112
      %s130 = sphi 0, %s130
      %s132 = sphi 0, %s130
      %s133 = sphi 0, %s132
      %s147 = sphi 0, %s133
      %s151 = sphi 0, %s151
      %s153 = sphi 0, %s151
      %s154 = sphi 0, %s153
      %s168 = sphi 0, %s154
      %s172 = sphi 0, %s172
      %s174 = sphi 0, %s172
      %s175 = sphi 0, %s174
      %s189 = sphi 0, %s175
      %s193 = sphi 0, %s193
      %s195 = sphi 0, %s193
      %s196 = sphi 0, %s195
      %s210 = sphi 0, %s196
      %s214 = sphi 0, %s214
      %s216 = sphi 0, %s214
      %s217 = sphi 0, %s216
      %s231 = sphi 0, %s217
      %s235 = sphi 0, %s235
      %s237 = sphi 0, %s235
      %s238 = sphi 0, %s237
      %s252 = sphi 0, %s238
      %s256 = sphi 0, %s256
      %s258 = sphi 0, %s256
      %s259 = sphi 0, %s258
      %s273 = sphi 0, %s259
      %s277 = sphi 0, %s277
      %s279 = sphi 0, %s277
      %s280 = sphi 0, %s279
      %s294 = sphi 0, %s280
      %s298 = sphi 0, %s298
      %s300 = sphi 0, %s298
      %s301 = sphi 0, %s300
      %s315 = sphi 0, %s301
      %s319 = sphi 0, %s319
      %s321 = sphi 0, %s319
      %s322 = sphi 0, %s321
      %s336 = sphi 0, %s322
      %s342 = sphi 0, %s344
      %s345 = sphi 0, %s342
      %s346 = sphi 0, %s345
      %s362 = sphi 0, %s346
      %s368 = sphi 0, %s370
      %s371 = sphi 0, %s368
      %s372 = sphi 0, %s371
      %s388 = sphi 0, %s372
    $region4: #{tpu_custom_call.1} parent=1 // loop_header_branch
      %31 = sbr.rel (%p29) target = $region8
    $region5: #{tpu_custom_call.1} parent=1 // loop_body
      %s33 = ssub.s32 %s28, 1
      %s34 = ssub.s32 %s28, 2
      %s35 = sadd.s32 %s28, 1
      %s36 = ssub.s32 %s28, %s35
      %p37 = scmp.eq.s32.totalorder %s36, 0
      %s39 = sadd.s32 %s38, 1
      %s40 = scalar_select %p37, %s38, %s39
      %p43 = pneg %p37
      %p44 = scmp.eq.s32.totalorder %s28, 1
      %p45 = por %p43, %p44
      %p46 = scmp.ne.s32.totalorder %s38, %s41
      %p47 = scmp.eq.s32.totalorder %s28, 0
      %p48 = por %p46, %p47
      %p49 = scmp.ne.s32.totalorder %s38, %s41
      %p50 = scmp.eq.s32.totalorder %s33, 1
      %p51 = por %p49, %p50
      %p52 = scmp.ne.s32.totalorder %s41, %s42
      %p53 = scmp.eq.s32.totalorder %s33, 0
      %p54 = por %p52, %p53
      %p55 = scmp.ne.s32.totalorder %s41, %s42
      %p56 = scmp.eq.s32.totalorder %s34, 1
      %p57 = por %p55, %p56
      %p59 = scmp.ne.s32.totalorder %s42, %s58
      %p60 = scmp.eq.s32.totalorder %s34, 0
      %p61 = por %p59, %p60
      %s62 = ssub.s32 %s28, %s35
      %p63 = scmp.eq.s32.totalorder %s62, 0
      %s65 = sadd.s32 %s64, 1
      %s66 = scalar_select %p63, %s64, %s65
      %p69 = pneg %p63
      %p70 = scmp.eq.s32.totalorder %s28, 1
      %p71 = por %p69, %p70
      %p72 = scmp.ne.s32.totalorder %s64, %s67
      %p73 = scmp.eq.s32.totalorder %s28, 0
      %p74 = por %p72, %p73
      %p75 = scmp.ne.s32.totalorder %s64, %s67
      %p76 = scmp.eq.s32.totalorder %s33, 1
      %p77 = por %p75, %p76
      %p78 = scmp.ne.s32.totalorder %s67, %s68
      %p79 = scmp.eq.s32.totalorder %s33, 0
      %p80 = por %p78, %p79
      %p81 = scmp.ne.s32.totalorder %s67, %s68
      %p82 = scmp.eq.s32.totalorder %s34, 1
      %p83 = por %p81, %p82
      %p85 = scmp.ne.s32.totalorder %s68, %s84
      %p86 = scmp.eq.s32.totalorder %s34, 0
      %p87 = por %p85, %p86
      %s89 = sadd.s32 %s88, 1
      %p92 = scmp.eq.s32.totalorder %s28, 1
      %p93 = scmp.ne.s32.totalorder %s88, %s90
      %p94 = scmp.eq.s32.totalorder %s28, 0
      %p95 = por %p93, %p94
      %p96 = scmp.ne.s32.totalorder %s88, %s90
      %p97 = scmp.eq.s32.totalorder %s33, 1
      %p98 = por %p96, %p97
      %p99 = scmp.ne.s32.totalorder %s90, %s91
      %p100 = scmp.eq.s32.totalorder %s33, 0
      %p101 = por %p99, %p100
      %p102 = scmp.ne.s32.totalorder %s90, %s91
      %p103 = scmp.eq.s32.totalorder %s34, 1
      %p104 = por %p102, %p103
      %p106 = scmp.ne.s32.totalorder %s91, %s105
      %p107 = scmp.eq.s32.totalorder %s34, 0
      %p108 = por %p106, %p107
      %s110 = sadd.s32 %s109, 1
      %p113 = scmp.eq.s32.totalorder %s28, 1
      %p114 = scmp.ne.s32.totalorder %s109, %s111
      %p115 = scmp.eq.s32.totalorder %s28, 0
      %p116 = por %p114, %p115
      %p117 = scmp.ne.s32.totalorder %s109, %s111
      %p118 = scmp.eq.s32.totalorder %s33, 1
      %p119 = por %p117, %p118
      %p120 = scmp.ne.s32.totalorder %s111, %s112
      %p121 = scmp.eq.s32.totalorder %s33, 0
      %p122 = por %p120, %p121
      %p123 = scmp.ne.s32.totalorder %s111, %s112
      %p124 = scmp.eq.s32.totalorder %s34, 1
      %p125 = por %p123, %p124
      %p127 = scmp.ne.s32.totalorder %s112, %s126
      %p128 = scmp.eq.s32.totalorder %s34, 0
      %p129 = por %p127, %p128
      %s131 = sadd.s32 %s130, 1
      %p134 = scmp.eq.s32.totalorder %s28, 1
      %p135 = scmp.ne.s32.totalorder %s130, %s132
      %p136 = scmp.eq.s32.totalorder %s28, 0
      %p137 = por %p135, %p136
      %p138 = scmp.ne.s32.totalorder %s130, %s132
      %p139 = scmp.eq.s32.totalorder %s33, 1
      %p140 = por %p138, %p139
      %p141 = scmp.ne.s32.totalorder %s132, %s133
      %p142 = scmp.eq.s32.totalorder %s33, 0
      %p143 = por %p141, %p142
      %p144 = scmp.ne.s32.totalorder %s132, %s133
      %p145 = scmp.eq.s32.totalorder %s34, 1
      %p146 = por %p144, %p145
      %p148 = scmp.ne.s32.totalorder %s133, %s147
      %p149 = scmp.eq.s32.totalorder %s34, 0
      %p150 = por %p148, %p149
      %s152 = sadd.s32 %s151, 1
      %p155 = scmp.eq.s32.totalorder %s28, 1
      %p156 = scmp.ne.s32.totalorder %s151, %s153
      %p157 = scmp.eq.s32.totalorder %s28, 0
      %p158 = por %p156, %p157
      %p159 = scmp.ne.s32.totalorder %s151, %s153
      %p160 = scmp.eq.s32.totalorder %s33, 1
      %p161 = por %p159, %p160
      %p162 = scmp.ne.s32.totalorder %s153, %s154
      %p163 = scmp.eq.s32.totalorder %s33, 0
      %p164 = por %p162, %p163
      %p165 = scmp.ne.s32.totalorder %s153, %s154
      %p166 = scmp.eq.s32.totalorder %s34, 1
      %p167 = por %p165, %p166
      %p169 = scmp.ne.s32.totalorder %s154, %s168
      %p170 = scmp.eq.s32.totalorder %s34, 0
      %p171 = por %p169, %p170
      %s173 = sadd.s32 %s172, 1
      %p176 = scmp.eq.s32.totalorder %s28, 1
      %p177 = scmp.ne.s32.totalorder %s172, %s174
      %p178 = scmp.eq.s32.totalorder %s28, 0
      %p179 = por %p177, %p178
      %p180 = scmp.ne.s32.totalorder %s172, %s174
      %p181 = scmp.eq.s32.totalorder %s33, 1
      %p182 = por %p180, %p181
      %p183 = scmp.ne.s32.totalorder %s174, %s175
      %p184 = scmp.eq.s32.totalorder %s33, 0
      %p185 = por %p183, %p184
      %p186 = scmp.ne.s32.totalorder %s174, %s175
      %p187 = scmp.eq.s32.totalorder %s34, 1
      %p188 = por %p186, %p187
      %p190 = scmp.ne.s32.totalorder %s175, %s189
      %p191 = scmp.eq.s32.totalorder %s34, 0
      %p192 = por %p190, %p191
      %s194 = sadd.s32 %s193, 1
      %p197 = scmp.eq.s32.totalorder %s28, 1
      %p198 = scmp.ne.s32.totalorder %s193, %s195
      %p199 = scmp.eq.s32.totalorder %s28, 0
      %p200 = por %p198, %p199
      %p201 = scmp.ne.s32.totalorder %s193, %s195
      %p202 = scmp.eq.s32.totalorder %s33, 1
      %p203 = por %p201, %p202
      %p204 = scmp.ne.s32.totalorder %s195, %s196
      %p205 = scmp.eq.s32.totalorder %s33, 0
      %p206 = por %p204, %p205
      %p207 = scmp.ne.s32.totalorder %s195, %s196
      %p208 = scmp.eq.s32.totalorder %s34, 1
      %p209 = por %p207, %p208
      %p211 = scmp.ne.s32.totalorder %s196, %s210
      %p212 = scmp.eq.s32.totalorder %s34, 0
      %p213 = por %p211, %p212
      %s215 = sadd.s32 %s214, 1
      %p218 = scmp.eq.s32.totalorder %s28, 1
      %p219 = scmp.ne.s32.totalorder %s214, %s216
      %p220 = scmp.eq.s32.totalorder %s28, 0
      %p221 = por %p219, %p220
      %p222 = scmp.ne.s32.totalorder %s214, %s216
      %p223 = scmp.eq.s32.totalorder %s33, 1
      %p224 = por %p222, %p223
      %p225 = scmp.ne.s32.totalorder %s216, %s217
      %p226 = scmp.eq.s32.totalorder %s33, 0
      %p227 = por %p225, %p226
      %p228 = scmp.ne.s32.totalorder %s216, %s217
      %p229 = scmp.eq.s32.totalorder %s34, 1
      %p230 = por %p228, %p229
      %p232 = scmp.ne.s32.totalorder %s217, %s231
      %p233 = scmp.eq.s32.totalorder %s34, 0
      %p234 = por %p232, %p233
      %s236 = sadd.s32 %s235, 1
      %p239 = scmp.eq.s32.totalorder %s28, 1
      %p240 = scmp.ne.s32.totalorder %s235, %s237
      %p241 = scmp.eq.s32.totalorder %s28, 0
      %p242 = por %p240, %p241
      %p243 = scmp.ne.s32.totalorder %s235, %s237
      %p244 = scmp.eq.s32.totalorder %s33, 1
      %p245 = por %p243, %p244
      %p246 = scmp.ne.s32.totalorder %s237, %s238
      %p247 = scmp.eq.s32.totalorder %s33, 0
      %p248 = por %p246, %p247
      %p249 = scmp.ne.s32.totalorder %s237, %s238
      %p250 = scmp.eq.s32.totalorder %s34, 1
      %p251 = por %p249, %p250
      %p253 = scmp.ne.s32.totalorder %s238, %s252
      %p254 = scmp.eq.s32.totalorder %s34, 0
      %p255 = por %p253, %p254
      %s257 = sadd.s32 %s256, 1
      %p260 = scmp.eq.s32.totalorder %s28, 1
      %p261 = scmp.ne.s32.totalorder %s256, %s258
      %p262 = scmp.eq.s32.totalorder %s28, 0
      %p263 = por %p261, %p262
      %p264 = scmp.ne.s32.totalorder %s256, %s258
      %p265 = scmp.eq.s32.totalorder %s33, 1
      %p266 = por %p264, %p265
      %p267 = scmp.ne.s32.totalorder %s258, %s259
      %p268 = scmp.eq.s32.totalorder %s33, 0
      %p269 = por %p267, %p268
      %p270 = scmp.ne.s32.totalorder %s258, %s259
      %p271 = scmp.eq.s32.totalorder %s34, 1
      %p272 = por %p270, %p271
      %p274 = scmp.ne.s32.totalorder %s259, %s273
      %p275 = scmp.eq.s32.totalorder %s34, 0
      %p276 = por %p274, %p275
      %s278 = sadd.s32 %s277, 1
      %p281 = scmp.eq.s32.totalorder %s28, 1
      %p282 = scmp.ne.s32.totalorder %s277, %s279
      %p283 = scmp.eq.s32.totalorder %s28, 0
      %p284 = por %p282, %p283
      %p285 = scmp.ne.s32.totalorder %s277, %s279
      %p286 = scmp.eq.s32.totalorder %s33, 1
      %p287 = por %p285, %p286
      %p288 = scmp.ne.s32.totalorder %s279, %s280
      %p289 = scmp.eq.s32.totalorder %s33, 0
      %p290 = por %p288, %p289
      %p291 = scmp.ne.s32.totalorder %s279, %s280
      %p292 = scmp.eq.s32.totalorder %s34, 1
      %p293 = por %p291, %p292
      %p295 = scmp.ne.s32.totalorder %s280, %s294
      %p296 = scmp.eq.s32.totalorder %s34, 0
      %p297 = por %p295, %p296
      %s299 = sadd.s32 %s298, 1
      %p302 = scmp.eq.s32.totalorder %s28, 1
      %p303 = scmp.ne.s32.totalorder %s298, %s300
      %p304 = scmp.eq.s32.totalorder %s28, 0
      %p305 = por %p303, %p304
      %p306 = scmp.ne.s32.totalorder %s298, %s300
      %p307 = scmp.eq.s32.totalorder %s33, 1
      %p308 = por %p306, %p307
      %p309 = scmp.ne.s32.totalorder %s300, %s301
      %p310 = scmp.eq.s32.totalorder %s33, 0
      %p311 = por %p309, %p310
      %p312 = scmp.ne.s32.totalorder %s300, %s301
      %p313 = scmp.eq.s32.totalorder %s34, 1
      %p314 = por %p312, %p313
      %p316 = scmp.ne.s32.totalorder %s301, %s315
      %p317 = scmp.eq.s32.totalorder %s34, 0
      %p318 = por %p316, %p317
      %s320 = sadd.s32 %s319, 1
      %p323 = scmp.eq.s32.totalorder %s28, 1
      %p324 = scmp.ne.s32.totalorder %s319, %s321
      %p325 = scmp.eq.s32.totalorder %s28, 0
      %p326 = por %p324, %p325
      %p327 = scmp.ne.s32.totalorder %s319, %s321
      %p328 = scmp.eq.s32.totalorder %s33, 1
      %p329 = por %p327, %p328
      %p330 = scmp.ne.s32.totalorder %s321, %s322
      %p331 = scmp.eq.s32.totalorder %s33, 0
      %p332 = por %p330, %p331
      %p333 = scmp.ne.s32.totalorder %s321, %s322
      %p334 = scmp.eq.s32.totalorder %s34, 1
      %p335 = por %p333, %p334
      %p337 = scmp.ne.s32.totalorder %s322, %s336
      %p338 = scmp.eq.s32.totalorder %s34, 0
      %p339 = por %p337, %p338
      %s340 = ssub.s32 %s28, %s35
      %p341 = scmp.eq.s32.totalorder %s340, 0
      %s343 = sadd.s32 %s342, 1
      %s344 = scalar_select %p341, %s342, %s343
      %p347 = pneg %p341
      %p348 = scmp.eq.s32.totalorder %s28, 1
      %p349 = por %p347, %p348
      %p350 = scmp.ne.s32.totalorder %s342, %s345
      %p351 = scmp.eq.s32.totalorder %s28, 0
      %p352 = por %p350, %p351
      %p353 = scmp.ne.s32.totalorder %s342, %s345
      %p354 = scmp.eq.s32.totalorder %s33, 1
      %p355 = por %p353, %p354
      %p356 = scmp.ne.s32.totalorder %s345, %s346
      %p357 = scmp.eq.s32.totalorder %s33, 0
      %p358 = por %p356, %p357
      %p359 = scmp.ne.s32.totalorder %s345, %s346
      %p360 = scmp.eq.s32.totalorder %s34, 1
      %p361 = por %p359, %p360
      %p363 = scmp.ne.s32.totalorder %s346, %s362
      %p364 = scmp.eq.s32.totalorder %s34, 0
      %p365 = por %p363, %p364
      %s366 = ssub.s32 %s28, %s35
      %p367 = scmp.eq.s32.totalorder %s366, 0
      %s369 = sadd.s32 %s368, 1
      %s370 = scalar_select %p367, %s368, %s369
      %p373 = pneg %p367
      %p374 = scmp.eq.s32.totalorder %s28, 1
      %p375 = por %p373, %p374
      %p376 = scmp.ne.s32.totalorder %s368, %s371
      %p377 = scmp.eq.s32.totalorder %s28, 0
      %p378 = por %p376, %p377
      %p379 = scmp.ne.s32.totalorder %s368, %s371
      %p380 = scmp.eq.s32.totalorder %s33, 1
      %p381 = por %p379, %p380
      %p382 = scmp.ne.s32.totalorder %s371, %s372
      %p383 = scmp.eq.s32.totalorder %s33, 0
      %p384 = por %p382, %p383
      %p385 = scmp.ne.s32.totalorder %s371, %s372
      %p386 = scmp.eq.s32.totalorder %s34, 1
      %p387 = por %p385, %p386
      %p389 = scmp.ne.s32.totalorder %s372, %s388
      %p390 = scmp.eq.s32.totalorder %s34, 0
      %p391 = por %p389, %p390
      %p392 = scmp.le.s32.totalorder 1, %s28
      %p393 = scmp.lt.s32.totalorder %s28, 3
      %p394 = pnand %p392, %p393
      %p395 = pneg %p394
      // Predicated region
      $region9: #{tpu_custom_call.1} parent=5 // pred_check
        _
      $region10: #{tpu_custom_call.1} parent=5 // pred_check_branch
        %397 = sbr.rel (%p394) target = $region12
      $region11: #{tpu_custom_call.1} parent=5 // pred_region
        %s398 = ssub.s32 %s28, 1
        // Predicated region
        $region13: #{tpu_custom_call.1} parent=11 // pred_check
          %p399 = pneg %p101
        $region14: #{tpu_custom_call.1} parent=11 // pred_check_branch
          %401 = sbr.rel (%p399) target = $region16
        $region15: #{tpu_custom_call.1} parent=11 // pred_region
          _
        $region16: #{tpu_custom_call.1} parent=11 // pred_fallthru
          _
        // Predicated region
        $region17: #{tpu_custom_call.1} parent=11 // pred_check
          %p402 = pneg %p122
        $region18: #{tpu_custom_call.1} parent=11 // pred_check_branch
          %404 = sbr.rel (%p402) target = $region20
        $region19: #{tpu_custom_call.1} parent=11 // pred_region
          _
        $region20: #{tpu_custom_call.1} parent=11 // pred_fallthru
          _
        // Predicated region
        $region21: #{tpu_custom_call.1} parent=11 // pred_check
          %p405 = pneg %p143
        $region22: #{tpu_custom_call.1} parent=11 // pred_check_branch
          %407 = sbr.rel (%p405) target = $region24
        $region23: #{tpu_custom_call.1} parent=11 // pred_region
          _
        $region24: #{tpu_custom_call.1} parent=11 // pred_fallthru
          _
        // Predicated region
        $region25: #{tpu_custom_call.1} parent=11 // pred_check
          %p408 = pneg %p164
        $region26: #{tpu_custom_call.1} parent=11 // pred_check_branch
          %410 = sbr.rel (%p408) target = $region28
        $region27: #{tpu_custom_call.1} parent=11 // pred_region
          _
        $region28: #{tpu_custom_call.1} parent=11 // pred_fallthru
          _
        // Predicated region
        $region29: #{tpu_custom_call.1} parent=11 // pred_check
          %p411 = pneg %p185
        $region30: #{tpu_custom_call.1} parent=11 // pred_check_branch
          %413 = sbr.rel (%p411) target = $region32
        $region31: #{tpu_custom_call.1} parent=11 // pred_region
          _
        $region32: #{tpu_custom_call.1} parent=11 // pred_fallthru
          _
        // Predicated region
        $region33: #{tpu_custom_call.1} parent=11 // pred_check
          %p414 = pneg %p206
        $region34: #{tpu_custom_call.1} parent=11 // pred_check_branch
          %416 = sbr.rel (%p414) target = $region36
        $region35: #{tpu_custom_call.1} parent=11 // pred_region
          _
        $region36: #{tpu_custom_call.1} parent=11 // pred_fallthru
          _
        // Predicated region
        $region37: #{tpu_custom_call.1} parent=11 // pred_check
          %p417 = pneg %p227
        $region38: #{tpu_custom_call.1} parent=11 // pred_check_branch
          %419 = sbr.rel (%p417) target = $region40
        $region39: #{tpu_custom_call.1} parent=11 // pred_region
          _
        $region40: #{tpu_custom_call.1} parent=11 // pred_fallthru
          _
        // Predicated region
        $region41: #{tpu_custom_call.1} parent=11 // pred_check
          %p420 = pneg %p248
        $region42: #{tpu_custom_call.1} parent=11 // pred_check_branch
          %422 = sbr.rel (%p420) target = $region44
        $region43: #{tpu_custom_call.1} parent=11 // pred_region
          _
        $region44: #{tpu_custom_call.1} parent=11 // pred_fallthru
          _
        // Predicated region
        $region45: #{tpu_custom_call.1} parent=11 // pred_check
          %p423 = pneg %p269
        $region46: #{tpu_custom_call.1} parent=11 // pred_check_branch
          %425 = sbr.rel (%p423) target = $region48
        $region47: #{tpu_custom_call.1} parent=11 // pred_region
          _
        $region48: #{tpu_custom_call.1} parent=11 // pred_fallthru
          _
        // Predicated region
        $region49: #{tpu_custom_call.1} parent=11 // pred_check
          %p426 = pneg %p290
        $region50: #{tpu_custom_call.1} parent=11 // pred_check_branch
          %428 = sbr.rel (%p426) target = $region52
        $region51: #{tpu_custom_call.1} parent=11 // pred_region
          _
        $region52: #{tpu_custom_call.1} parent=11 // pred_fallthru
          _
        // Predicated region
        $region53: #{tpu_custom_call.1} parent=11 // pred_check
          %p429 = pneg %p311
        $region54: #{tpu_custom_call.1} parent=11 // pred_check_branch
          %431 = sbr.rel (%p429) target = $region56
        $region55: #{tpu_custom_call.1} parent=11 // pred_region
          _
        $region56: #{tpu_custom_call.1} parent=11 // pred_fallthru
          _
        // Predicated region
        $region57: #{tpu_custom_call.1} parent=11 // pred_check
          %p432 = pneg %p332
        $region58: #{tpu_custom_call.1} parent=11 // pred_check_branch
          %434 = sbr.rel (%p432) target = $region60
        $region59: #{tpu_custom_call.1} parent=11 // pred_region
          _
        $region60: #{tpu_custom_call.1} parent=11 // pred_fallthru
          _
      $region12: #{tpu_custom_call.1} parent=5 // pred_fallthru
        _
      %p435 = scmp.lt.s32.totalorder %s28, 2
      // Predicated region
      $region61: #{tpu_custom_call.1} parent=5 // pred_check
        %p436 = pneg %p435
      $region62: #{tpu_custom_call.1} parent=5 // pred_check_branch
        %438 = sbr.rel (%p436) target = $region64
      $region63: #{tpu_custom_call.1} parent=5 // pred_region
        // Predicated region
        $region65: #{tpu_custom_call.1} parent=63 // pred_check
          %p439 = pneg %p48
        $region66: #{tpu_custom_call.1} parent=63 // pred_check_branch
          %441 = sbr.rel (%p439) target = $region68
        $region67: #{tpu_custom_call.1} parent=63 // pred_region
          %s442 = smul.u32 32, %s28
          %p443 = scmp.lt.s32.totalorder %s442, 63
          %s444 = scalar_select %p443, %s442, 63
          %s445 = smul.addr %s444, 4
          %s446 = scalar_lea.vmem %s0, %s445
          %s447 = smul.u32 32, %s28
        $region68: #{tpu_custom_call.1} parent=63 // pred_fallthru
          _
        // Predicated region
        $region69: #{tpu_custom_call.1} parent=63 // pred_check
          %p448 = pneg %p74
        $region70: #{tpu_custom_call.1} parent=63 // pred_check_branch
          %450 = sbr.rel (%p448) target = $region72
        $region71: #{tpu_custom_call.1} parent=63 // pred_region
          %s451 = smul.u32 32, %s28
          %p452 = scmp.lt.s32.totalorder %s451, 63
          %s453 = scalar_select %p452, %s451, 63
          %s454 = smul.addr %s453, 8
          %s455 = scalar_lea.vmem %s1, %s454
          %s456 = smul.u32 32, %s28
        $region72: #{tpu_custom_call.1} parent=63 // pred_fallthru
          _
      $region64: #{tpu_custom_call.1} parent=5 // pred_fallthru
        _
      %p457 = scmp.le.s32.totalorder 1, %s28
      %p458 = scmp.lt.s32.totalorder %s28, 3
      %p459 = pnand %p457, %p458
      %p460 = pneg %p459
      // Predicated region
      $region73: #{tpu_custom_call.1} parent=5 // pred_check
        _
      $region74: #{tpu_custom_call.1} parent=5 // pred_check_branch
        %462 = sbr.rel (%p459) target = $region76
      $region75: #{tpu_custom_call.1} parent=5 // pred_region
        %s463 = ssub.s32 %s28, 1
        %s464 = smul.u32 32, %s33
        %p465 = scmp.lt.s32.totalorder %s464, 63
        %s466 = scalar_select %p465, %s464, 63
        %s467 = smul.addr %s466, 4
        %s468 = scalar_lea.vmem %s0, %s467
        %p469 = pneg %p54
        %p470 = pneg %p51
        %s471 = smul.u32 32, %s33
        %p472 = scmp.lt.s32.totalorder %s471, 63
        %s473 = scalar_select %p472, %s471, 63
        %s474 = smul.addr %s473, 8
        %s475 = scalar_lea.vmem %s1, %s474
        %p476 = pneg %p80
        %p477 = pneg %p77
        %p478 = pneg %p101
        %p479 = pneg %p98
        %p480 = pneg %p122
        %p481 = pneg %p119
        %p482 = pneg %p143
        %p483 = pneg %p140
        %p484 = pneg %p164
        %p485 = pneg %p161
        %p486 = pneg %p185
        %p487 = pneg %p182
        %p488 = pneg %p206
        %p489 = pneg %p203
        %p490 = pneg %p227
        %p491 = pneg %p224
        %p492 = pneg %p248
        %p493 = pneg %p245
        %p494 = pneg %p269
        %p495 = pneg %p266
        %p496 = pneg %p290
        %p497 = pneg %p287
        %p498 = pneg %p311
        %p499 = pneg %p308
        %p500 = pneg %p332
        %p501 = pneg %p329
        %p502 = pneg %p358
        %p503 = pneg %p355
        %s504 = sand.u32 %s345, 1
        %s505 = scalar_lea.sflag [#allocation3], %s504
        %s506 = sand.u32 %s345, 1
        %s507 = smul.addr %s506, 256
        %s508 = scalar_lea.vmem [#allocation2], %s507
        %p509 = pneg %p384
        %p510 = pneg %p381
        %s511 = sand.u32 %s371, 1
        %s512 = scalar_lea.sflag [#allocation5], %s511
        %s513 = sand.u32 %s371, 1
        %s514 = smul.addr %s513, 256
        %s515 = scalar_lea.vmem [#allocation4], %s514
        %s516 = smul.u32 32, %s33
        %p517 = scmp.lt.s32.totalorder %s516, 63
        %s518 = scalar_select %p517, %s516, 63
        %s519 = smul.addr %s518, 4
        %s520 = scalar_lea.vmem %s0, %s519
        %s521 = smul.u32 32, %s33
        %s522 = smul.u32 32, %s33
        %p523 = scmp.lt.s32.totalorder %s522, 63
        %s524 = scalar_select %p523, %s522, 63
        %s525 = smul.addr %s524, 8
        %s526 = scalar_lea.vmem %s1, %s525
        %s527 = smul.u32 32, %s33
        %s528 = smul.u32 32, %s33
        %s529 = smul.u32 32, %s33
        %v531 = vld [vmem:[%s520] sm:$0xf]
        %v532 = vld [vmem:[%s520 + $0x4] sm:$0xf]
        %v533 = vld [vmem:[%s520 + $0x8] sm:$0xf]
        %v534 = vld [vmem:[%s520 + $0xc] sm:$0xf]
        %v535 = vld [vmem:[%s520 + $0x10] sm:$0xf]
        %v536 = vld [vmem:[%s520 + $0x14] sm:$0xf]
        %v537 = vld [vmem:[%s520 + $0x18] sm:$0xf]
        %v538 = vld [vmem:[%s520 + $0x1c] sm:$0xf]
        %v539 = vld [vmem:[%s520 + $0x20] sm:$0xf]
        %v540 = vld [vmem:[%s520 + $0x24] sm:$0xf]
        %v541 = vld [vmem:[%s520 + $0x28] sm:$0xf]
        %v542 = vld [vmem:[%s520 + $0x2c] sm:$0xf]
        %v543 = vld [vmem:[%s520 + $0x30] sm:$0xf]
        %v544 = vld [vmem:[%s520 + $0x34] sm:$0xf]
        %v545 = vld [vmem:[%s520 + $0x38] sm:$0xf]
        %v546 = vld [vmem:[%s520 + $0x3c] sm:$0xf]
        %v547 = vld [vmem:[%s520 + $0x40] sm:$0xf]
        %v548 = vld [vmem:[%s520 + $0x44] sm:$0xf]
        %v549 = vld [vmem:[%s520 + $0x48] sm:$0xf]
        %v550 = vld [vmem:[%s520 + $0x4c] sm:$0xf]
        %v551 = vld [vmem:[%s520 + $0x50] sm:$0xf]
        %v552 = vld [vmem:[%s520 + $0x54] sm:$0xf]
        %v553 = vld [vmem:[%s520 + $0x58] sm:$0xf]
        %v554 = vld [vmem:[%s520 + $0x5c] sm:$0xf]
        %v555 = vld [vmem:[%s520 + $0x60] sm:$0xf]
        %v556 = vld [vmem:[%s520 + $0x64] sm:$0xf]
        %v557 = vld [vmem:[%s520 + $0x68] sm:$0xf]
        %v558 = vld [vmem:[%s520 + $0x6c] sm:$0xf]
        %v559 = vld [vmem:[%s520 + $0x70] sm:$0xf]
        %v560 = vld [vmem:[%s520 + $0x74] sm:$0xf]
        %v561 = vld [vmem:[%s520 + $0x78] sm:$0xf]
        %v562 = vld [vmem:[%s520 + $0x7c] sm:$0xf]
        %v563 = vld [vmem:[%s2] sm:$0xf]
        %v564 = vld [vmem:[%s2 + $0x4] sm:$0xf]
        %v565 = vld [vmem:[%s2 + $0x8] sm:$0xf]
        %v566 = vld [vmem:[%s2 + $0xc] sm:$0xf]
        %v567 = vld [vmem:[%s3] sm:$0x1]
        %v569 = vlaneseq
        %v570 = vshrl.u32 %v569, 7
        %v571 = vsub.s32 0, %v570
        %v572 = vrot.slane %v567, %v571
        %v606 = vunpack.c.l.b16 %v531
        %v607 = vunpack.c.l.b16 %v532
        %v608 = vunpack.c.l.b16 %v533
        %v609 = vunpack.c.l.b16 %v534
        %v610 = vunpack.c.l.b16 %v535
        %v611 = vunpack.c.l.b16 %v536
        %v612 = vunpack.c.l.b16 %v537
        %v613 = vunpack.c.l.b16 %v538
        %v614 = vunpack.c.l.b16 %v539
        %v615 = vunpack.c.l.b16 %v540
        %v616 = vunpack.c.l.b16 %v541
        %v617 = vunpack.c.l.b16 %v542
        %v618 = vunpack.c.l.b16 %v543
        %v619 = vunpack.c.l.b16 %v544
        %v620 = vunpack.c.l.b16 %v545
        %v621 = vunpack.c.l.b16 %v546
        %v622 = vunpack.c.l.b16 %v547
        %v623 = vunpack.c.l.b16 %v548
        %v624 = vunpack.c.l.b16 %v549
        %v625 = vunpack.c.l.b16 %v550
        %v626 = vunpack.c.l.b16 %v551
        %v627 = vunpack.c.l.b16 %v552
        %v628 = vunpack.c.l.b16 %v553
        %v629 = vunpack.c.l.b16 %v554
        %v630 = vunpack.c.l.b16 %v555
        %v631 = vunpack.c.l.b16 %v556
        %v632 = vunpack.c.l.b16 %v557
        %v633 = vunpack.c.l.b16 %v558
        %v634 = vunpack.c.l.b16 %v559
        %v635 = vunpack.c.l.b16 %v560
        %v636 = vunpack.c.l.b16 %v561
        %v637 = vunpack.c.l.b16 %v562
        %v638 = vpack.c.b16 %v607, %v606
        %v639 = vpack.c.b16 %v609, %v608
        %v640 = vpack.c.b16 %v611, %v610
        %v641 = vpack.c.b16 %v613, %v612
        %v642 = vpack.c.b16 %v615, %v614
        %v643 = vpack.c.b16 %v617, %v616
        %v644 = vpack.c.b16 %v619, %v618
        %v645 = vpack.c.b16 %v621, %v620
        %v646 = vpack.c.b16 %v623, %v622
        %v647 = vpack.c.b16 %v625, %v624
        %v648 = vpack.c.b16 %v627, %v626
        %v649 = vpack.c.b16 %v629, %v628
        %v650 = vpack.c.b16 %v631, %v630
        %v651 = vpack.c.b16 %v633, %v632
        %v652 = vpack.c.b16 %v635, %v634
        %v653 = vpack.c.b16 %v637, %v636
        %v658 = vunpack.c.l.b16 %v563
        %v659 = vunpack.c.l.b16 %v564
        %v660 = vunpack.c.l.b16 %v565
        %v661 = vunpack.c.l.b16 %v566
        %v662 = vpack.c.b16 %v659, %v658
        %v663 = vpack.c.b16 %v661, %v660
        %vm666 = vcmask 261120
        %v668 = vsel %vm666, %v638, 0
        %v671 = vsel %vm666, %v639, 0
        %v674 = vsel %vm666, %v640, 0
        %v677 = vsel %vm666, %v641, 0
        %v680 = vsel %vm666, %v642, 0
        %v683 = vsel %vm666, %v643, 0
        %v686 = vsel %vm666, %v644, 0
        %v689 = vsel %vm666, %v645, 0
        %v692 = vsel %vm666, %v646, 0
        %v695 = vsel %vm666, %v647, 0
        %v698 = vsel %vm666, %v648, 0
        %v701 = vsel %vm666, %v649, 0
        %v704 = vsel %vm666, %v650, 0
        %v707 = vsel %vm666, %v651, 0
        %v710 = vsel %vm666, %v652, 0
        %v713 = vsel %vm666, %v653, 0
        %715 = vmatprep.subr.bf16.mxu0 0
        %716 = vmatpush1.bf16.msra.mxu0 %v662
        %717 = vmatprep.subr.bf16.mxu0 0
        %718 = vmatpush1.bf16.msra.mxu0 %v663
        %719 = vmatprep.subr.bf16.mxu0 0
        %720 = vmatpush1.bf16.msra.mxu0 0
        %721 = vmatprep.subr.bf16.mxu0 0
        %722 = vmatpush1.bf16.msra.mxu0 0
        %723 = vmatprep.subr.bf16.mxu0 0
        %724 = vmatpush1.bf16.msra.mxu0 0
        %725 = vmatprep.subr.bf16.mxu0 0
        %726 = vmatpush1.bf16.msra.mxu0 0
        %727 = vmatprep.subr.bf16.mxu0 0
        %728 = vmatpush1.bf16.msra.mxu0 0
        %729 = vmatprep.subr.bf16.mxu0 0
        %730 = vmatpush1.bf16.msra.mxu0 0
        %731 = vmatprep.subr.bf16.mxu0 0
        %732 = vmatpush1.bf16.msra.mxu0 0
        %733 = vmatprep.subr.bf16.mxu0 0
        %734 = vmatpush1.bf16.msra.mxu0 0
        %735 = vmatprep.subr.bf16.mxu0 0
        %736 = vmatpush1.bf16.msra.mxu0 0
        %737 = vmatprep.subr.bf16.mxu0 0
        %738 = vmatpush1.bf16.msra.mxu0 0
        %739 = vmatprep.subr.bf16.mxu0 0
        %740 = vmatpush1.bf16.msra.mxu0 0
        %741 = vmatprep.subr.bf16.mxu0 0
        %742 = vmatpush1.bf16.msra.mxu0 0
        %743 = vmatprep.subr.bf16.mxu0 0
        %744 = vmatpush1.bf16.msra.mxu0 0
        %745 = vmatprep.subr.bf16.mxu0 0
        %746 = vmatpush1.bf16.msra.mxu0 0
        %747 = vmatprep.mubr.bf16.mxu0 0
        %748 = vmatmul.mubr.bf16.gmra.mrb[0].mxu0 %v668
        %v749 = vpop.f32.mrb[0].mxu0
        %v750 = vadd.f32 %v572, %v749
        %v751 = vpop.f32.mrb[0].mxu0
        %v752 = vpop.f32.mrb[0].mxu0
        %v753 = vadd.f32 %v572, %v752
        %v754 = vpop.f32.mrb[0].mxu0
        %755 = vmatprep.mubr.bf16.mxu0 0
        %756 = vmatmul.mubr.bf16.gmra.mrb[0].mxu0 %v671
        %v757 = vpop.f32.mrb[0].mxu0
        %v758 = vadd.f32 %v572, %v757
        %v759 = vpop.f32.mrb[0].mxu0
        %v760 = vpop.f32.mrb[0].mxu0
        %v761 = vadd.f32 %v572, %v760
        %v762 = vpop.f32.mrb[0].mxu0
        %763 = vmatprep.mubr.bf16.mxu0 0
        %764 = vmatmul.mubr.bf16.gmra.mrb[0].mxu0 %v674
        %v765 = vpop.f32.mrb[0].mxu0
        %v766 = vadd.f32 %v572, %v765
        %v767 = vpop.f32.mrb[0].mxu0
        %v768 = vpop.f32.mrb[0].mxu0
        %v769 = vadd.f32 %v572, %v768
        %v770 = vpop.f32.mrb[0].mxu0
        %771 = vmatprep.mubr.bf16.mxu0 0
        %772 = vmatmul.mubr.bf16.gmra.mrb[0].mxu0 %v677
        %v773 = vpop.f32.mrb[0].mxu0
        %v774 = vadd.f32 %v572, %v773
        %v775 = vpop.f32.mrb[0].mxu0
        %v776 = vpop.f32.mrb[0].mxu0
        %v777 = vadd.f32 %v572, %v776
        %v778 = vpop.f32.mrb[0].mxu0
        %779 = vmatprep.mubr.bf16.mxu0 0
        %780 = vmatmul.mubr.bf16.gmra.mrb[0].mxu0 %v680
        %v781 = vpop.f32.mrb[0].mxu0
        %v782 = vadd.f32 %v572, %v781
        %v783 = vpop.f32.mrb[0].mxu0
        %v784 = vpop.f32.mrb[0].mxu0
        %v785 = vadd.f32 %v572, %v784
        %v786 = vpop.f32.mrb[0].mxu0
        %787 = vmatprep.mubr.bf16.mxu0 0
        %788 = vmatmul.mubr.bf16.gmra.mrb[0].mxu0 %v683
        %v789 = vpop.f32.mrb[0].mxu0
        %v790 = vadd.f32 %v572, %v789
        %v791 = vpop.f32.mrb[0].mxu0
        %v792 = vpop.f32.mrb[0].mxu0
        %v793 = vadd.f32 %v572, %v792
        %v794 = vpop.f32.mrb[0].mxu0
        %795 = vmatprep.mubr.bf16.mxu0 0
        %796 = vmatmul.mubr.bf16.gmra.mrb[0].mxu0 %v686
        %v797 = vpop.f32.mrb[0].mxu0
        %v798 = vadd.f32 %v572, %v797
        %v799 = vpop.f32.mrb[0].mxu0
        %v800 = vpop.f32.mrb[0].mxu0
        %v801 = vadd.f32 %v572, %v800
        %v802 = vpop.f32.mrb[0].mxu0
        %803 = vmatprep.mubr.bf16.mxu0 0
        %804 = vmatmul.mubr.bf16.gmra.mrb[0].mxu0 %v689
        %v805 = vpop.f32.mrb[0].mxu0
        %v806 = vadd.f32 %v572, %v805
        %v807 = vpop.f32.mrb[0].mxu0
        %v808 = vpop.f32.mrb[0].mxu0
        %v809 = vadd.f32 %v572, %v808
        %v810 = vpop.f32.mrb[0].mxu0
        %811 = vmatprep.mubr.bf16.mxu0 0
        %812 = vmatmul.mubr.bf16.gmra.mrb[0].mxu0 %v692
        %v813 = vpop.f32.mrb[0].mxu0
        %v814 = vadd.f32 %v572, %v813
        %v815 = vpop.f32.mrb[0].mxu0
        %v816 = vpop.f32.mrb[0].mxu0
        %v817 = vadd.f32 %v572, %v816
        %v818 = vpop.f32.mrb[0].mxu0
        %819 = vmatprep.mubr.bf16.mxu0 0
        %820 = vmatmul.mubr.bf16.gmra.mrb[0].mxu0 %v695
        %v821 = vpop.f32.mrb[0].mxu0
        %v822 = vadd.f32 %v572, %v821
        %v823 = vpop.f32.mrb[0].mxu0
        %v824 = vpop.f32.mrb[0].mxu0
        %v825 = vadd.f32 %v572, %v824
        %v826 = vpop.f32.mrb[0].mxu0
        %827 = vmatprep.mubr.bf16.mxu0 0
        %828 = vmatmul.mubr.bf16.gmra.mrb[0].mxu0 %v698
        %v829 = vpop.f32.mrb[0].mxu0
        %v830 = vadd.f32 %v572, %v829
        %v831 = vpop.f32.mrb[0].mxu0
        %v832 = vpop.f32.mrb[0].mxu0
        %v833 = vadd.f32 %v572, %v832
        %v834 = vpop.f32.mrb[0].mxu0
        %835 = vmatprep.mubr.bf16.mxu0 0
        %836 = vmatmul.mubr.bf16.gmra.mrb[0].mxu0 %v701
        %v837 = vpop.f32.mrb[0].mxu0
        %v838 = vadd.f32 %v572, %v837
        %v839 = vpop.f32.mrb[0].mxu0
        %v840 = vpop.f32.mrb[0].mxu0
        %v841 = vadd.f32 %v572, %v840
        %v842 = vpop.f32.mrb[0].mxu0
        %843 = vmatprep.mubr.bf16.mxu0 0
        %844 = vmatmul.mubr.bf16.gmra.mrb[0].mxu0 %v704
        %v845 = vpop.f32.mrb[0].mxu0
        %v846 = vadd.f32 %v572, %v845
        %v847 = vpop.f32.mrb[0].mxu0
        %v848 = vpop.f32.mrb[0].mxu0
        %v849 = vadd.f32 %v572, %v848
        %v850 = vpop.f32.mrb[0].mxu0
        %851 = vmatprep.mubr.bf16.mxu0 0
        %852 = vmatmul.mubr.bf16.gmra.mrb[0].mxu0 %v707
        %v853 = vpop.f32.mrb[0].mxu0
        %v854 = vadd.f32 %v572, %v853
        %v855 = vpop.f32.mrb[0].mxu0
        %v856 = vpop.f32.mrb[0].mxu0
        %v857 = vadd.f32 %v572, %v856
        %v858 = vpop.f32.mrb[0].mxu0
        %859 = vmatprep.mubr.bf16.mxu0 0
        %860 = vmatmul.mubr.bf16.gmra.mrb[0].mxu0 %v710
        %v861 = vpop.f32.mrb[0].mxu0
        %v862 = vadd.f32 %v572, %v861
        %v863 = vpop.f32.mrb[0].mxu0
        %v864 = vpop.f32.mrb[0].mxu0
        %v865 = vadd.f32 %v572, %v864
        %v866 = vpop.f32.mrb[0].mxu0
        %867 = vmatprep.mubr.bf16.mxu0 0
        %868 = vmatmul.mubr.bf16.gmra.mrb[0].mxu0 %v713
        %v869 = vpop.f32.mrb[0].mxu0
        %v870 = vadd.f32 %v572, %v869
        %v871 = vpop.f32.mrb[0].mxu0
        %v872 = vpop.f32.mrb[0].mxu0
        %v873 = vadd.f32 %v572, %v872
        %v874 = vpop.f32.mrb[0].mxu0
        %875 = vdwg.mxu0
        %vm876 = vcmp.gt.f32.partialorder %v750, 0.0
        %vm877 = vcmp.gt.f32.partialorder %v753, 0.0
        %vm878 = vcmp.gt.f32.partialorder %v758, 0.0
        %vm879 = vcmp.gt.f32.partialorder %v761, 0.0
        %vm880 = vcmp.gt.f32.partialorder %v766, 0.0
        %vm881 = vcmp.gt.f32.partialorder %v769, 0.0
        %vm882 = vcmp.gt.f32.partialorder %v774, 0.0
        %vm883 = vcmp.gt.f32.partialorder %v777, 0.0
        %vm884 = vcmp.gt.f32.partialorder %v782, 0.0
        %vm885 = vcmp.gt.f32.partialorder %v785, 0.0
        %vm886 = vcmp.gt.f32.partialorder %v790, 0.0
        %vm887 = vcmp.gt.f32.partialorder %v793, 0.0
        %vm888 = vcmp.gt.f32.partialorder %v798, 0.0
        %vm889 = vcmp.gt.f32.partialorder %v801, 0.0
        %vm890 = vcmp.gt.f32.partialorder %v806, 0.0
        %vm891 = vcmp.gt.f32.partialorder %v809, 0.0
        %vm892 = vcmp.gt.f32.partialorder %v814, 0.0
        %vm893 = vcmp.gt.f32.partialorder %v817, 0.0
        %vm894 = vcmp.gt.f32.partialorder %v822, 0.0
        %vm895 = vcmp.gt.f32.partialorder %v825, 0.0
        %vm896 = vcmp.gt.f32.partialorder %v830, 0.0
        %vm897 = vcmp.gt.f32.partialorder %v833, 0.0
        %vm898 = vcmp.gt.f32.partialorder %v838, 0.0
        %vm899 = vcmp.gt.f32.partialorder %v841, 0.0
        %vm900 = vcmp.gt.f32.partialorder %v846, 0.0
        %vm901 = vcmp.gt.f32.partialorder %v849, 0.0
        %vm902 = vcmp.gt.f32.partialorder %v854, 0.0
        %vm903 = vcmp.gt.f32.partialorder %v857, 0.0
        %vm904 = vcmp.gt.f32.partialorder %v862, 0.0
        %vm905 = vcmp.gt.f32.partialorder %v865, 0.0
        %vm906 = vcmp.gt.f32.partialorder %v870, 0.0
        %vm907 = vcmp.gt.f32.partialorder %v873, 0.0
        %v908 = vmul.f32 %v750, 0.2
        %v909 = vmul.f32 %v753, 0.2
        %v910 = vmul.f32 %v758, 0.2
        %v911 = vmul.f32 %v761, 0.2
        %v912 = vmul.f32 %v766, 0.2
        %v913 = vmul.f32 %v769, 0.2
        %v914 = vmul.f32 %v774, 0.2
        %v915 = vmul.f32 %v777, 0.2
        %v916 = vmul.f32 %v782, 0.2
        %v917 = vmul.f32 %v785, 0.2
        %v918 = vmul.f32 %v790, 0.2
        %v919 = vmul.f32 %v793, 0.2
        %v920 = vmul.f32 %v798, 0.2
        %v921 = vmul.f32 %v801, 0.2
        %v922 = vmul.f32 %v806, 0.2
        %v923 = vmul.f32 %v809, 0.2
        %v924 = vmul.f32 %v814, 0.2
        %v925 = vmul.f32 %v817, 0.2
        %v926 = vmul.f32 %v822, 0.2
        %v927 = vmul.f32 %v825, 0.2
        %v928 = vmul.f32 %v830, 0.2
        %v929 = vmul.f32 %v833, 0.2
        %v930 = vmul.f32 %v838, 0.2
        %v931 = vmul.f32 %v841, 0.2
        %v932 = vmul.f32 %v846, 0.2
        %v933 = vmul.f32 %v849, 0.2
        %v934 = vmul.f32 %v854, 0.2
        %v935 = vmul.f32 %v857, 0.2
        %v936 = vmul.f32 %v862, 0.2
        %v937 = vmul.f32 %v865, 0.2
        %v938 = vmul.f32 %v870, 0.2
        %v939 = vmul.f32 %v873, 0.2
        %v940 = vsel %vm876, %v750, %v908
        %v941 = vsel %vm877, %v753, %v909
        %v942 = vsel %vm878, %v758, %v910
        %v943 = vsel %vm879, %v761, %v911
        %v944 = vsel %vm880, %v766, %v912
        %v945 = vsel %vm881, %v769, %v913
        %v946 = vsel %vm882, %v774, %v914
        %v947 = vsel %vm883, %v777, %v915
        %v948 = vsel %vm884, %v782, %v916
        %v949 = vsel %vm885, %v785, %v917
        %v950 = vsel %vm886, %v790, %v918
        %v951 = vsel %vm887, %v793, %v919
        %v952 = vsel %vm888, %v798, %v920
        %v953 = vsel %vm889, %v801, %v921
        %v954 = vsel %vm890, %v806, %v922
        %v955 = vsel %vm891, %v809, %v923
        %v956 = vsel %vm892, %v814, %v924
        %v957 = vsel %vm893, %v817, %v925
        %v958 = vsel %vm894, %v822, %v926
        %v959 = vsel %vm895, %v825, %v927
        %v960 = vsel %vm896, %v830, %v928
        %v961 = vsel %vm897, %v833, %v929
        %v962 = vsel %vm898, %v838, %v930
        %v963 = vsel %vm899, %v841, %v931
        %v964 = vsel %vm900, %v846, %v932
        %v965 = vsel %vm901, %v849, %v933
        %v966 = vsel %vm902, %v854, %v934
        %v967 = vsel %vm903, %v857, %v935
        %v968 = vsel %vm904, %v862, %v936
        %v969 = vsel %vm905, %v865, %v937
        %v970 = vsel %vm906, %v870, %v938
        %v971 = vsel %vm907, %v873, %v939
        %v972 = vpack.c.bf16 %v941, %v940
        %v973 = vpack.c.bf16 %v943, %v942
        %v974 = vpack.c.bf16 %v945, %v944
        %v975 = vpack.c.bf16 %v947, %v946
        %v976 = vpack.c.bf16 %v949, %v948
        %v977 = vpack.c.bf16 %v951, %v950
        %v978 = vpack.c.bf16 %v953, %v952
        %v979 = vpack.c.bf16 %v955, %v954
        %v980 = vpack.c.bf16 %v957, %v956
        %v981 = vpack.c.bf16 %v959, %v958
        %v982 = vpack.c.bf16 %v961, %v960
        %v983 = vpack.c.bf16 %v963, %v962
        %v984 = vpack.c.bf16 %v965, %v964
        %v985 = vpack.c.bf16 %v967, %v966
        %v986 = vpack.c.bf16 %v969, %v968
        %v987 = vpack.c.bf16 %v971, %v970
        %v988 = vld [vmem:[%s4] sm:$0xf]
        %v989 = vld [vmem:[%s4 + $0x4] sm:$0xf]
        %v990 = vld [vmem:[%s4 + $0x8] sm:$0xf]
        %v991 = vld [vmem:[%s4 + $0xc] sm:$0xf]
        %v992 = vld [vmem:[%s4 + $0x10] sm:$0xf]
        %v993 = vld [vmem:[%s4 + $0x14] sm:$0xf]
        %v994 = vld [vmem:[%s4 + $0x18] sm:$0xf]
        %v995 = vld [vmem:[%s4 + $0x1c] sm:$0xf]
        %v996 = vld [vmem:[%s4 + $0x20] sm:$0xf]
        %v997 = vld [vmem:[%s4 + $0x24] sm:$0xf]
        %v998 = vld [vmem:[%s4 + $0x28] sm:$0xf]
        %v999 = vld [vmem:[%s4 + $0x2c] sm:$0xf]
        %v1000 = vld [vmem:[%s4 + $0x30] sm:$0xf]
        %v1001 = vld [vmem:[%s4 + $0x34] sm:$0xf]
        %v1002 = vld [vmem:[%s4 + $0x38] sm:$0xf]
        %v1003 = vld [vmem:[%s4 + $0x3c] sm:$0xf]
        %v1004 = vld [vmem:[%s5] sm:$0x1]
        %v1006 = vlaneseq
        %v1007 = vshrl.u32 %v1006, 7
        %v1008 = vsub.s32 0, %v1007
        %v1009 = vrot.slane %v1004, %v1008
        %v1027 = vunpack.c.l.b16 %v988
        %v1028 = vunpack.c.l.b16 %v989
        %v1029 = vunpack.c.l.b16 %v990
        %v1030 = vunpack.c.l.b16 %v991
        %v1031 = vunpack.c.l.b16 %v992
        %v1032 = vunpack.c.l.b16 %v993
        %v1033 = vunpack.c.l.b16 %v994
        %v1034 = vunpack.c.l.b16 %v995
        %v1035 = vunpack.c.l.b16 %v996
        %v1036 = vunpack.c.l.b16 %v997
        %v1037 = vunpack.c.l.b16 %v998
        %v1038 = vunpack.c.l.b16 %v999
        %v1039 = vunpack.c.l.b16 %v1000
        %v1040 = vunpack.c.l.b16 %v1001
        %v1041 = vunpack.c.l.b16 %v1002
        %v1042 = vunpack.c.l.b16 %v1003
        %v1043 = vpack.c.b16 %v1028, %v1027
        %v1044 = vpack.c.b16 %v1030, %v1029
        %v1045 = vpack.c.b16 %v1032, %v1031
        %v1046 = vpack.c.b16 %v1034, %v1033
        %v1047 = vpack.c.b16 %v1036, %v1035
        %v1048 = vpack.c.b16 %v1038, %v1037
        %v1049 = vpack.c.b16 %v1040, %v1039
        %v1050 = vpack.c.b16 %v1042, %v1041
        %1059 = vmatprep.subr.bf16.mxu0 0
        %1060 = vmatpush1.bf16.msra.mxu0 %v1043
        %1061 = vmatprep.subr.bf16.mxu0 0
        %1062 = vmatpush1.bf16.msra.mxu0 %v1044
        %1063 = vmatprep.subr.bf16.mxu0 0
        %1064 = vmatpush1.bf16.msra.mxu0 %v1045
        %1065 = vmatprep.subr.bf16.mxu0 0
        %1066 = vmatpush1.bf16.msra.mxu0 %v1046
        %1067 = vmatprep.subr.bf16.mxu0 0
        %1068 = vmatpush1.bf16.msra.mxu0 %v1047
        %1069 = vmatprep.subr.bf16.mxu0 0
        %1070 = vmatpush1.bf16.msra.mxu0 %v1048
        %1071 = vmatprep.subr.bf16.mxu0 0
        %1072 = vmatpush1.bf16.msra.mxu0 %v1049
        %1073 = vmatprep.subr.bf16.mxu0 0
        %1074 = vmatpush1.bf16.msra.mxu0 %v1050
        %1075 = vmatprep.subr.bf16.mxu0 0
        %1076 = vmatpush1.bf16.msra.mxu0 0
        %1077 = vmatprep.subr.bf16.mxu0 0
        %1078 = vmatpush1.bf16.msra.mxu0 0
        %1079 = vmatprep.subr.bf16.mxu0 0
        %1080 = vmatpush1.bf16.msra.mxu0 0
        %1081 = vmatprep.subr.bf16.mxu0 0
        %1082 = vmatpush1.bf16.msra.mxu0 0
        %1083 = vmatprep.subr.bf16.mxu0 0
        %1084 = vmatpush1.bf16.msra.mxu0 0
        %1085 = vmatprep.subr.bf16.mxu0 0
        %1086 = vmatpush1.bf16.msra.mxu0 0
        %1087 = vmatprep.subr.bf16.mxu0 0
        %1088 = vmatpush1.bf16.msra.mxu0 0
        %1089 = vmatprep.subr.bf16.mxu0 0
        %1090 = vmatpush1.bf16.msra.mxu0 0
        %1091 = vmatprep.mubr.bf16.mxu0 0
        %1092 = vmatmul.mubr.bf16.gmra.mrb[0].mxu0 %v972
        %v1093 = vpop.f32.mrb[0].mxu0
        %v1094 = vadd.f32 %v1009, %v1093
        %v1095 = vpop.f32.mrb[0].mxu0
        %v1096 = vpop.f32.mrb[0].mxu0
        %v1097 = vadd.f32 %v1009, %v1096
        %v1098 = vpop.f32.mrb[0].mxu0
        %1099 = vmatprep.mubr.bf16.mxu0 0
        %1100 = vmatmul.mubr.bf16.gmra.mrb[0].mxu0 %v973
        %v1101 = vpop.f32.mrb[0].mxu0
        %v1102 = vadd.f32 %v1009, %v1101
        %v1103 = vpop.f32.mrb[0].mxu0
        %v1104 = vpop.f32.mrb[0].mxu0
        %v1105 = vadd.f32 %v1009, %v1104
        %v1106 = vpop.f32.mrb[0].mxu0
        %1107 = vmatprep.mubr.bf16.mxu0 0
        %1108 = vmatmul.mubr.bf16.gmra.mrb[0].mxu0 %v974
        %v1109 = vpop.f32.mrb[0].mxu0
        %v1110 = vadd.f32 %v1009, %v1109
        %v1111 = vpop.f32.mrb[0].mxu0
        %v1112 = vpop.f32.mrb[0].mxu0
        %v1113 = vadd.f32 %v1009, %v1112
        %v1114 = vpop.f32.mrb[0].mxu0
        %1115 = vmatprep.mubr.bf16.mxu0 0
        %1116 = vmatmul.mubr.bf16.gmra.mrb[0].mxu0 %v975
        %v1117 = vpop.f32.mrb[0].mxu0
        %v1118 = vadd.f32 %v1009, %v1117
        %v1119 = vpop.f32.mrb[0].mxu0
        %v1120 = vpop.f32.mrb[0].mxu0
        %v1121 = vadd.f32 %v1009, %v1120
        %v1122 = vpop.f32.mrb[0].mxu0
        %1123 = vmatprep.mubr.bf16.mxu0 0
        %1124 = vmatmul.mubr.bf16.gmra.mrb[0].mxu0 %v976
        %v1125 = vpop.f32.mrb[0].mxu0
        %v1126 = vadd.f32 %v1009, %v1125
        %v1127 = vpop.f32.mrb[0].mxu0
        %v1128 = vpop.f32.mrb[0].mxu0
        %v1129 = vadd.f32 %v1009, %v1128
        %v1130 = vpop.f32.mrb[0].mxu0
        %1131 = vmatprep.mubr.bf16.mxu0 0
        %1132 = vmatmul.mubr.bf16.gmra.mrb[0].mxu0 %v977
        %v1133 = vpop.f32.mrb[0].mxu0
        %v1134 = vadd.f32 %v1009, %v1133
        %v1135 = vpop.f32.mrb[0].mxu0
        %v1136 = vpop.f32.mrb[0].mxu0
        %v1137 = vadd.f32 %v1009, %v1136
        %v1138 = vpop.f32.mrb[0].mxu0
        %1139 = vmatprep.mubr.bf16.mxu0 0
        %1140 = vmatmul.mubr.bf16.gmra.mrb[0].mxu0 %v978
        %v1141 = vpop.f32.mrb[0].mxu0
        %v1142 = vadd.f32 %v1009, %v1141
        %v1143 = vpop.f32.mrb[0].mxu0
        %v1144 = vpop.f32.mrb[0].mxu0
        %v1145 = vadd.f32 %v1009, %v1144
        %v1146 = vpop.f32.mrb[0].mxu0
        %1147 = vmatprep.mubr.bf16.mxu0 0
        %1148 = vmatmul.mubr.bf16.gmra.mrb[0].mxu0 %v979
        %v1149 = vpop.f32.mrb[0].mxu0
        %v1150 = vadd.f32 %v1009, %v1149
        %v1151 = vpop.f32.mrb[0].mxu0
        %v1152 = vpop.f32.mrb[0].mxu0
        %v1153 = vadd.f32 %v1009, %v1152
        %v1154 = vpop.f32.mrb[0].mxu0
        %1155 = vmatprep.mubr.bf16.mxu0 0
        %1156 = vmatmul.mubr.bf16.gmra.mrb[0].mxu0 %v980
        %v1157 = vpop.f32.mrb[0].mxu0
        %v1158 = vadd.f32 %v1009, %v1157
        %v1159 = vpop.f32.mrb[0].mxu0
        %v1160 = vpop.f32.mrb[0].mxu0
        %v1161 = vadd.f32 %v1009, %v1160
        %v1162 = vpop.f32.mrb[0].mxu0
        %1163 = vmatprep.mubr.bf16.mxu0 0
        %1164 = vmatmul.mubr.bf16.gmra.mrb[0].mxu0 %v981
        %v1165 = vpop.f32.mrb[0].mxu0
        %v1166 = vadd.f32 %v1009, %v1165
        %v1167 = vpop.f32.mrb[0].mxu0
        %v1168 = vpop.f32.mrb[0].mxu0
        %v1169 = vadd.f32 %v1009, %v1168
        %v1170 = vpop.f32.mrb[0].mxu0
        %1171 = vmatprep.mubr.bf16.mxu0 0
        %1172 = vmatmul.mubr.bf16.gmra.mrb[0].mxu0 %v982
        %v1173 = vpop.f32.mrb[0].mxu0
        %v1174 = vadd.f32 %v1009, %v1173
        %v1175 = vpop.f32.mrb[0].mxu0
        %v1176 = vpop.f32.mrb[0].mxu0
        %v1177 = vadd.f32 %v1009, %v1176
        %v1178 = vpop.f32.mrb[0].mxu0
        %1179 = vmatprep.mubr.bf16.mxu0 0
        %1180 = vmatmul.mubr.bf16.gmra.mrb[0].mxu0 %v983
        %v1181 = vpop.f32.mrb[0].mxu0
        %v1182 = vadd.f32 %v1009, %v1181
        %v1183 = vpop.f32.mrb[0].mxu0
        %v1184 = vpop.f32.mrb[0].mxu0
        %v1185 = vadd.f32 %v1009, %v1184
        %v1186 = vpop.f32.mrb[0].mxu0
        %1187 = vmatprep.mubr.bf16.mxu0 0
        %1188 = vmatmul.mubr.bf16.gmra.mrb[0].mxu0 %v984
        %v1189 = vpop.f32.mrb[0].mxu0
        %v1190 = vadd.f32 %v1009, %v1189
        %v1191 = vpop.f32.mrb[0].mxu0
        %v1192 = vpop.f32.mrb[0].mxu0
        %v1193 = vadd.f32 %v1009, %v1192
        %v1194 = vpop.f32.mrb[0].mxu0
        %1195 = vmatprep.mubr.bf16.mxu0 0
        %1196 = vmatmul.mubr.bf16.gmra.mrb[0].mxu0 %v985
        %v1197 = vpop.f32.mrb[0].mxu0
        %v1198 = vadd.f32 %v1009, %v1197
        %v1199 = vpop.f32.mrb[0].mxu0
        %v1200 = vpop.f32.mrb[0].mxu0
        %v1201 = vadd.f32 %v1009, %v1200
        %v1202 = vpop.f32.mrb[0].mxu0
        %1203 = vmatprep.mubr.bf16.mxu0 0
        %1204 = vmatmul.mubr.bf16.gmra.mrb[0].mxu0 %v986
        %v1205 = vpop.f32.mrb[0].mxu0
        %v1206 = vadd.f32 %v1009, %v1205
        %v1207 = vpop.f32.mrb[0].mxu0
        %v1208 = vpop.f32.mrb[0].mxu0
        %v1209 = vadd.f32 %v1009, %v1208
        %v1210 = vpop.f32.mrb[0].mxu0
        %1211 = vmatprep.mubr.bf16.mxu0 0
        %1212 = vmatmul.mubr.bf16.gmra.mrb[0].mxu0 %v987
        %v1213 = vpop.f32.mrb[0].mxu0
        %v1214 = vadd.f32 %v1009, %v1213
        %v1215 = vpop.f32.mrb[0].mxu0
        %v1216 = vpop.f32.mrb[0].mxu0
        %v1217 = vadd.f32 %v1009, %v1216
        %v1218 = vpop.f32.mrb[0].mxu0
        %1219 = vdwg.mxu0
        %vm1220 = vcmp.gt.f32.partialorder %v1094, 0.0
        %vm1221 = vcmp.gt.f32.partialorder %v1097, 0.0
        %vm1222 = vcmp.gt.f32.partialorder %v1102, 0.0
        %vm1223 = vcmp.gt.f32.partialorder %v1105, 0.0
        %vm1224 = vcmp.gt.f32.partialorder %v1110, 0.0
        %vm1225 = vcmp.gt.f32.partialorder %v1113, 0.0
        %vm1226 = vcmp.gt.f32.partialorder %v1118, 0.0
        %vm1227 = vcmp.gt.f32.partialorder %v1121, 0.0
        %vm1228 = vcmp.gt.f32.partialorder %v1126, 0.0
        %vm1229 = vcmp.gt.f32.partialorder %v1129, 0.0
        %vm1230 = vcmp.gt.f32.partialorder %v1134, 0.0
        %vm1231 = vcmp.gt.f32.partialorder %v1137, 0.0
        %vm1232 = vcmp.gt.f32.partialorder %v1142, 0.0
        %vm1233 = vcmp.gt.f32.partialorder %v1145, 0.0
        %vm1234 = vcmp.gt.f32.partialorder %v1150, 0.0
        %vm1235 = vcmp.gt.f32.partialorder %v1153, 0.0
        %vm1236 = vcmp.gt.f32.partialorder %v1158, 0.0
        %vm1237 = vcmp.gt.f32.partialorder %v1161, 0.0
        %vm1238 = vcmp.gt.f32.partialorder %v1166, 0.0
        %vm1239 = vcmp.gt.f32.partialorder %v1169, 0.0
        %vm1240 = vcmp.gt.f32.partialorder %v1174, 0.0
        %vm1241 = vcmp.gt.f32.partialorder %v1177, 0.0
        %vm1242 = vcmp.gt.f32.partialorder %v1182, 0.0
        %vm1243 = vcmp.gt.f32.partialorder %v1185, 0.0
        %vm1244 = vcmp.gt.f32.partialorder %v1190, 0.0
        %vm1245 = vcmp.gt.f32.partialorder %v1193, 0.0
        %vm1246 = vcmp.gt.f32.partialorder %v1198, 0.0
        %vm1247 = vcmp.gt.f32.partialorder %v1201, 0.0
        %vm1248 = vcmp.gt.f32.partialorder %v1206, 0.0
        %vm1249 = vcmp.gt.f32.partialorder %v1209, 0.0
        %vm1250 = vcmp.gt.f32.partialorder %v1214, 0.0
        %vm1251 = vcmp.gt.f32.partialorder %v1217, 0.0
        %v1252 = vmul.f32 %v1094, 0.2
        %v1253 = vmul.f32 %v1097, 0.2
        %v1254 = vmul.f32 %v1102, 0.2
        %v1255 = vmul.f32 %v1105, 0.2
        %v1256 = vmul.f32 %v1110, 0.2
        %v1257 = vmul.f32 %v1113, 0.2
        %v1258 = vmul.f32 %v1118, 0.2
        %v1259 = vmul.f32 %v1121, 0.2
        %v1260 = vmul.f32 %v1126, 0.2
        %v1261 = vmul.f32 %v1129, 0.2
        %v1262 = vmul.f32 %v1134, 0.2
        %v1263 = vmul.f32 %v1137, 0.2
        %v1264 = vmul.f32 %v1142, 0.2
        %v1265 = vmul.f32 %v1145, 0.2
        %v1266 = vmul.f32 %v1150, 0.2
        %v1267 = vmul.f32 %v1153, 0.2
        %v1268 = vmul.f32 %v1158, 0.2
        %v1269 = vmul.f32 %v1161, 0.2
        %v1270 = vmul.f32 %v1166, 0.2
        %v1271 = vmul.f32 %v1169, 0.2
        %v1272 = vmul.f32 %v1174, 0.2
        %v1273 = vmul.f32 %v1177, 0.2
        %v1274 = vmul.f32 %v1182, 0.2
        %v1275 = vmul.f32 %v1185, 0.2
        %v1276 = vmul.f32 %v1190, 0.2
        %v1277 = vmul.f32 %v1193, 0.2
        %v1278 = vmul.f32 %v1198, 0.2
        %v1279 = vmul.f32 %v1201, 0.2
        %v1280 = vmul.f32 %v1206, 0.2
        %v1281 = vmul.f32 %v1209, 0.2
        %v1282 = vmul.f32 %v1214, 0.2
        %v1283 = vmul.f32 %v1217, 0.2
        %v1284 = vsel %vm1220, %v1094, %v1252
        %v1285 = vsel %vm1221, %v1097, %v1253
        %v1286 = vsel %vm1222, %v1102, %v1254
        %v1287 = vsel %vm1223, %v1105, %v1255
        %v1288 = vsel %vm1224, %v1110, %v1256
        %v1289 = vsel %vm1225, %v1113, %v1257
        %v1290 = vsel %vm1226, %v1118, %v1258
        %v1291 = vsel %vm1227, %v1121, %v1259
        %v1292 = vsel %vm1228, %v1126, %v1260
        %v1293 = vsel %vm1229, %v1129, %v1261
        %v1294 = vsel %vm1230, %v1134, %v1262
        %v1295 = vsel %vm1231, %v1137, %v1263
        %v1296 = vsel %vm1232, %v1142, %v1264
        %v1297 = vsel %vm1233, %v1145, %v1265
        %v1298 = vsel %vm1234, %v1150, %v1266
        %v1299 = vsel %vm1235, %v1153, %v1267
        %v1300 = vsel %vm1236, %v1158, %v1268
        %v1301 = vsel %vm1237, %v1161, %v1269
        %v1302 = vsel %vm1238, %v1166, %v1270
        %v1303 = vsel %vm1239, %v1169, %v1271
        %v1304 = vsel %vm1240, %v1174, %v1272
        %v1305 = vsel %vm1241, %v1177, %v1273
        %v1306 = vsel %vm1242, %v1182, %v1274
        %v1307 = vsel %vm1243, %v1185, %v1275
        %v1308 = vsel %vm1244, %v1190, %v1276
        %v1309 = vsel %vm1245, %v1193, %v1277
        %v1310 = vsel %vm1246, %v1198, %v1278
        %v1311 = vsel %vm1247, %v1201, %v1279
        %v1312 = vsel %vm1248, %v1206, %v1280
        %v1313 = vsel %vm1249, %v1209, %v1281
        %v1314 = vsel %vm1250, %v1214, %v1282
        %v1315 = vsel %vm1251, %v1217, %v1283
        %v1316 = vpack.c.bf16 %v1285, %v1284
        %v1317 = vpack.c.bf16 %v1287, %v1286
        %v1318 = vpack.c.bf16 %v1289, %v1288
        %v1319 = vpack.c.bf16 %v1291, %v1290
        %v1320 = vpack.c.bf16 %v1293, %v1292
        %v1321 = vpack.c.bf16 %v1295, %v1294
        %v1322 = vpack.c.bf16 %v1297, %v1296
        %v1323 = vpack.c.bf16 %v1299, %v1298
        %v1324 = vpack.c.bf16 %v1301, %v1300
        %v1325 = vpack.c.bf16 %v1303, %v1302
        %v1326 = vpack.c.bf16 %v1305, %v1304
        %v1327 = vpack.c.bf16 %v1307, %v1306
        %v1328 = vpack.c.bf16 %v1309, %v1308
        %v1329 = vpack.c.bf16 %v1311, %v1310
        %v1330 = vpack.c.bf16 %v1313, %v1312
        %v1331 = vpack.c.bf16 %v1315, %v1314
        %v1332 = vld [vmem:[%s6] sm:$0xf]
        %v1333 = vld [vmem:[%s6 + $0x4] sm:$0xf]
        %v1334 = vld [vmem:[%s6 + $0x8] sm:$0xf]
        %v1335 = vld [vmem:[%s6 + $0xc] sm:$0xf]
        %v1336 = vld [vmem:[%s6 + $0x10] sm:$0xf]
        %v1337 = vld [vmem:[%s6 + $0x14] sm:$0xf]
        %v1338 = vld [vmem:[%s6 + $0x18] sm:$0xf]
        %v1339 = vld [vmem:[%s6 + $0x1c] sm:$0xf]
        %v1340 = vld [vmem:[%s6 + $0x20] sm:$0xf]
        %v1341 = vld [vmem:[%s6 + $0x24] sm:$0xf]
        %v1342 = vld [vmem:[%s6 + $0x28] sm:$0xf]
        %v1343 = vld [vmem:[%s6 + $0x2c] sm:$0xf]
        %v1344 = vld [vmem:[%s6 + $0x30] sm:$0xf]
        %v1345 = vld [vmem:[%s6 + $0x34] sm:$0xf]
        %v1346 = vld [vmem:[%s6 + $0x38] sm:$0xf]
        %v1347 = vld [vmem:[%s6 + $0x3c] sm:$0xf]
        %v1348 = vld [vmem:[%s7] sm:$0x1]
        %v1350 = vlaneseq
        %v1351 = vshrl.u32 %v1350, 7
        %v1352 = vsub.s32 0, %v1351
        %v1353 = vrot.slane %v1348, %v1352
        %v1371 = vunpack.c.l.b16 %v1332
        %v1372 = vunpack.c.l.b16 %v1333
        %v1373 = vunpack.c.l.b16 %v1334
        %v1374 = vunpack.c.l.b16 %v1335
        %v1375 = vunpack.c.l.b16 %v1336
        %v1376 = vunpack.c.l.b16 %v1337
        %v1377 = vunpack.c.l.b16 %v1338
        %v1378 = vunpack.c.l.b16 %v1339
        %v1379 = vunpack.c.l.b16 %v1340
        %v1380 = vunpack.c.l.b16 %v1341
        %v1381 = vunpack.c.l.b16 %v1342
        %v1382 = vunpack.c.l.b16 %v1343
        %v1383 = vunpack.c.l.b16 %v1344
        %v1384 = vunpack.c.l.b16 %v1345
        %v1385 = vunpack.c.l.b16 %v1346
        %v1386 = vunpack.c.l.b16 %v1347
        %v1387 = vpack.c.b16 %v1372, %v1371
        %v1388 = vpack.c.b16 %v1374, %v1373
        %v1389 = vpack.c.b16 %v1376, %v1375
        %v1390 = vpack.c.b16 %v1378, %v1377
        %v1391 = vpack.c.b16 %v1380, %v1379
        %v1392 = vpack.c.b16 %v1382, %v1381
        %v1393 = vpack.c.b16 %v1384, %v1383
        %v1394 = vpack.c.b16 %v1386, %v1385
        %1403 = vmatprep.subr.bf16.mxu0 0
        %1404 = vmatpush1.bf16.msra.mxu0 %v1387
        %1405 = vmatprep.subr.bf16.mxu0 0
        %1406 = vmatpush1.bf16.msra.mxu0 %v1388
        %1407 = vmatprep.subr.bf16.mxu0 0
        %1408 = vmatpush1.bf16.msra.mxu0 %v1389
        %1409 = vmatprep.subr.bf16.mxu0 0
        %1410 = vmatpush1.bf16.msra.mxu0 %v1390
        %1411 = vmatprep.subr.bf16.mxu0 0
        %1412 = vmatpush1.bf16.msra.mxu0 %v1391
        %1413 = vmatprep.subr.bf16.mxu0 0
        %1414 = vmatpush1.bf16.msra.mxu0 %v1392
        %1415 = vmatprep.subr.bf16.mxu0 0
        %1416 = vmatpush1.bf16.msra.mxu0 %v1393
        %1417 = vmatprep.subr.bf16.mxu0 0
        %1418 = vmatpush1.bf16.msra.mxu0 %v1394
        %1419 = vmatprep.subr.bf16.mxu0 0
        %1420 = vmatpush1.bf16.msra.mxu0 0
        %1421 = vmatprep.subr.bf16.mxu0 0
        %1422 = vmatpush1.bf16.msra.mxu0 0
        %1423 = vmatprep.subr.bf16.mxu0 0
        %1424 = vmatpush1.bf16.msra.mxu0 0
        %1425 = vmatprep.subr.bf16.mxu0 0
        %1426 = vmatpush1.bf16.msra.mxu0 0
        %1427 = vmatprep.subr.bf16.mxu0 0
        %1428 = vmatpush1.bf16.msra.mxu0 0
        %1429 = vmatprep.subr.bf16.mxu0 0
        %1430 = vmatpush1.bf16.msra.mxu0 0
        %1431 = vmatprep.subr.bf16.mxu0 0
        %1432 = vmatpush1.bf16.msra.mxu0 0
        %1433 = vmatprep.subr.bf16.mxu0 0
        %1434 = vmatpush1.bf16.msra.mxu0 0
        %1435 = vmatprep.mubr.bf16.mxu0 0
        %1436 = vmatmul.mubr.bf16.gmra.mrb[0].mxu0 %v1316
        %v1437 = vpop.f32.mrb[0].mxu0
        %v1438 = vadd.f32 %v1353, %v1437
        %v1439 = vpop.f32.mrb[0].mxu0
        %v1440 = vpop.f32.mrb[0].mxu0
        %v1441 = vadd.f32 %v1353, %v1440
        %v1442 = vpop.f32.mrb[0].mxu0
        %1443 = vmatprep.mubr.bf16.mxu0 0
        %1444 = vmatmul.mubr.bf16.gmra.mrb[0].mxu0 %v1317
        %v1445 = vpop.f32.mrb[0].mxu0
        %v1446 = vadd.f32 %v1353, %v1445
        %v1447 = vpop.f32.mrb[0].mxu0
        %v1448 = vpop.f32.mrb[0].mxu0
        %v1449 = vadd.f32 %v1353, %v1448
        %v1450 = vpop.f32.mrb[0].mxu0
        %1451 = vmatprep.mubr.bf16.mxu0 0
        %1452 = vmatmul.mubr.bf16.gmra.mrb[0].mxu0 %v1318
        %v1453 = vpop.f32.mrb[0].mxu0
        %v1454 = vadd.f32 %v1353, %v1453
        %v1455 = vpop.f32.mrb[0].mxu0
        %v1456 = vpop.f32.mrb[0].mxu0
        %v1457 = vadd.f32 %v1353, %v1456
        %v1458 = vpop.f32.mrb[0].mxu0
        %1459 = vmatprep.mubr.bf16.mxu0 0
        %1460 = vmatmul.mubr.bf16.gmra.mrb[0].mxu0 %v1319
        %v1461 = vpop.f32.mrb[0].mxu0
        %v1462 = vadd.f32 %v1353, %v1461
        %v1463 = vpop.f32.mrb[0].mxu0
        %v1464 = vpop.f32.mrb[0].mxu0
        %v1465 = vadd.f32 %v1353, %v1464
        %v1466 = vpop.f32.mrb[0].mxu0
        %1467 = vmatprep.mubr.bf16.mxu0 0
        %1468 = vmatmul.mubr.bf16.gmra.mrb[0].mxu0 %v1320
        %v1469 = vpop.f32.mrb[0].mxu0
        %v1470 = vadd.f32 %v1353, %v1469
        %v1471 = vpop.f32.mrb[0].mxu0
        %v1472 = vpop.f32.mrb[0].mxu0
        %v1473 = vadd.f32 %v1353, %v1472
        %v1474 = vpop.f32.mrb[0].mxu0
        %1475 = vmatprep.mubr.bf16.mxu0 0
        %1476 = vmatmul.mubr.bf16.gmra.mrb[0].mxu0 %v1321
        %v1477 = vpop.f32.mrb[0].mxu0
        %v1478 = vadd.f32 %v1353, %v1477
        %v1479 = vpop.f32.mrb[0].mxu0
        %v1480 = vpop.f32.mrb[0].mxu0
        %v1481 = vadd.f32 %v1353, %v1480
        %v1482 = vpop.f32.mrb[0].mxu0
        %1483 = vmatprep.mubr.bf16.mxu0 0
        %1484 = vmatmul.mubr.bf16.gmra.mrb[0].mxu0 %v1322
        %v1485 = vpop.f32.mrb[0].mxu0
        %v1486 = vadd.f32 %v1353, %v1485
        %v1487 = vpop.f32.mrb[0].mxu0
        %v1488 = vpop.f32.mrb[0].mxu0
        %v1489 = vadd.f32 %v1353, %v1488
        %v1490 = vpop.f32.mrb[0].mxu0
        %1491 = vmatprep.mubr.bf16.mxu0 0
        %1492 = vmatmul.mubr.bf16.gmra.mrb[0].mxu0 %v1323
        %v1493 = vpop.f32.mrb[0].mxu0
        %v1494 = vadd.f32 %v1353, %v1493
        %v1495 = vpop.f32.mrb[0].mxu0
        %v1496 = vpop.f32.mrb[0].mxu0
        %v1497 = vadd.f32 %v1353, %v1496
        %v1498 = vpop.f32.mrb[0].mxu0
        %1499 = vmatprep.mubr.bf16.mxu0 0
        %1500 = vmatmul.mubr.bf16.gmra.mrb[0].mxu0 %v1324
        %v1501 = vpop.f32.mrb[0].mxu0
        %v1502 = vadd.f32 %v1353, %v1501
        %v1503 = vpop.f32.mrb[0].mxu0
        %v1504 = vpop.f32.mrb[0].mxu0
        %v1505 = vadd.f32 %v1353, %v1504
        %v1506 = vpop.f32.mrb[0].mxu0
        %1507 = vmatprep.mubr.bf16.mxu0 0
        %1508 = vmatmul.mubr.bf16.gmra.mrb[0].mxu0 %v1325
        %v1509 = vpop.f32.mrb[0].mxu0
        %v1510 = vadd.f32 %v1353, %v1509
        %v1511 = vpop.f32.mrb[0].mxu0
        %v1512 = vpop.f32.mrb[0].mxu0
        %v1513 = vadd.f32 %v1353, %v1512
        %v1514 = vpop.f32.mrb[0].mxu0
        %1515 = vmatprep.mubr.bf16.mxu0 0
        %1516 = vmatmul.mubr.bf16.gmra.mrb[0].mxu0 %v1326
        %v1517 = vpop.f32.mrb[0].mxu0
        %v1518 = vadd.f32 %v1353, %v1517
        %v1519 = vpop.f32.mrb[0].mxu0
        %v1520 = vpop.f32.mrb[0].mxu0
        %v1521 = vadd.f32 %v1353, %v1520
        %v1522 = vpop.f32.mrb[0].mxu0
        %1523 = vmatprep.mubr.bf16.mxu0 0
        %1524 = vmatmul.mubr.bf16.gmra.mrb[0].mxu0 %v1327
        %v1525 = vpop.f32.mrb[0].mxu0
        %v1526 = vadd.f32 %v1353, %v1525
        %v1527 = vpop.f32.mrb[0].mxu0
        %v1528 = vpop.f32.mrb[0].mxu0
        %v1529 = vadd.f32 %v1353, %v1528
        %v1530 = vpop.f32.mrb[0].mxu0
        %1531 = vmatprep.mubr.bf16.mxu0 0
        %1532 = vmatmul.mubr.bf16.gmra.mrb[0].mxu0 %v1328
        %v1533 = vpop.f32.mrb[0].mxu0
        %v1534 = vadd.f32 %v1353, %v1533
        %v1535 = vpop.f32.mrb[0].mxu0
        %v1536 = vpop.f32.mrb[0].mxu0
        %v1537 = vadd.f32 %v1353, %v1536
        %v1538 = vpop.f32.mrb[0].mxu0
        %1539 = vmatprep.mubr.bf16.mxu0 0
        %1540 = vmatmul.mubr.bf16.gmra.mrb[0].mxu0 %v1329
        %v1541 = vpop.f32.mrb[0].mxu0
        %v1542 = vadd.f32 %v1353, %v1541
        %v1543 = vpop.f32.mrb[0].mxu0
        %v1544 = vpop.f32.mrb[0].mxu0
        %v1545 = vadd.f32 %v1353, %v1544
        %v1546 = vpop.f32.mrb[0].mxu0
        %1547 = vmatprep.mubr.bf16.mxu0 0
        %1548 = vmatmul.mubr.bf16.gmra.mrb[0].mxu0 %v1330
        %v1549 = vpop.f32.mrb[0].mxu0
        %v1550 = vadd.f32 %v1353, %v1549
        %v1551 = vpop.f32.mrb[0].mxu0
        %v1552 = vpop.f32.mrb[0].mxu0
        %v1553 = vadd.f32 %v1353, %v1552
        %v1554 = vpop.f32.mrb[0].mxu0
        %1555 = vmatprep.mubr.bf16.mxu0 0
        %1556 = vmatmul.mubr.bf16.gmra.mrb[0].mxu0 %v1331
        %v1557 = vpop.f32.mrb[0].mxu0
        %v1558 = vadd.f32 %v1353, %v1557
        %v1559 = vpop.f32.mrb[0].mxu0
        %v1560 = vpop.f32.mrb[0].mxu0
        %v1561 = vadd.f32 %v1353, %v1560
        %v1562 = vpop.f32.mrb[0].mxu0
        %1563 = vdwg.mxu0
        %1564 = vrot.lane.b32.xlu0 %v1438, 112
        %v1565 = vpop.permute.xlu0 %1564
        %1566 = vrot.lane.b32.xlu0 %v1441, 112
        %v1567 = vpop.permute.xlu0 %1566
        %1568 = vrot.lane.b32.xlu0 %v1446, 112
        %v1569 = vpop.permute.xlu0 %1568
        %1570 = vrot.lane.b32.xlu0 %v1449, 112
        %v1571 = vpop.permute.xlu0 %1570
        %1572 = vrot.lane.b32.xlu0 %v1454, 112
        %v1573 = vpop.permute.xlu0 %1572
        %1574 = vrot.lane.b32.xlu0 %v1457, 112
        %v1575 = vpop.permute.xlu0 %1574
        %1576 = vrot.lane.b32.xlu0 %v1462, 112
        %v1577 = vpop.permute.xlu0 %1576
        %1578 = vrot.lane.b32.xlu0 %v1465, 112
        %v1579 = vpop.permute.xlu0 %1578
        %1580 = vrot.lane.b32.xlu0 %v1470, 112
        %v1581 = vpop.permute.xlu0 %1580
        %1582 = vrot.lane.b32.xlu0 %v1473, 112
        %v1583 = vpop.permute.xlu0 %1582
        %1584 = vrot.lane.b32.xlu0 %v1478, 112
        %v1585 = vpop.permute.xlu0 %1584
        %1586 = vrot.lane.b32.xlu0 %v1481, 112
        %v1587 = vpop.permute.xlu0 %1586
        %1588 = vrot.lane.b32.xlu0 %v1486, 112
        %v1589 = vpop.permute.xlu0 %1588
        %1590 = vrot.lane.b32.xlu0 %v1489, 112
        %v1591 = vpop.permute.xlu0 %1590
        %1592 = vrot.lane.b32.xlu0 %v1494, 112
        %v1593 = vpop.permute.xlu0 %1592
        %1594 = vrot.lane.b32.xlu0 %v1497, 112
        %v1595 = vpop.permute.xlu0 %1594
        %1596 = vrot.lane.b32.xlu0 %v1502, 112
        %v1597 = vpop.permute.xlu0 %1596
        %1598 = vrot.lane.b32.xlu0 %v1505, 112
        %v1599 = vpop.permute.xlu0 %1598
        %1600 = vrot.lane.b32.xlu0 %v1510, 112
        %v1601 = vpop.permute.xlu0 %1600
        %1602 = vrot.lane.b32.xlu0 %v1513, 112
        %v1603 = vpop.permute.xlu0 %1602
        %1604 = vrot.lane.b32.xlu0 %v1518, 112
        %v1605 = vpop.permute.xlu0 %1604
        %1606 = vrot.lane.b32.xlu0 %v1521, 112
        %v1607 = vpop.permute.xlu0 %1606
        %1608 = vrot.lane.b32.xlu0 %v1526, 112
        %v1609 = vpop.permute.xlu0 %1608
        %1610 = vrot.lane.b32.xlu0 %v1529, 112
        %v1611 = vpop.permute.xlu0 %1610
        %1612 = vrot.lane.b32.xlu0 %v1534, 112
        %v1613 = vpop.permute.xlu0 %1612
        %1614 = vrot.lane.b32.xlu0 %v1537, 112
        %v1615 = vpop.permute.xlu0 %1614
        %1616 = vrot.lane.b32.xlu0 %v1542, 112
        %v1617 = vpop.permute.xlu0 %1616
        %1618 = vrot.lane.b32.xlu0 %v1545, 112
        %v1619 = vpop.permute.xlu0 %1618
        %1620 = vrot.lane.b32.xlu0 %v1550, 112
        %v1621 = vpop.permute.xlu0 %1620
        %1622 = vrot.lane.b32.xlu0 %v1553, 112
        %v1623 = vpop.permute.xlu0 %1622
        %1624 = vrot.lane.b32.xlu0 %v1558, 112
        %v1625 = vpop.permute.xlu0 %1624
        %1626 = vrot.lane.b32.xlu0 %v1561, 112
        %v1627 = vpop.permute.xlu0 %1626
        %v1628 = vld [vmem:[%s526] sm:$0xff]
        %v1629 = vld [vmem:[%s526 + $0x8] sm:$0xff]
        %v1630 = vld [vmem:[%s526 + $0x10] sm:$0xff]
        %v1631 = vld [vmem:[%s526 + $0x18] sm:$0xff]
        %v1632 = vld [vmem:[%s526 + $0x20] sm:$0xff]
        %v1633 = vld [vmem:[%s526 + $0x28] sm:$0xff]
        %v1634 = vld [vmem:[%s526 + $0x30] sm:$0xff]
        %v1635 = vld [vmem:[%s526 + $0x38] sm:$0xff]
        %v1636 = vld [vmem:[%s526 + $0x40] sm:$0xff]
        %v1637 = vld [vmem:[%s526 + $0x48] sm:$0xff]
        %v1638 = vld [vmem:[%s526 + $0x50] sm:$0xff]
        %v1639 = vld [vmem:[%s526 + $0x58] sm:$0xff]
        %v1640 = vld [vmem:[%s526 + $0x60] sm:$0xff]
        %v1641 = vld [vmem:[%s526 + $0x68] sm:$0xff]
        %v1642 = vld [vmem:[%s526 + $0x70] sm:$0xff]
        %v1643 = vld [vmem:[%s526 + $0x78] sm:$0xff]
        %v1644 = vld [vmem:[%s526 + $0x80] sm:$0xff]
        %v1645 = vld [vmem:[%s526 + $0x88] sm:$0xff]
        %v1646 = vld [vmem:[%s526 + $0x90] sm:$0xff]
        %v1647 = vld [vmem:[%s526 + $0x98] sm:$0xff]
        %v1648 = vld [vmem:[%s526 + $0xa0] sm:$0xff]
        %v1649 = vld [vmem:[%s526 + $0xa8] sm:$0xff]
        %v1650 = vld [vmem:[%s526 + $0xb0] sm:$0xff]
        %v1651 = vld [vmem:[%s526 + $0xb8] sm:$0xff]
        %v1652 = vld [vmem:[%s526 + $0xc0] sm:$0xff]
        %v1653 = vld [vmem:[%s526 + $0xc8] sm:$0xff]
        %v1654 = vld [vmem:[%s526 + $0xd0] sm:$0xff]
        %v1655 = vld [vmem:[%s526 + $0xd8] sm:$0xff]
        %v1656 = vld [vmem:[%s526 + $0xe0] sm:$0xff]
        %v1657 = vld [vmem:[%s526 + $0xe8] sm:$0xff]
        %v1658 = vld [vmem:[%s526 + $0xf0] sm:$0xff]
        %v1659 = vld [vmem:[%s526 + $0xf8] sm:$0xff]
        %v1660 = vmul.f32 %v1565, 0.5
        %v1661 = vmul.f32 %v1567, 0.5
        %v1662 = vmul.f32 %v1569, 0.5
        %v1663 = vmul.f32 %v1571, 0.5
        %v1664 = vmul.f32 %v1573, 0.5
        %v1665 = vmul.f32 %v1575, 0.5
        %v1666 = vmul.f32 %v1577, 0.5
        %v1667 = vmul.f32 %v1579, 0.5
        %v1668 = vmul.f32 %v1581, 0.5
        %v1669 = vmul.f32 %v1583, 0.5
        %v1670 = vmul.f32 %v1585, 0.5
        %v1671 = vmul.f32 %v1587, 0.5
        %v1672 = vmul.f32 %v1589, 0.5
        %v1673 = vmul.f32 %v1591, 0.5
        %v1674 = vmul.f32 %v1593, 0.5
        %v1675 = vmul.f32 %v1595, 0.5
        %v1676 = vmul.f32 %v1597, 0.5
        %v1677 = vmul.f32 %v1599, 0.5
        %v1678 = vmul.f32 %v1601, 0.5
        %v1679 = vmul.f32 %v1603, 0.5
        %v1680 = vmul.f32 %v1605, 0.5
        %v1681 = vmul.f32 %v1607, 0.5
        %v1682 = vmul.f32 %v1609, 0.5
        %v1683 = vmul.f32 %v1611, 0.5
        %v1684 = vmul.f32 %v1613, 0.5
        %v1685 = vmul.f32 %v1615, 0.5
        %v1686 = vmul.f32 %v1617, 0.5
        %v1687 = vmul.f32 %v1619, 0.5
        %v1688 = vmul.f32 %v1621, 0.5
        %v1689 = vmul.f32 %v1623, 0.5
        %v1690 = vmul.f32 %v1625, 0.5
        %v1691 = vmul.f32 %v1627, 0.5
        %v1692 = vmul.f32 %v1660, 1.442695
        %v1693 = vpow.pop %v1692
        %v1694 = vmul.f32 %v1661, 1.442695
        %v1695 = vpow.pop %v1694
        %v1696 = vmul.f32 %v1662, 1.442695
        %v1697 = vpow.pop %v1696
        %v1698 = vmul.f32 %v1663, 1.442695
        %v1699 = vpow.pop %v1698
        %v1700 = vmul.f32 %v1664, 1.442695
        %v1701 = vpow.pop %v1700
        %v1702 = vmul.f32 %v1665, 1.442695
        %v1703 = vpow.pop %v1702
        %v1704 = vmul.f32 %v1666, 1.442695
        %v1705 = vpow.pop %v1704
        %v1706 = vmul.f32 %v1667, 1.442695
        %v1707 = vpow.pop %v1706
        %v1708 = vmul.f32 %v1668, 1.442695
        %v1709 = vpow.pop %v1708
        %v1710 = vmul.f32 %v1669, 1.442695
        %v1711 = vpow.pop %v1710
        %v1712 = vmul.f32 %v1670, 1.442695
        %v1713 = vpow.pop %v1712
        %v1714 = vmul.f32 %v1671, 1.442695
        %v1715 = vpow.pop %v1714
        %v1716 = vmul.f32 %v1672, 1.442695
        %v1717 = vpow.pop %v1716
        %v1718 = vmul.f32 %v1673, 1.442695
        %v1719 = vpow.pop %v1718
        %v1720 = vmul.f32 %v1674, 1.442695
        %v1721 = vpow.pop %v1720
        %v1722 = vmul.f32 %v1675, 1.442695
        %v1723 = vpow.pop %v1722
        %v1724 = vmul.f32 %v1676, 1.442695
        %v1725 = vpow.pop %v1724
        %v1726 = vmul.f32 %v1677, 1.442695
        %v1727 = vpow.pop %v1726
        %v1728 = vmul.f32 %v1678, 1.442695
        %v1729 = vpow.pop %v1728
        %v1730 = vmul.f32 %v1679, 1.442695
        %v1731 = vpow.pop %v1730
        %v1732 = vmul.f32 %v1680, 1.442695
        %v1733 = vpow.pop %v1732
        %v1734 = vmul.f32 %v1681, 1.442695
        %v1735 = vpow.pop %v1734
        %v1736 = vmul.f32 %v1682, 1.442695
        %v1737 = vpow.pop %v1736
        %v1738 = vmul.f32 %v1683, 1.442695
        %v1739 = vpow.pop %v1738
        %v1740 = vmul.f32 %v1684, 1.442695
        %v1741 = vpow.pop %v1740
        %v1742 = vmul.f32 %v1685, 1.442695
        %v1743 = vpow.pop %v1742
        %v1744 = vmul.f32 %v1686, 1.442695
        %v1745 = vpow.pop %v1744
        %v1746 = vmul.f32 %v1687, 1.442695
        %v1747 = vpow.pop %v1746
        %v1748 = vmul.f32 %v1688, 1.442695
        %v1749 = vpow.pop %v1748
        %v1750 = vmul.f32 %v1689, 1.442695
        %v1751 = vpow.pop %v1750
        %v1752 = vmul.f32 %v1690, 1.442695
        %v1753 = vpow.pop %v1752
        %v1754 = vmul.f32 %v1691, 1.442695
        %v1755 = vpow.pop %v1754
        %v1756 = vmul.f32 %v1628, %v1693
        %v1757 = vmul.f32 %v1629, %v1695
        %v1758 = vmul.f32 %v1630, %v1697
        %v1759 = vmul.f32 %v1631, %v1699
        %v1760 = vmul.f32 %v1632, %v1701
        %v1761 = vmul.f32 %v1633, %v1703
        %v1762 = vmul.f32 %v1634, %v1705
        %v1763 = vmul.f32 %v1635, %v1707
        %v1764 = vmul.f32 %v1636, %v1709
        %v1765 = vmul.f32 %v1637, %v1711
        %v1766 = vmul.f32 %v1638, %v1713
        %v1767 = vmul.f32 %v1639, %v1715
        %v1768 = vmul.f32 %v1640, %v1717
        %v1769 = vmul.f32 %v1641, %v1719
        %v1770 = vmul.f32 %v1642, %v1721
        %v1771 = vmul.f32 %v1643, %v1723
        %v1772 = vmul.f32 %v1644, %v1725
        %v1773 = vmul.f32 %v1645, %v1727
        %v1774 = vmul.f32 %v1646, %v1729
        %v1775 = vmul.f32 %v1647, %v1731
        %v1776 = vmul.f32 %v1648, %v1733
        %v1777 = vmul.f32 %v1649, %v1735
        %v1778 = vmul.f32 %v1650, %v1737
        %v1779 = vmul.f32 %v1651, %v1739
        %v1780 = vmul.f32 %v1652, %v1741
        %v1781 = vmul.f32 %v1653, %v1743
        %v1782 = vmul.f32 %v1654, %v1745
        %v1783 = vmul.f32 %v1655, %v1747
        %v1784 = vmul.f32 %v1656, %v1749
        %v1785 = vmul.f32 %v1657, %v1751
        %v1786 = vmul.f32 %v1658, %v1753
        %v1787 = vmul.f32 %v1659, %v1755
        %v1788 = vadd.f32 %v1438, %v1756
        %v1789 = vadd.f32 %v1441, %v1757
        %v1790 = vadd.f32 %v1446, %v1758
        %v1791 = vadd.f32 %v1449, %v1759
        %v1792 = vadd.f32 %v1454, %v1760
        %v1793 = vadd.f32 %v1457, %v1761
        %v1794 = vadd.f32 %v1462, %v1762
        %v1795 = vadd.f32 %v1465, %v1763
        %v1796 = vadd.f32 %v1470, %v1764
        %v1797 = vadd.f32 %v1473, %v1765
        %v1798 = vadd.f32 %v1478, %v1766
        %v1799 = vadd.f32 %v1481, %v1767
        %v1800 = vadd.f32 %v1486, %v1768
        %v1801 = vadd.f32 %v1489, %v1769
        %v1802 = vadd.f32 %v1494, %v1770
        %v1803 = vadd.f32 %v1497, %v1771
        %v1804 = vadd.f32 %v1502, %v1772
        %v1805 = vadd.f32 %v1505, %v1773
        %v1806 = vadd.f32 %v1510, %v1774
        %v1807 = vadd.f32 %v1513, %v1775
        %v1808 = vadd.f32 %v1518, %v1776
        %v1809 = vadd.f32 %v1521, %v1777
        %v1810 = vadd.f32 %v1526, %v1778
        %v1811 = vadd.f32 %v1529, %v1779
        %v1812 = vadd.f32 %v1534, %v1780
        %v1813 = vadd.f32 %v1537, %v1781
        %v1814 = vadd.f32 %v1542, %v1782
        %v1815 = vadd.f32 %v1545, %v1783
        %v1816 = vadd.f32 %v1550, %v1784
        %v1817 = vadd.f32 %v1553, %v1785
        %v1818 = vadd.f32 %v1558, %v1786
        %v1819 = vadd.f32 %v1561, %v1787
        %v1820 = vpack.c.bf16 %v1789, %v1788
        %v1821 = vpack.c.bf16 %v1791, %v1790
        %v1822 = vpack.c.bf16 %v1793, %v1792
        %v1823 = vpack.c.bf16 %v1795, %v1794
        %v1824 = vpack.c.bf16 %v1797, %v1796
        %v1825 = vpack.c.bf16 %v1799, %v1798
        %v1826 = vpack.c.bf16 %v1801, %v1800
        %v1827 = vpack.c.bf16 %v1803, %v1802
        %v1828 = vpack.c.bf16 %v1805, %v1804
        %v1829 = vpack.c.bf16 %v1807, %v1806
        %v1830 = vpack.c.bf16 %v1809, %v1808
        %v1831 = vpack.c.bf16 %v1811, %v1810
        %v1832 = vpack.c.bf16 %v1813, %v1812
        %v1833 = vpack.c.bf16 %v1815, %v1814
        %v1834 = vpack.c.bf16 %v1817, %v1816
        %v1835 = vpack.c.bf16 %v1819, %v1818
        %v1836 = vld [vmem:[%s8] sm:$0xf]
        %v1837 = vld [vmem:[%s8 + $0x4] sm:$0xf]
        %v1838 = vld [vmem:[%s9] sm:$0x1]
        %v1840 = vlaneseq
        %v1841 = vshrl.u32 %v1840, 7
        %v1842 = vsub.s32 0, %v1841
        %v1843 = vrot.slane %v1838, %v1842
        %v1847 = vunpack.c.l.b16 %v1836
        %v1848 = vunpack.c.l.b16 %v1837
        %v1849 = vpack.c.b16 %v1848, %v1847
        %vm1851 = vcmask 130048
        %v1853 = vsel %vm1851, %v1820, 0
        %v1856 = vsel %vm1851, %v1821, 0
        %v1859 = vsel %vm1851, %v1822, 0
        %v1862 = vsel %vm1851, %v1823, 0
        %v1865 = vsel %vm1851, %v1824, 0
        %v1868 = vsel %vm1851, %v1825, 0
        %v1871 = vsel %vm1851, %v1826, 0
        %v1874 = vsel %vm1851, %v1827, 0
        %v1877 = vsel %vm1851, %v1828, 0
        %v1880 = vsel %vm1851, %v1829, 0
        %v1883 = vsel %vm1851, %v1830, 0
        %v1886 = vsel %vm1851, %v1831, 0
        %v1889 = vsel %vm1851, %v1832, 0
        %v1892 = vsel %vm1851, %v1833, 0
        %v1895 = vsel %vm1851, %v1834, 0
        %v1898 = vsel %vm1851, %v1835, 0
        %1900 = vmatprep.subr.bf16.mxu0 0
        %1901 = vmatpush1.bf16.msra.mxu0 %v1849
        %1902 = vmatprep.subr.bf16.mxu0 0
        %1903 = vmatpush1.bf16.msra.mxu0 0
        %1904 = vmatprep.subr.bf16.mxu0 0
        %1905 = vmatpush1.bf16.msra.mxu0 0
        %1906 = vmatprep.subr.bf16.mxu0 0
        %1907 = vmatpush1.bf16.msra.mxu0 0
        %1908 = vmatprep.subr.bf16.mxu0 0
        %1909 = vmatpush1.bf16.msra.mxu0 0
        %1910 = vmatprep.subr.bf16.mxu0 0
        %1911 = vmatpush1.bf16.msra.mxu0 0
        %1912 = vmatprep.subr.bf16.mxu0 0
        %1913 = vmatpush1.bf16.msra.mxu0 0
        %1914 = vmatprep.subr.bf16.mxu0 0
        %1915 = vmatpush1.bf16.msra.mxu0 0
        %1916 = vmatprep.subr.bf16.mxu0 0
        %1917 = vmatpush1.bf16.msra.mxu0 0
        %1918 = vmatprep.subr.bf16.mxu0 0
        %1919 = vmatpush1.bf16.msra.mxu0 0
        %1920 = vmatprep.subr.bf16.mxu0 0
        %1921 = vmatpush1.bf16.msra.mxu0 0
        %1922 = vmatprep.subr.bf16.mxu0 0
        %1923 = vmatpush1.bf16.msra.mxu0 0
        %1924 = vmatprep.subr.bf16.mxu0 0
        %1925 = vmatpush1.bf16.msra.mxu0 0
        %1926 = vmatprep.subr.bf16.mxu0 0
        %1927 = vmatpush1.bf16.msra.mxu0 0
        %1928 = vmatprep.subr.bf16.mxu0 0
        %1929 = vmatpush1.bf16.msra.mxu0 0
        %1930 = vmatprep.subr.bf16.mxu0 0
        %1931 = vmatpush1.bf16.msra.mxu0 0
        %1932 = vmatprep.mubr.bf16.mxu0 0
        %1933 = vmatmul.mubr.bf16.gmra.mrb[0].mxu0 %v1853
        %v1934 = vpop.f32.mrb[0].mxu0
        %v1935 = vadd.f32 %v1843, %v1934
        %v1936 = vpop.f32.mrb[0].mxu0
        %v1937 = vpop.f32.mrb[0].mxu0
        %v1938 = vadd.f32 %v1843, %v1937
        %v1939 = vpop.f32.mrb[0].mxu0
        %1940 = vmatprep.mubr.bf16.mxu0 0
        %1941 = vmatmul.mubr.bf16.gmra.mrb[0].mxu0 %v1856
        %v1942 = vpop.f32.mrb[0].mxu0
        %v1943 = vadd.f32 %v1843, %v1942
        %v1944 = vpop.f32.mrb[0].mxu0
        %v1945 = vpop.f32.mrb[0].mxu0
        %v1946 = vadd.f32 %v1843, %v1945
        %v1947 = vpop.f32.mrb[0].mxu0
        %1948 = vmatprep.mubr.bf16.mxu0 0
        %1949 = vmatmul.mubr.bf16.gmra.mrb[0].mxu0 %v1859
        %v1950 = vpop.f32.mrb[0].mxu0
        %v1951 = vadd.f32 %v1843, %v1950
        %v1952 = vpop.f32.mrb[0].mxu0
        %v1953 = vpop.f32.mrb[0].mxu0
        %v1954 = vadd.f32 %v1843, %v1953
        %v1955 = vpop.f32.mrb[0].mxu0
        %1956 = vmatprep.mubr.bf16.mxu0 0
        %1957 = vmatmul.mubr.bf16.gmra.mrb[0].mxu0 %v1862
        %v1958 = vpop.f32.mrb[0].mxu0
        %v1959 = vadd.f32 %v1843, %v1958
        %v1960 = vpop.f32.mrb[0].mxu0
        %v1961 = vpop.f32.mrb[0].mxu0
        %v1962 = vadd.f32 %v1843, %v1961
        %v1963 = vpop.f32.mrb[0].mxu0
        %1964 = vmatprep.mubr.bf16.mxu0 0
        %1965 = vmatmul.mubr.bf16.gmra.mrb[0].mxu0 %v1865
        %v1966 = vpop.f32.mrb[0].mxu0
        %v1967 = vadd.f32 %v1843, %v1966
        %v1968 = vpop.f32.mrb[0].mxu0
        %v1969 = vpop.f32.mrb[0].mxu0
        %v1970 = vadd.f32 %v1843, %v1969
        %v1971 = vpop.f32.mrb[0].mxu0
        %1972 = vmatprep.mubr.bf16.mxu0 0
        %1973 = vmatmul.mubr.bf16.gmra.mrb[0].mxu0 %v1868
        %v1974 = vpop.f32.mrb[0].mxu0
        %v1975 = vadd.f32 %v1843, %v1974
        %v1976 = vpop.f32.mrb[0].mxu0
        %v1977 = vpop.f32.mrb[0].mxu0
        %v1978 = vadd.f32 %v1843, %v1977
        %v1979 = vpop.f32.mrb[0].mxu0
        %1980 = vmatprep.mubr.bf16.mxu0 0
        %1981 = vmatmul.mubr.bf16.gmra.mrb[0].mxu0 %v1871
        %v1982 = vpop.f32.mrb[0].mxu0
        %v1983 = vadd.f32 %v1843, %v1982
        %v1984 = vpop.f32.mrb[0].mxu0
        %v1985 = vpop.f32.mrb[0].mxu0
        %v1986 = vadd.f32 %v1843, %v1985
        %v1987 = vpop.f32.mrb[0].mxu0
        %1988 = vmatprep.mubr.bf16.mxu0 0
        %1989 = vmatmul.mubr.bf16.gmra.mrb[0].mxu0 %v1874
        %v1990 = vpop.f32.mrb[0].mxu0
        %v1991 = vadd.f32 %v1843, %v1990
        %v1992 = vpop.f32.mrb[0].mxu0
        %v1993 = vpop.f32.mrb[0].mxu0
        %v1994 = vadd.f32 %v1843, %v1993
        %v1995 = vpop.f32.mrb[0].mxu0
        %1996 = vmatprep.mubr.bf16.mxu0 0
        %1997 = vmatmul.mubr.bf16.gmra.mrb[0].mxu0 %v1877
        %v1998 = vpop.f32.mrb[0].mxu0
        %v1999 = vadd.f32 %v1843, %v1998
        %v2000 = vpop.f32.mrb[0].mxu0
        %v2001 = vpop.f32.mrb[0].mxu0
        %v2002 = vadd.f32 %v1843, %v2001
        %v2003 = vpop.f32.mrb[0].mxu0
        %2004 = vmatprep.mubr.bf16.mxu0 0
        %2005 = vmatmul.mubr.bf16.gmra.mrb[0].mxu0 %v1880
        %v2006 = vpop.f32.mrb[0].mxu0
        %v2007 = vadd.f32 %v1843, %v2006
        %v2008 = vpop.f32.mrb[0].mxu0
        %v2009 = vpop.f32.mrb[0].mxu0
        %v2010 = vadd.f32 %v1843, %v2009
        %v2011 = vpop.f32.mrb[0].mxu0
        %2012 = vmatprep.mubr.bf16.mxu0 0
        %2013 = vmatmul.mubr.bf16.gmra.mrb[0].mxu0 %v1883
        %v2014 = vpop.f32.mrb[0].mxu0
        %v2015 = vadd.f32 %v1843, %v2014
        %v2016 = vpop.f32.mrb[0].mxu0
        %v2017 = vpop.f32.mrb[0].mxu0
        %v2018 = vadd.f32 %v1843, %v2017
        %v2019 = vpop.f32.mrb[0].mxu0
        %2020 = vmatprep.mubr.bf16.mxu0 0
        %2021 = vmatmul.mubr.bf16.gmra.mrb[0].mxu0 %v1886
        %v2022 = vpop.f32.mrb[0].mxu0
        %v2023 = vadd.f32 %v1843, %v2022
        %v2024 = vpop.f32.mrb[0].mxu0
        %v2025 = vpop.f32.mrb[0].mxu0
        %v2026 = vadd.f32 %v1843, %v2025
        %v2027 = vpop.f32.mrb[0].mxu0
        %2028 = vmatprep.mubr.bf16.mxu0 0
        %2029 = vmatmul.mubr.bf16.gmra.mrb[0].mxu0 %v1889
        %v2030 = vpop.f32.mrb[0].mxu0
        %v2031 = vadd.f32 %v1843, %v2030
        %v2032 = vpop.f32.mrb[0].mxu0
        %v2033 = vpop.f32.mrb[0].mxu0
        %v2034 = vadd.f32 %v1843, %v2033
        %v2035 = vpop.f32.mrb[0].mxu0
        %2036 = vmatprep.mubr.bf16.mxu0 0
        %2037 = vmatmul.mubr.bf16.gmra.mrb[0].mxu0 %v1892
        %v2038 = vpop.f32.mrb[0].mxu0
        %v2039 = vadd.f32 %v1843, %v2038
        %v2040 = vpop.f32.mrb[0].mxu0
        %v2041 = vpop.f32.mrb[0].mxu0
        %v2042 = vadd.f32 %v1843, %v2041
        %v2043 = vpop.f32.mrb[0].mxu0
        %2044 = vmatprep.mubr.bf16.mxu0 0
        %2045 = vmatmul.mubr.bf16.gmra.mrb[0].mxu0 %v1895
        %v2046 = vpop.f32.mrb[0].mxu0
        %v2047 = vadd.f32 %v1843, %v2046
        %v2048 = vpop.f32.mrb[0].mxu0
        %v2049 = vpop.f32.mrb[0].mxu0
        %v2050 = vadd.f32 %v1843, %v2049
        %v2051 = vpop.f32.mrb[0].mxu0
        %2052 = vmatprep.mubr.bf16.mxu0 0
        %2053 = vmatmul.mubr.bf16.gmra.mrb[0].mxu0 %v1898
        %v2054 = vpop.f32.mrb[0].mxu0
        %v2055 = vadd.f32 %v1843, %v2054
        %v2056 = vpop.f32.mrb[0].mxu0
        %v2057 = vpop.f32.mrb[0].mxu0
        %v2058 = vadd.f32 %v1843, %v2057
        %v2059 = vpop.f32.mrb[0].mxu0
        %2060 = vdwg.mxu0
        %vm2061 = vcmp.gt.f32.partialorder %v1935, 0.0
        %vm2062 = vcmp.gt.f32.partialorder %v1938, 0.0
        %vm2063 = vcmp.gt.f32.partialorder %v1943, 0.0
        %vm2064 = vcmp.gt.f32.partialorder %v1946, 0.0
        %vm2065 = vcmp.gt.f32.partialorder %v1951, 0.0
        %vm2066 = vcmp.gt.f32.partialorder %v1954, 0.0
        %vm2067 = vcmp.gt.f32.partialorder %v1959, 0.0
        %vm2068 = vcmp.gt.f32.partialorder %v1962, 0.0
        %vm2069 = vcmp.gt.f32.partialorder %v1967, 0.0
        %vm2070 = vcmp.gt.f32.partialorder %v1970, 0.0
        %vm2071 = vcmp.gt.f32.partialorder %v1975, 0.0
        %vm2072 = vcmp.gt.f32.partialorder %v1978, 0.0
        %vm2073 = vcmp.gt.f32.partialorder %v1983, 0.0
        %vm2074 = vcmp.gt.f32.partialorder %v1986, 0.0
        %vm2075 = vcmp.gt.f32.partialorder %v1991, 0.0
        %vm2076 = vcmp.gt.f32.partialorder %v1994, 0.0
        %vm2077 = vcmp.gt.f32.partialorder %v1999, 0.0
        %vm2078 = vcmp.gt.f32.partialorder %v2002, 0.0
        %vm2079 = vcmp.gt.f32.partialorder %v2007, 0.0
        %vm2080 = vcmp.gt.f32.partialorder %v2010, 0.0
        %vm2081 = vcmp.gt.f32.partialorder %v2015, 0.0
        %vm2082 = vcmp.gt.f32.partialorder %v2018, 0.0
        %vm2083 = vcmp.gt.f32.partialorder %v2023, 0.0
        %vm2084 = vcmp.gt.f32.partialorder %v2026, 0.0
        %vm2085 = vcmp.gt.f32.partialorder %v2031, 0.0
        %vm2086 = vcmp.gt.f32.partialorder %v2034, 0.0
        %vm2087 = vcmp.gt.f32.partialorder %v2039, 0.0
        %vm2088 = vcmp.gt.f32.partialorder %v2042, 0.0
        %vm2089 = vcmp.gt.f32.partialorder %v2047, 0.0
        %vm2090 = vcmp.gt.f32.partialorder %v2050, 0.0
        %vm2091 = vcmp.gt.f32.partialorder %v2055, 0.0
        %vm2092 = vcmp.gt.f32.partialorder %v2058, 0.0
        %v2093 = vmul.f32 %v1935, 0.2
        %v2094 = vmul.f32 %v1938, 0.2
        %v2095 = vmul.f32 %v1943, 0.2
        %v2096 = vmul.f32 %v1946, 0.2
        %v2097 = vmul.f32 %v1951, 0.2
        %v2098 = vmul.f32 %v1954, 0.2
        %v2099 = vmul.f32 %v1959, 0.2
        %v2100 = vmul.f32 %v1962, 0.2
        %v2101 = vmul.f32 %v1967, 0.2
        %v2102 = vmul.f32 %v1970, 0.2
        %v2103 = vmul.f32 %v1975, 0.2
        %v2104 = vmul.f32 %v1978, 0.2
        %v2105 = vmul.f32 %v1983, 0.2
        %v2106 = vmul.f32 %v1986, 0.2
        %v2107 = vmul.f32 %v1991, 0.2
        %v2108 = vmul.f32 %v1994, 0.2
        %v2109 = vmul.f32 %v1999, 0.2
        %v2110 = vmul.f32 %v2002, 0.2
        %v2111 = vmul.f32 %v2007, 0.2
        %v2112 = vmul.f32 %v2010, 0.2
        %v2113 = vmul.f32 %v2015, 0.2
        %v2114 = vmul.f32 %v2018, 0.2
        %v2115 = vmul.f32 %v2023, 0.2
        %v2116 = vmul.f32 %v2026, 0.2
        %v2117 = vmul.f32 %v2031, 0.2
        %v2118 = vmul.f32 %v2034, 0.2
        %v2119 = vmul.f32 %v2039, 0.2
        %v2120 = vmul.f32 %v2042, 0.2
        %v2121 = vmul.f32 %v2047, 0.2
        %v2122 = vmul.f32 %v2050, 0.2
        %v2123 = vmul.f32 %v2055, 0.2
        %v2124 = vmul.f32 %v2058, 0.2
        %v2125 = vsel %vm2061, %v1935, %v2093
        %v2126 = vsel %vm2062, %v1938, %v2094
        %v2127 = vsel %vm2063, %v1943, %v2095
        %v2128 = vsel %vm2064, %v1946, %v2096
        %v2129 = vsel %vm2065, %v1951, %v2097
        %v2130 = vsel %vm2066, %v1954, %v2098
        %v2131 = vsel %vm2067, %v1959, %v2099
        %v2132 = vsel %vm2068, %v1962, %v2100
        %v2133 = vsel %vm2069, %v1967, %v2101
        %v2134 = vsel %vm2070, %v1970, %v2102
        %v2135 = vsel %vm2071, %v1975, %v2103
        %v2136 = vsel %vm2072, %v1978, %v2104
        %v2137 = vsel %vm2073, %v1983, %v2105
        %v2138 = vsel %vm2074, %v1986, %v2106
        %v2139 = vsel %vm2075, %v1991, %v2107
        %v2140 = vsel %vm2076, %v1994, %v2108
        %v2141 = vsel %vm2077, %v1999, %v2109
        %v2142 = vsel %vm2078, %v2002, %v2110
        %v2143 = vsel %vm2079, %v2007, %v2111
        %v2144 = vsel %vm2080, %v2010, %v2112
        %v2145 = vsel %vm2081, %v2015, %v2113
        %v2146 = vsel %vm2082, %v2018, %v2114
        %v2147 = vsel %vm2083, %v2023, %v2115
        %v2148 = vsel %vm2084, %v2026, %v2116
        %v2149 = vsel %vm2085, %v2031, %v2117
        %v2150 = vsel %vm2086, %v2034, %v2118
        %v2151 = vsel %vm2087, %v2039, %v2119
        %v2152 = vsel %vm2088, %v2042, %v2120
        %v2153 = vsel %vm2089, %v2047, %v2121
        %v2154 = vsel %vm2090, %v2050, %v2122
        %v2155 = vsel %vm2091, %v2055, %v2123
        %v2156 = vsel %vm2092, %v2058, %v2124
        %v2157 = vpack.c.bf16 %v2126, %v2125
        %v2158 = vpack.c.bf16 %v2128, %v2127
        %v2159 = vpack.c.bf16 %v2130, %v2129
        %v2160 = vpack.c.bf16 %v2132, %v2131
        %v2161 = vpack.c.bf16 %v2134, %v2133
        %v2162 = vpack.c.bf16 %v2136, %v2135
        %v2163 = vpack.c.bf16 %v2138, %v2137
        %v2164 = vpack.c.bf16 %v2140, %v2139
        %v2165 = vpack.c.bf16 %v2142, %v2141
        %v2166 = vpack.c.bf16 %v2144, %v2143
        %v2167 = vpack.c.bf16 %v2146, %v2145
        %v2168 = vpack.c.bf16 %v2148, %v2147
        %v2169 = vpack.c.bf16 %v2150, %v2149
        %v2170 = vpack.c.bf16 %v2152, %v2151
        %v2171 = vpack.c.bf16 %v2154, %v2153
        %v2172 = vpack.c.bf16 %v2156, %v2155
        %v2173 = vld [vmem:[%s10] sm:$0xf]
        %v2174 = vld [vmem:[%s10 + $0x4] sm:$0xf]
        %v2175 = vld [vmem:[%s10 + $0x8] sm:$0xf]
        %v2176 = vld [vmem:[%s10 + $0xc] sm:$0xf]
        %v2177 = vld [vmem:[%s10 + $0x10] sm:$0xf]
        %v2178 = vld [vmem:[%s10 + $0x14] sm:$0xf]
        %v2179 = vld [vmem:[%s10 + $0x18] sm:$0xf]
        %v2180 = vld [vmem:[%s10 + $0x1c] sm:$0xf]
        %v2181 = vld [vmem:[%s10 + $0x20] sm:$0xf]
        %v2182 = vld [vmem:[%s10 + $0x24] sm:$0xf]
        %v2183 = vld [vmem:[%s10 + $0x28] sm:$0xf]
        %v2184 = vld [vmem:[%s10 + $0x2c] sm:$0xf]
        %v2185 = vld [vmem:[%s10 + $0x30] sm:$0xf]
        %v2186 = vld [vmem:[%s10 + $0x34] sm:$0xf]
        %v2187 = vld [vmem:[%s10 + $0x38] sm:$0xf]
        %v2188 = vld [vmem:[%s10 + $0x3c] sm:$0xf]
        %v2189 = vld [vmem:[%s11] sm:$0x1]
        %v2191 = vlaneseq
        %v2192 = vshrl.u32 %v2191, 7
        %v2193 = vsub.s32 0, %v2192
        %v2194 = vrot.slane %v2189, %v2193
        %v2212 = vunpack.c.l.b16 %v2173
        %v2213 = vunpack.c.l.b16 %v2174
        %v2214 = vunpack.c.l.b16 %v2175
        %v2215 = vunpack.c.l.b16 %v2176
        %v2216 = vunpack.c.l.b16 %v2177
        %v2217 = vunpack.c.l.b16 %v2178
        %v2218 = vunpack.c.l.b16 %v2179
        %v2219 = vunpack.c.l.b16 %v2180
        %v2220 = vunpack.c.l.b16 %v2181
        %v2221 = vunpack.c.l.b16 %v2182
        %v2222 = vunpack.c.l.b16 %v2183
        %v2223 = vunpack.c.l.b16 %v2184
        %v2224 = vunpack.c.l.b16 %v2185
        %v2225 = vunpack.c.l.b16 %v2186
        %v2226 = vunpack.c.l.b16 %v2187
        %v2227 = vunpack.c.l.b16 %v2188
        %v2228 = vpack.c.b16 %v2213, %v2212
        %v2229 = vpack.c.b16 %v2215, %v2214
        %v2230 = vpack.c.b16 %v2217, %v2216
        %v2231 = vpack.c.b16 %v2219, %v2218
        %v2232 = vpack.c.b16 %v2221, %v2220
        %v2233 = vpack.c.b16 %v2223, %v2222
        %v2234 = vpack.c.b16 %v2225, %v2224
        %v2235 = vpack.c.b16 %v2227, %v2226
        %2244 = vmatprep.subr.bf16.mxu0 0
        %2245 = vmatpush1.bf16.msra.mxu0 %v2228
        %2246 = vmatprep.subr.bf16.mxu0 0
        %2247 = vmatpush1.bf16.msra.mxu0 %v2229
        %2248 = vmatprep.subr.bf16.mxu0 0
        %2249 = vmatpush1.bf16.msra.mxu0 %v2230
        %2250 = vmatprep.subr.bf16.mxu0 0
        %2251 = vmatpush1.bf16.msra.mxu0 %v2231
        %2252 = vmatprep.subr.bf16.mxu0 0
        %2253 = vmatpush1.bf16.msra.mxu0 %v2232
        %2254 = vmatprep.subr.bf16.mxu0 0
        %2255 = vmatpush1.bf16.msra.mxu0 %v2233
        %2256 = vmatprep.subr.bf16.mxu0 0
        %2257 = vmatpush1.bf16.msra.mxu0 %v2234
        %2258 = vmatprep.subr.bf16.mxu0 0
        %2259 = vmatpush1.bf16.msra.mxu0 %v2235
        %2260 = vmatprep.subr.bf16.mxu0 0
        %2261 = vmatpush1.bf16.msra.mxu0 0
        %2262 = vmatprep.subr.bf16.mxu0 0
        %2263 = vmatpush1.bf16.msra.mxu0 0
        %2264 = vmatprep.subr.bf16.mxu0 0
        %2265 = vmatpush1.bf16.msra.mxu0 0
        %2266 = vmatprep.subr.bf16.mxu0 0
        %2267 = vmatpush1.bf16.msra.mxu0 0
        %2268 = vmatprep.subr.bf16.mxu0 0
        %2269 = vmatpush1.bf16.msra.mxu0 0
        %2270 = vmatprep.subr.bf16.mxu0 0
        %2271 = vmatpush1.bf16.msra.mxu0 0
        %2272 = vmatprep.subr.bf16.mxu0 0
        %2273 = vmatpush1.bf16.msra.mxu0 0
        %2274 = vmatprep.subr.bf16.mxu0 0
        %2275 = vmatpush1.bf16.msra.mxu0 0
        %2276 = vmatprep.mubr.bf16.mxu0 0
        %2277 = vmatmul.mubr.bf16.gmra.mrb[0].mxu0 %v2157
        %v2278 = vpop.f32.mrb[0].mxu0
        %v2279 = vadd.f32 %v2194, %v2278
        %v2280 = vpop.f32.mrb[0].mxu0
        %v2281 = vpop.f32.mrb[0].mxu0
        %v2282 = vadd.f32 %v2194, %v2281
        %v2283 = vpop.f32.mrb[0].mxu0
        %2284 = vmatprep.mubr.bf16.mxu0 0
        %2285 = vmatmul.mubr.bf16.gmra.mrb[0].mxu0 %v2158
        %v2286 = vpop.f32.mrb[0].mxu0
        %v2287 = vadd.f32 %v2194, %v2286
        %v2288 = vpop.f32.mrb[0].mxu0
        %v2289 = vpop.f32.mrb[0].mxu0
        %v2290 = vadd.f32 %v2194, %v2289
        %v2291 = vpop.f32.mrb[0].mxu0
        %2292 = vmatprep.mubr.bf16.mxu0 0
        %2293 = vmatmul.mubr.bf16.gmra.mrb[0].mxu0 %v2159
        %v2294 = vpop.f32.mrb[0].mxu0
        %v2295 = vadd.f32 %v2194, %v2294
        %v2296 = vpop.f32.mrb[0].mxu0
        %v2297 = vpop.f32.mrb[0].mxu0
        %v2298 = vadd.f32 %v2194, %v2297
        %v2299 = vpop.f32.mrb[0].mxu0
        %2300 = vmatprep.mubr.bf16.mxu0 0
        %2301 = vmatmul.mubr.bf16.gmra.mrb[0].mxu0 %v2160
        %v2302 = vpop.f32.mrb[0].mxu0
        %v2303 = vadd.f32 %v2194, %v2302
        %v2304 = vpop.f32.mrb[0].mxu0
        %v2305 = vpop.f32.mrb[0].mxu0
        %v2306 = vadd.f32 %v2194, %v2305
        %v2307 = vpop.f32.mrb[0].mxu0
        %2308 = vmatprep.mubr.bf16.mxu0 0
        %2309 = vmatmul.mubr.bf16.gmra.mrb[0].mxu0 %v2161
        %v2310 = vpop.f32.mrb[0].mxu0
        %v2311 = vadd.f32 %v2194, %v2310
        %v2312 = vpop.f32.mrb[0].mxu0
        %v2313 = vpop.f32.mrb[0].mxu0
        %v2314 = vadd.f32 %v2194, %v2313
        %v2315 = vpop.f32.mrb[0].mxu0
        %2316 = vmatprep.mubr.bf16.mxu0 0
        %2317 = vmatmul.mubr.bf16.gmra.mrb[0].mxu0 %v2162
        %v2318 = vpop.f32.mrb[0].mxu0
        %v2319 = vadd.f32 %v2194, %v2318
        %v2320 = vpop.f32.mrb[0].mxu0
        %v2321 = vpop.f32.mrb[0].mxu0
        %v2322 = vadd.f32 %v2194, %v2321
        %v2323 = vpop.f32.mrb[0].mxu0
        %2324 = vmatprep.mubr.bf16.mxu0 0
        %2325 = vmatmul.mubr.bf16.gmra.mrb[0].mxu0 %v2163
        %v2326 = vpop.f32.mrb[0].mxu0
        %v2327 = vadd.f32 %v2194, %v2326
        %v2328 = vpop.f32.mrb[0].mxu0
        %v2329 = vpop.f32.mrb[0].mxu0
        %v2330 = vadd.f32 %v2194, %v2329
        %v2331 = vpop.f32.mrb[0].mxu0
        %2332 = vmatprep.mubr.bf16.mxu0 0
        %2333 = vmatmul.mubr.bf16.gmra.mrb[0].mxu0 %v2164
        %v2334 = vpop.f32.mrb[0].mxu0
        %v2335 = vadd.f32 %v2194, %v2334
        %v2336 = vpop.f32.mrb[0].mxu0
        %v2337 = vpop.f32.mrb[0].mxu0
        %v2338 = vadd.f32 %v2194, %v2337
        %v2339 = vpop.f32.mrb[0].mxu0
        %2340 = vmatprep.mubr.bf16.mxu0 0
        %2341 = vmatmul.mubr.bf16.gmra.mrb[0].mxu0 %v2165
        %v2342 = vpop.f32.mrb[0].mxu0
        %v2343 = vadd.f32 %v2194, %v2342
        %v2344 = vpop.f32.mrb[0].mxu0
        %v2345 = vpop.f32.mrb[0].mxu0
        %v2346 = vadd.f32 %v2194, %v2345
        %v2347 = vpop.f32.mrb[0].mxu0
        %2348 = vmatprep.mubr.bf16.mxu0 0
        %2349 = vmatmul.mubr.bf16.gmra.mrb[0].mxu0 %v2166
        %v2350 = vpop.f32.mrb[0].mxu0
        %v2351 = vadd.f32 %v2194, %v2350
        %v2352 = vpop.f32.mrb[0].mxu0
        %v2353 = vpop.f32.mrb[0].mxu0
        %v2354 = vadd.f32 %v2194, %v2353
        %v2355 = vpop.f32.mrb[0].mxu0
        %2356 = vmatprep.mubr.bf16.mxu0 0
        %2357 = vmatmul.mubr.bf16.gmra.mrb[0].mxu0 %v2167
        %v2358 = vpop.f32.mrb[0].mxu0
        %v2359 = vadd.f32 %v2194, %v2358
        %v2360 = vpop.f32.mrb[0].mxu0
        %v2361 = vpop.f32.mrb[0].mxu0
        %v2362 = vadd.f32 %v2194, %v2361
        %v2363 = vpop.f32.mrb[0].mxu0
        %2364 = vmatprep.mubr.bf16.mxu0 0
        %2365 = vmatmul.mubr.bf16.gmra.mrb[0].mxu0 %v2168
        %v2366 = vpop.f32.mrb[0].mxu0
        %v2367 = vadd.f32 %v2194, %v2366
        %v2368 = vpop.f32.mrb[0].mxu0
        %v2369 = vpop.f32.mrb[0].mxu0
        %v2370 = vadd.f32 %v2194, %v2369
        %v2371 = vpop.f32.mrb[0].mxu0
        %2372 = vmatprep.mubr.bf16.mxu0 0
        %2373 = vmatmul.mubr.bf16.gmra.mrb[0].mxu0 %v2169
        %v2374 = vpop.f32.mrb[0].mxu0
        %v2375 = vadd.f32 %v2194, %v2374
        %v2376 = vpop.f32.mrb[0].mxu0
        %v2377 = vpop.f32.mrb[0].mxu0
        %v2378 = vadd.f32 %v2194, %v2377
        %v2379 = vpop.f32.mrb[0].mxu0
        %2380 = vmatprep.mubr.bf16.mxu0 0
        %2381 = vmatmul.mubr.bf16.gmra.mrb[0].mxu0 %v2170
        %v2382 = vpop.f32.mrb[0].mxu0
        %v2383 = vadd.f32 %v2194, %v2382
        %v2384 = vpop.f32.mrb[0].mxu0
        %v2385 = vpop.f32.mrb[0].mxu0
        %v2386 = vadd.f32 %v2194, %v2385
        %v2387 = vpop.f32.mrb[0].mxu0
        %2388 = vmatprep.mubr.bf16.mxu0 0
        %2389 = vmatmul.mubr.bf16.gmra.mrb[0].mxu0 %v2171
        %v2390 = vpop.f32.mrb[0].mxu0
        %v2391 = vadd.f32 %v2194, %v2390
        %v2392 = vpop.f32.mrb[0].mxu0
        %v2393 = vpop.f32.mrb[0].mxu0
        %v2394 = vadd.f32 %v2194, %v2393
        %v2395 = vpop.f32.mrb[0].mxu0
        %2396 = vmatprep.mubr.bf16.mxu0 0
        %2397 = vmatmul.mubr.bf16.gmra.mrb[0].mxu0 %v2172
        %v2398 = vpop.f32.mrb[0].mxu0
        %v2399 = vadd.f32 %v2194, %v2398
        %v2400 = vpop.f32.mrb[0].mxu0
        %v2401 = vpop.f32.mrb[0].mxu0
        %v2402 = vadd.f32 %v2194, %v2401
        %v2403 = vpop.f32.mrb[0].mxu0
        %2404 = vdwg.mxu0
        %vm2405 = vcmp.gt.f32.partialorder %v2279, 0.0
        %vm2406 = vcmp.gt.f32.partialorder %v2282, 0.0
        %vm2407 = vcmp.gt.f32.partialorder %v2287, 0.0
        %vm2408 = vcmp.gt.f32.partialorder %v2290, 0.0
        %vm2409 = vcmp.gt.f32.partialorder %v2295, 0.0
        %vm2410 = vcmp.gt.f32.partialorder %v2298, 0.0
        %vm2411 = vcmp.gt.f32.partialorder %v2303, 0.0
        %vm2412 = vcmp.gt.f32.partialorder %v2306, 0.0
        %vm2413 = vcmp.gt.f32.partialorder %v2311, 0.0
        %vm2414 = vcmp.gt.f32.partialorder %v2314, 0.0
        %vm2415 = vcmp.gt.f32.partialorder %v2319, 0.0
        %vm2416 = vcmp.gt.f32.partialorder %v2322, 0.0
        %vm2417 = vcmp.gt.f32.partialorder %v2327, 0.0
        %vm2418 = vcmp.gt.f32.partialorder %v2330, 0.0
        %vm2419 = vcmp.gt.f32.partialorder %v2335, 0.0
        %vm2420 = vcmp.gt.f32.partialorder %v2338, 0.0
        %vm2421 = vcmp.gt.f32.partialorder %v2343, 0.0
        %vm2422 = vcmp.gt.f32.partialorder %v2346, 0.0
        %vm2423 = vcmp.gt.f32.partialorder %v2351, 0.0
        %vm2424 = vcmp.gt.f32.partialorder %v2354, 0.0
        %vm2425 = vcmp.gt.f32.partialorder %v2359, 0.0
        %vm2426 = vcmp.gt.f32.partialorder %v2362, 0.0
        %vm2427 = vcmp.gt.f32.partialorder %v2367, 0.0
        %vm2428 = vcmp.gt.f32.partialorder %v2370, 0.0
        %vm2429 = vcmp.gt.f32.partialorder %v2375, 0.0
        %vm2430 = vcmp.gt.f32.partialorder %v2378, 0.0
        %vm2431 = vcmp.gt.f32.partialorder %v2383, 0.0
        %vm2432 = vcmp.gt.f32.partialorder %v2386, 0.0
        %vm2433 = vcmp.gt.f32.partialorder %v2391, 0.0
        %vm2434 = vcmp.gt.f32.partialorder %v2394, 0.0
        %vm2435 = vcmp.gt.f32.partialorder %v2399, 0.0
        %vm2436 = vcmp.gt.f32.partialorder %v2402, 0.0
        %v2437 = vmul.f32 %v2279, 0.2
        %v2438 = vmul.f32 %v2282, 0.2
        %v2439 = vmul.f32 %v2287, 0.2
        %v2440 = vmul.f32 %v2290, 0.2
        %v2441 = vmul.f32 %v2295, 0.2
        %v2442 = vmul.f32 %v2298, 0.2
        %v2443 = vmul.f32 %v2303, 0.2
        %v2444 = vmul.f32 %v2306, 0.2
        %v2445 = vmul.f32 %v2311, 0.2
        %v2446 = vmul.f32 %v2314, 0.2
        %v2447 = vmul.f32 %v2319, 0.2
        %v2448 = vmul.f32 %v2322, 0.2
        %v2449 = vmul.f32 %v2327, 0.2
        %v2450 = vmul.f32 %v2330, 0.2
        %v2451 = vmul.f32 %v2335, 0.2
        %v2452 = vmul.f32 %v2338, 0.2
        %v2453 = vmul.f32 %v2343, 0.2
        %v2454 = vmul.f32 %v2346, 0.2
        %v2455 = vmul.f32 %v2351, 0.2
        %v2456 = vmul.f32 %v2354, 0.2
        %v2457 = vmul.f32 %v2359, 0.2
        %v2458 = vmul.f32 %v2362, 0.2
        %v2459 = vmul.f32 %v2367, 0.2
        %v2460 = vmul.f32 %v2370, 0.2
        %v2461 = vmul.f32 %v2375, 0.2
        %v2462 = vmul.f32 %v2378, 0.2
        %v2463 = vmul.f32 %v2383, 0.2
        %v2464 = vmul.f32 %v2386, 0.2
        %v2465 = vmul.f32 %v2391, 0.2
        %v2466 = vmul.f32 %v2394, 0.2
        %v2467 = vmul.f32 %v2399, 0.2
        %v2468 = vmul.f32 %v2402, 0.2
        %v2469 = vsel %vm2405, %v2279, %v2437
        %v2470 = vsel %vm2406, %v2282, %v2438
        %v2471 = vsel %vm2407, %v2287, %v2439
        %v2472 = vsel %vm2408, %v2290, %v2440
        %v2473 = vsel %vm2409, %v2295, %v2441
        %v2474 = vsel %vm2410, %v2298, %v2442
        %v2475 = vsel %vm2411, %v2303, %v2443
        %v2476 = vsel %vm2412, %v2306, %v2444
        %v2477 = vsel %vm2413, %v2311, %v2445
        %v2478 = vsel %vm2414, %v2314, %v2446
        %v2479 = vsel %vm2415, %v2319, %v2447
        %v2480 = vsel %vm2416, %v2322, %v2448
        %v2481 = vsel %vm2417, %v2327, %v2449
        %v2482 = vsel %vm2418, %v2330, %v2450
        %v2483 = vsel %vm2419, %v2335, %v2451
        %v2484 = vsel %vm2420, %v2338, %v2452
        %v2485 = vsel %vm2421, %v2343, %v2453
        %v2486 = vsel %vm2422, %v2346, %v2454
        %v2487 = vsel %vm2423, %v2351, %v2455
        %v2488 = vsel %vm2424, %v2354, %v2456
        %v2489 = vsel %vm2425, %v2359, %v2457
        %v2490 = vsel %vm2426, %v2362, %v2458
        %v2491 = vsel %vm2427, %v2367, %v2459
        %v2492 = vsel %vm2428, %v2370, %v2460
        %v2493 = vsel %vm2429, %v2375, %v2461
        %v2494 = vsel %vm2430, %v2378, %v2462
        %v2495 = vsel %vm2431, %v2383, %v2463
        %v2496 = vsel %vm2432, %v2386, %v2464
        %v2497 = vsel %vm2433, %v2391, %v2465
        %v2498 = vsel %vm2434, %v2394, %v2466
        %v2499 = vsel %vm2435, %v2399, %v2467
        %v2500 = vsel %vm2436, %v2402, %v2468
        %v2501 = vpack.c.bf16 %v2470, %v2469
        %v2502 = vpack.c.bf16 %v2472, %v2471
        %v2503 = vpack.c.bf16 %v2474, %v2473
        %v2504 = vpack.c.bf16 %v2476, %v2475
        %v2505 = vpack.c.bf16 %v2478, %v2477
        %v2506 = vpack.c.bf16 %v2480, %v2479
        %v2507 = vpack.c.bf16 %v2482, %v2481
        %v2508 = vpack.c.bf16 %v2484, %v2483
        %v2509 = vpack.c.bf16 %v2486, %v2485
        %v2510 = vpack.c.bf16 %v2488, %v2487
        %v2511 = vpack.c.bf16 %v2490, %v2489
        %v2512 = vpack.c.bf16 %v2492, %v2491
        %v2513 = vpack.c.bf16 %v2494, %v2493
        %v2514 = vpack.c.bf16 %v2496, %v2495
        %v2515 = vpack.c.bf16 %v2498, %v2497
        %v2516 = vpack.c.bf16 %v2500, %v2499
        %v2517 = vld [vmem:[%s12] sm:$0xf]
        %v2518 = vld [vmem:[%s12 + $0x4] sm:$0xf]
        %v2519 = vld [vmem:[%s12 + $0x8] sm:$0xf]
        %v2520 = vld [vmem:[%s12 + $0xc] sm:$0xf]
        %v2521 = vld [vmem:[%s12 + $0x10] sm:$0xf]
        %v2522 = vld [vmem:[%s12 + $0x14] sm:$0xf]
        %v2523 = vld [vmem:[%s12 + $0x18] sm:$0xf]
        %v2524 = vld [vmem:[%s12 + $0x1c] sm:$0xf]
        %v2525 = vld [vmem:[%s12 + $0x20] sm:$0xf]
        %v2526 = vld [vmem:[%s12 + $0x24] sm:$0xf]
        %v2527 = vld [vmem:[%s12 + $0x28] sm:$0xf]
        %v2528 = vld [vmem:[%s12 + $0x2c] sm:$0xf]
        %v2529 = vld [vmem:[%s12 + $0x30] sm:$0xf]
        %v2530 = vld [vmem:[%s12 + $0x34] sm:$0xf]
        %v2531 = vld [vmem:[%s12 + $0x38] sm:$0xf]
        %v2532 = vld [vmem:[%s12 + $0x3c] sm:$0xf]
        %v2533 = vld [vmem:[%s13] sm:$0x1]
        %v2535 = vlaneseq
        %v2536 = vshrl.u32 %v2535, 7
        %v2537 = vsub.s32 0, %v2536
        %v2538 = vrot.slane %v2533, %v2537
        %v2556 = vunpack.c.l.b16 %v2517
        %v2557 = vunpack.c.l.b16 %v2518
        %v2558 = vunpack.c.l.b16 %v2519
        %v2559 = vunpack.c.l.b16 %v2520
        %v2560 = vunpack.c.l.b16 %v2521
        %v2561 = vunpack.c.l.b16 %v2522
        %v2562 = vunpack.c.l.b16 %v2523
        %v2563 = vunpack.c.l.b16 %v2524
        %v2564 = vunpack.c.l.b16 %v2525
        %v2565 = vunpack.c.l.b16 %v2526
        %v2566 = vunpack.c.l.b16 %v2527
        %v2567 = vunpack.c.l.b16 %v2528
        %v2568 = vunpack.c.l.b16 %v2529
        %v2569 = vunpack.c.l.b16 %v2530
        %v2570 = vunpack.c.l.b16 %v2531
        %v2571 = vunpack.c.l.b16 %v2532
        %v2572 = vpack.c.b16 %v2557, %v2556
        %v2573 = vpack.c.b16 %v2559, %v2558
        %v2574 = vpack.c.b16 %v2561, %v2560
        %v2575 = vpack.c.b16 %v2563, %v2562
        %v2576 = vpack.c.b16 %v2565, %v2564
        %v2577 = vpack.c.b16 %v2567, %v2566
        %v2578 = vpack.c.b16 %v2569, %v2568
        %v2579 = vpack.c.b16 %v2571, %v2570
        %2588 = vmatprep.subr.bf16.mxu0 0
        %2589 = vmatpush1.bf16.msra.mxu0 %v2572
        %2590 = vmatprep.subr.bf16.mxu0 0
        %2591 = vmatpush1.bf16.msra.mxu0 %v2573
        %2592 = vmatprep.subr.bf16.mxu0 0
        %2593 = vmatpush1.bf16.msra.mxu0 %v2574
        %2594 = vmatprep.subr.bf16.mxu0 0
        %2595 = vmatpush1.bf16.msra.mxu0 %v2575
        %2596 = vmatprep.subr.bf16.mxu0 0
        %2597 = vmatpush1.bf16.msra.mxu0 %v2576
        %2598 = vmatprep.subr.bf16.mxu0 0
        %2599 = vmatpush1.bf16.msra.mxu0 %v2577
        %2600 = vmatprep.subr.bf16.mxu0 0
        %2601 = vmatpush1.bf16.msra.mxu0 %v2578
        %2602 = vmatprep.subr.bf16.mxu0 0
        %2603 = vmatpush1.bf16.msra.mxu0 %v2579
        %2604 = vmatprep.subr.bf16.mxu0 0
        %2605 = vmatpush1.bf16.msra.mxu0 0
        %2606 = vmatprep.subr.bf16.mxu0 0
        %2607 = vmatpush1.bf16.msra.mxu0 0
        %2608 = vmatprep.subr.bf16.mxu0 0
        %2609 = vmatpush1.bf16.msra.mxu0 0
        %2610 = vmatprep.subr.bf16.mxu0 0
        %2611 = vmatpush1.bf16.msra.mxu0 0
        %2612 = vmatprep.subr.bf16.mxu0 0
        %2613 = vmatpush1.bf16.msra.mxu0 0
        %2614 = vmatprep.subr.bf16.mxu0 0
        %2615 = vmatpush1.bf16.msra.mxu0 0
        %2616 = vmatprep.subr.bf16.mxu0 0
        %2617 = vmatpush1.bf16.msra.mxu0 0
        %2618 = vmatprep.subr.bf16.mxu0 0
        %2619 = vmatpush1.bf16.msra.mxu0 0
        %2620 = vmatprep.mubr.bf16.mxu0 0
        %2621 = vmatmul.mubr.bf16.gmra.mrb[0].mxu0 %v2501
        %v2622 = vpop.f32.mrb[0].mxu0
        %v2623 = vadd.f32 %v2538, %v2622
        %v2624 = vpop.f32.mrb[0].mxu0
        %v2625 = vpop.f32.mrb[0].mxu0
        %v2626 = vadd.f32 %v2538, %v2625
        %v2627 = vpop.f32.mrb[0].mxu0
        %2628 = vmatprep.mubr.bf16.mxu0 0
        %2629 = vmatmul.mubr.bf16.gmra.mrb[0].mxu0 %v2502
        %v2630 = vpop.f32.mrb[0].mxu0
        %v2631 = vadd.f32 %v2538, %v2630
        %v2632 = vpop.f32.mrb[0].mxu0
        %v2633 = vpop.f32.mrb[0].mxu0
        %v2634 = vadd.f32 %v2538, %v2633
        %v2635 = vpop.f32.mrb[0].mxu0
        %2636 = vmatprep.mubr.bf16.mxu0 0
        %2637 = vmatmul.mubr.bf16.gmra.mrb[0].mxu0 %v2503
        %v2638 = vpop.f32.mrb[0].mxu0
        %v2639 = vadd.f32 %v2538, %v2638
        %v2640 = vpop.f32.mrb[0].mxu0
        %v2641 = vpop.f32.mrb[0].mxu0
        %v2642 = vadd.f32 %v2538, %v2641
        %v2643 = vpop.f32.mrb[0].mxu0
        %2644 = vmatprep.mubr.bf16.mxu0 0
        %2645 = vmatmul.mubr.bf16.gmra.mrb[0].mxu0 %v2504
        %v2646 = vpop.f32.mrb[0].mxu0
        %v2647 = vadd.f32 %v2538, %v2646
        %v2648 = vpop.f32.mrb[0].mxu0
        %v2649 = vpop.f32.mrb[0].mxu0
        %v2650 = vadd.f32 %v2538, %v2649
        %v2651 = vpop.f32.mrb[0].mxu0
        %2652 = vmatprep.mubr.bf16.mxu0 0
        %2653 = vmatmul.mubr.bf16.gmra.mrb[0].mxu0 %v2505
        %v2654 = vpop.f32.mrb[0].mxu0
        %v2655 = vadd.f32 %v2538, %v2654
        %v2656 = vpop.f32.mrb[0].mxu0
        %v2657 = vpop.f32.mrb[0].mxu0
        %v2658 = vadd.f32 %v2538, %v2657
        %v2659 = vpop.f32.mrb[0].mxu0
        %2660 = vmatprep.mubr.bf16.mxu0 0
        %2661 = vmatmul.mubr.bf16.gmra.mrb[0].mxu0 %v2506
        %v2662 = vpop.f32.mrb[0].mxu0
        %v2663 = vadd.f32 %v2538, %v2662
        %v2664 = vpop.f32.mrb[0].mxu0
        %v2665 = vpop.f32.mrb[0].mxu0
        %v2666 = vadd.f32 %v2538, %v2665
        %v2667 = vpop.f32.mrb[0].mxu0
        %2668 = vmatprep.mubr.bf16.mxu0 0
        %2669 = vmatmul.mubr.bf16.gmra.mrb[0].mxu0 %v2507
        %v2670 = vpop.f32.mrb[0].mxu0
        %v2671 = vadd.f32 %v2538, %v2670
        %v2672 = vpop.f32.mrb[0].mxu0
        %v2673 = vpop.f32.mrb[0].mxu0
        %v2674 = vadd.f32 %v2538, %v2673
        %v2675 = vpop.f32.mrb[0].mxu0
        %2676 = vmatprep.mubr.bf16.mxu0 0
        %2677 = vmatmul.mubr.bf16.gmra.mrb[0].mxu0 %v2508
        %v2678 = vpop.f32.mrb[0].mxu0
        %v2679 = vadd.f32 %v2538, %v2678
        %v2680 = vpop.f32.mrb[0].mxu0
        %v2681 = vpop.f32.mrb[0].mxu0
        %v2682 = vadd.f32 %v2538, %v2681
        %v2683 = vpop.f32.mrb[0].mxu0
        %2684 = vmatprep.mubr.bf16.mxu0 0
        %2685 = vmatmul.mubr.bf16.gmra.mrb[0].mxu0 %v2509
        %v2686 = vpop.f32.mrb[0].mxu0
        %v2687 = vadd.f32 %v2538, %v2686
        %v2688 = vpop.f32.mrb[0].mxu0
        %v2689 = vpop.f32.mrb[0].mxu0
        %v2690 = vadd.f32 %v2538, %v2689
        %v2691 = vpop.f32.mrb[0].mxu0
        %2692 = vmatprep.mubr.bf16.mxu0 0
        %2693 = vmatmul.mubr.bf16.gmra.mrb[0].mxu0 %v2510
        %v2694 = vpop.f32.mrb[0].mxu0
        %v2695 = vadd.f32 %v2538, %v2694
        %v2696 = vpop.f32.mrb[0].mxu0
        %v2697 = vpop.f32.mrb[0].mxu0
        %v2698 = vadd.f32 %v2538, %v2697
        %v2699 = vpop.f32.mrb[0].mxu0
        %2700 = vmatprep.mubr.bf16.mxu0 0
        %2701 = vmatmul.mubr.bf16.gmra.mrb[0].mxu0 %v2511
        %v2702 = vpop.f32.mrb[0].mxu0
        %v2703 = vadd.f32 %v2538, %v2702
        %v2704 = vpop.f32.mrb[0].mxu0
        %v2705 = vpop.f32.mrb[0].mxu0
        %v2706 = vadd.f32 %v2538, %v2705
        %v2707 = vpop.f32.mrb[0].mxu0
        %2708 = vmatprep.mubr.bf16.mxu0 0
        %2709 = vmatmul.mubr.bf16.gmra.mrb[0].mxu0 %v2512
        %v2710 = vpop.f32.mrb[0].mxu0
        %v2711 = vadd.f32 %v2538, %v2710
        %v2712 = vpop.f32.mrb[0].mxu0
        %v2713 = vpop.f32.mrb[0].mxu0
        %v2714 = vadd.f32 %v2538, %v2713
        %v2715 = vpop.f32.mrb[0].mxu0
        %2716 = vmatprep.mubr.bf16.mxu0 0
        %2717 = vmatmul.mubr.bf16.gmra.mrb[0].mxu0 %v2513
        %v2718 = vpop.f32.mrb[0].mxu0
        %v2719 = vadd.f32 %v2538, %v2718
        %v2720 = vpop.f32.mrb[0].mxu0
        %v2721 = vpop.f32.mrb[0].mxu0
        %v2722 = vadd.f32 %v2538, %v2721
        %v2723 = vpop.f32.mrb[0].mxu0
        %2724 = vmatprep.mubr.bf16.mxu0 0
        %2725 = vmatmul.mubr.bf16.gmra.mrb[0].mxu0 %v2514
        %v2726 = vpop.f32.mrb[0].mxu0
        %v2727 = vadd.f32 %v2538, %v2726
        %v2728 = vpop.f32.mrb[0].mxu0
        %v2729 = vpop.f32.mrb[0].mxu0
        %v2730 = vadd.f32 %v2538, %v2729
        %v2731 = vpop.f32.mrb[0].mxu0
        %2732 = vmatprep.mubr.bf16.mxu0 0
        %2733 = vmatmul.mubr.bf16.gmra.mrb[0].mxu0 %v2515
        %v2734 = vpop.f32.mrb[0].mxu0
        %v2735 = vadd.f32 %v2538, %v2734
        %v2736 = vpop.f32.mrb[0].mxu0
        %v2737 = vpop.f32.mrb[0].mxu0
        %v2738 = vadd.f32 %v2538, %v2737
        %v2739 = vpop.f32.mrb[0].mxu0
        %2740 = vmatprep.mubr.bf16.mxu0 0
        %2741 = vmatmul.mubr.bf16.gmra.mrb[0].mxu0 %v2516
        %v2742 = vpop.f32.mrb[0].mxu0
        %v2743 = vadd.f32 %v2538, %v2742
        %v2744 = vpop.f32.mrb[0].mxu0
        %v2745 = vpop.f32.mrb[0].mxu0
        %v2746 = vadd.f32 %v2538, %v2745
        %v2747 = vpop.f32.mrb[0].mxu0
        %2748 = vdwg.mxu0
        %v2749 = vxor.u32 %v2623, 2147483648
        %v2750 = vxor.u32 %v2626, 2147483648
        %v2751 = vxor.u32 %v2631, 2147483648
        %v2752 = vxor.u32 %v2634, 2147483648
        %v2753 = vxor.u32 %v2639, 2147483648
        %v2754 = vxor.u32 %v2642, 2147483648
        %v2755 = vxor.u32 %v2647, 2147483648
        %v2756 = vxor.u32 %v2650, 2147483648
        %v2757 = vxor.u32 %v2655, 2147483648
        %v2758 = vxor.u32 %v2658, 2147483648
        %v2759 = vxor.u32 %v2663, 2147483648
        %v2760 = vxor.u32 %v2666, 2147483648
        %v2761 = vxor.u32 %v2671, 2147483648
        %v2762 = vxor.u32 %v2674, 2147483648
        %v2763 = vxor.u32 %v2679, 2147483648
        %v2764 = vxor.u32 %v2682, 2147483648
        %v2765 = vxor.u32 %v2687, 2147483648
        %v2766 = vxor.u32 %v2690, 2147483648
        %v2767 = vxor.u32 %v2695, 2147483648
        %v2768 = vxor.u32 %v2698, 2147483648
        %v2769 = vxor.u32 %v2703, 2147483648
        %v2770 = vxor.u32 %v2706, 2147483648
        %v2771 = vxor.u32 %v2711, 2147483648
        %v2772 = vxor.u32 %v2714, 2147483648
        %v2773 = vxor.u32 %v2719, 2147483648
        %v2774 = vxor.u32 %v2722, 2147483648
        %v2775 = vxor.u32 %v2727, 2147483648
        %v2776 = vxor.u32 %v2730, 2147483648
        %v2777 = vxor.u32 %v2735, 2147483648
        %v2778 = vxor.u32 %v2738, 2147483648
        %v2779 = vxor.u32 %v2743, 2147483648
        %v2780 = vxor.u32 %v2746, 2147483648
        %v2781 = vmul.f32 %v2749, 1.442695
        %v2782 = vpow.pop %v2781
        %v2783 = vmul.f32 %v2750, 1.442695
        %v2784 = vpow.pop %v2783
        %v2785 = vmul.f32 %v2751, 1.442695
        %v2786 = vpow.pop %v2785
        %v2787 = vmul.f32 %v2752, 1.442695
        %v2788 = vpow.pop %v2787
        %v2789 = vmul.f32 %v2753, 1.442695
        %v2790 = vpow.pop %v2789
        %v2791 = vmul.f32 %v2754, 1.442695
        %v2792 = vpow.pop %v2791
        %v2793 = vmul.f32 %v2755, 1.442695
        %v2794 = vpow.pop %v2793
        %v2795 = vmul.f32 %v2756, 1.442695
        %v2796 = vpow.pop %v2795
        %v2797 = vmul.f32 %v2757, 1.442695
        %v2798 = vpow.pop %v2797
        %v2799 = vmul.f32 %v2758, 1.442695
        %v2800 = vpow.pop %v2799
        %v2801 = vmul.f32 %v2759, 1.442695
        %v2802 = vpow.pop %v2801
        %v2803 = vmul.f32 %v2760, 1.442695
        %v2804 = vpow.pop %v2803
        %v2805 = vmul.f32 %v2761, 1.442695
        %v2806 = vpow.pop %v2805
        %v2807 = vmul.f32 %v2762, 1.442695
        %v2808 = vpow.pop %v2807
        %v2809 = vmul.f32 %v2763, 1.442695
        %v2810 = vpow.pop %v2809
        %v2811 = vmul.f32 %v2764, 1.442695
        %v2812 = vpow.pop %v2811
        %v2813 = vmul.f32 %v2765, 1.442695
        %v2814 = vpow.pop %v2813
        %v2815 = vmul.f32 %v2766, 1.442695
        %v2816 = vpow.pop %v2815
        %v2817 = vmul.f32 %v2767, 1.442695
        %v2818 = vpow.pop %v2817
        %v2819 = vmul.f32 %v2768, 1.442695
        %v2820 = vpow.pop %v2819
        %v2821 = vmul.f32 %v2769, 1.442695
        %v2822 = vpow.pop %v2821
        %v2823 = vmul.f32 %v2770, 1.442695
        %v2824 = vpow.pop %v2823
        %v2825 = vmul.f32 %v2771, 1.442695
        %v2826 = vpow.pop %v2825
        %v2827 = vmul.f32 %v2772, 1.442695
        %v2828 = vpow.pop %v2827
        %v2829 = vmul.f32 %v2773, 1.442695
        %v2830 = vpow.pop %v2829
        %v2831 = vmul.f32 %v2774, 1.442695
        %v2832 = vpow.pop %v2831
        %v2833 = vmul.f32 %v2775, 1.442695
        %v2834 = vpow.pop %v2833
        %v2835 = vmul.f32 %v2776, 1.442695
        %v2836 = vpow.pop %v2835
        %v2837 = vmul.f32 %v2777, 1.442695
        %v2838 = vpow.pop %v2837
        %v2839 = vmul.f32 %v2778, 1.442695
        %v2840 = vpow.pop %v2839
        %v2841 = vmul.f32 %v2779, 1.442695
        %v2842 = vpow.pop %v2841
        %v2843 = vmul.f32 %v2780, 1.442695
        %v2844 = vpow.pop %v2843
        %v2845 = vadd.f32 %v2782, 1.0
        %v2846 = vadd.f32 %v2784, 1.0
        %v2847 = vadd.f32 %v2786, 1.0
        %v2848 = vadd.f32 %v2788, 1.0
        %v2849 = vadd.f32 %v2790, 1.0
        %v2850 = vadd.f32 %v2792, 1.0
        %v2851 = vadd.f32 %v2794, 1.0
        %v2852 = vadd.f32 %v2796, 1.0
        %v2853 = vadd.f32 %v2798, 1.0
        %v2854 = vadd.f32 %v2800, 1.0
        %v2855 = vadd.f32 %v2802, 1.0
        %v2856 = vadd.f32 %v2804, 1.0
        %v2857 = vadd.f32 %v2806, 1.0
        %v2858 = vadd.f32 %v2808, 1.0
        %v2859 = vadd.f32 %v2810, 1.0
        %v2860 = vadd.f32 %v2812, 1.0
        %v2861 = vadd.f32 %v2814, 1.0
        %v2862 = vadd.f32 %v2816, 1.0
        %v2863 = vadd.f32 %v2818, 1.0
        %v2864 = vadd.f32 %v2820, 1.0
        %v2865 = vadd.f32 %v2822, 1.0
        %v2866 = vadd.f32 %v2824, 1.0
        %v2867 = vadd.f32 %v2826, 1.0
        %v2868 = vadd.f32 %v2828, 1.0
        %v2869 = vadd.f32 %v2830, 1.0
        %v2870 = vadd.f32 %v2832, 1.0
        %v2871 = vadd.f32 %v2834, 1.0
        %v2872 = vadd.f32 %v2836, 1.0
        %v2873 = vadd.f32 %v2838, 1.0
        %v2874 = vadd.f32 %v2840, 1.0
        %v2875 = vadd.f32 %v2842, 1.0
        %v2876 = vadd.f32 %v2844, 1.0
        %v2877 = vrcp.pop %v2845
        %v2878 = vmul.f32 1.0, %v2877
        %v2879 = vrcp.pop %v2846
        %v2880 = vmul.f32 1.0, %v2879
        %v2881 = vrcp.pop %v2847
        %v2882 = vmul.f32 1.0, %v2881
        %v2883 = vrcp.pop %v2848
        %v2884 = vmul.f32 1.0, %v2883
        %v2885 = vrcp.pop %v2849
        %v2886 = vmul.f32 1.0, %v2885
        %v2887 = vrcp.pop %v2850
        %v2888 = vmul.f32 1.0, %v2887
        %v2889 = vrcp.pop %v2851
        %v2890 = vmul.f32 1.0, %v2889
        %v2891 = vrcp.pop %v2852
        %v2892 = vmul.f32 1.0, %v2891
        %v2893 = vrcp.pop %v2853
        %v2894 = vmul.f32 1.0, %v2893
        %v2895 = vrcp.pop %v2854
        %v2896 = vmul.f32 1.0, %v2895
        %v2897 = vrcp.pop %v2855
        %v2898 = vmul.f32 1.0, %v2897
        %v2899 = vrcp.pop %v2856
        %v2900 = vmul.f32 1.0, %v2899
        %v2901 = vrcp.pop %v2857
        %v2902 = vmul.f32 1.0, %v2901
        %v2903 = vrcp.pop %v2858
        %v2904 = vmul.f32 1.0, %v2903
        %v2905 = vrcp.pop %v2859
        %v2906 = vmul.f32 1.0, %v2905
        %v2907 = vrcp.pop %v2860
        %v2908 = vmul.f32 1.0, %v2907
        %v2909 = vrcp.pop %v2861
        %v2910 = vmul.f32 1.0, %v2909
        %v2911 = vrcp.pop %v2862
        %v2912 = vmul.f32 1.0, %v2911
        %v2913 = vrcp.pop %v2863
        %v2914 = vmul.f32 1.0, %v2913
        %v2915 = vrcp.pop %v2864
        %v2916 = vmul.f32 1.0, %v2915
        %v2917 = vrcp.pop %v2865
        %v2918 = vmul.f32 1.0, %v2917
        %v2919 = vrcp.pop %v2866
        %v2920 = vmul.f32 1.0, %v2919
        %v2921 = vrcp.pop %v2867
        %v2922 = vmul.f32 1.0, %v2921
        %v2923 = vrcp.pop %v2868
        %v2924 = vmul.f32 1.0, %v2923
        %v2925 = vrcp.pop %v2869
        %v2926 = vmul.f32 1.0, %v2925
        %v2927 = vrcp.pop %v2870
        %v2928 = vmul.f32 1.0, %v2927
        %v2929 = vrcp.pop %v2871
        %v2930 = vmul.f32 1.0, %v2929
        %v2931 = vrcp.pop %v2872
        %v2932 = vmul.f32 1.0, %v2931
        %v2933 = vrcp.pop %v2873
        %v2934 = vmul.f32 1.0, %v2933
        %v2935 = vrcp.pop %v2874
        %v2936 = vmul.f32 1.0, %v2935
        %v2937 = vrcp.pop %v2875
        %v2938 = vmul.f32 1.0, %v2937
        %v2939 = vrcp.pop %v2876
        %v2940 = vmul.f32 1.0, %v2939
        %2941 = vst [vmem:[%s508] sm:$0xff] %v2878
        %2942 = vst [vmem:[%s508 + $0x8] sm:$0xff] %v2880
        %2943 = vst [vmem:[%s508 + $0x10] sm:$0xff] %v2882
        %2944 = vst [vmem:[%s508 + $0x18] sm:$0xff] %v2884
        %2945 = vst [vmem:[%s508 + $0x20] sm:$0xff] %v2886
        %2946 = vst [vmem:[%s508 + $0x28] sm:$0xff] %v2888
        %2947 = vst [vmem:[%s508 + $0x30] sm:$0xff] %v2890
        %2948 = vst [vmem:[%s508 + $0x38] sm:$0xff] %v2892
        %2949 = vst [vmem:[%s508 + $0x40] sm:$0xff] %v2894
        %2950 = vst [vmem:[%s508 + $0x48] sm:$0xff] %v2896
        %2951 = vst [vmem:[%s508 + $0x50] sm:$0xff] %v2898
        %2952 = vst [vmem:[%s508 + $0x58] sm:$0xff] %v2900
        %2953 = vst [vmem:[%s508 + $0x60] sm:$0xff] %v2902
        %2954 = vst [vmem:[%s508 + $0x68] sm:$0xff] %v2904
        %2955 = vst [vmem:[%s508 + $0x70] sm:$0xff] %v2906
        %2956 = vst [vmem:[%s508 + $0x78] sm:$0xff] %v2908
        %2957 = vst [vmem:[%s508 + $0x80] sm:$0xff] %v2910
        %2958 = vst [vmem:[%s508 + $0x88] sm:$0xff] %v2912
        %2959 = vst [vmem:[%s508 + $0x90] sm:$0xff] %v2914
        %2960 = vst [vmem:[%s508 + $0x98] sm:$0xff] %v2916
        %2961 = vst [vmem:[%s508 + $0xa0] sm:$0xff] %v2918
        %2962 = vst [vmem:[%s508 + $0xa8] sm:$0xff] %v2920
        %2963 = vst [vmem:[%s508 + $0xb0] sm:$0xff] %v2922
        %2964 = vst [vmem:[%s508 + $0xb8] sm:$0xff] %v2924
        %2965 = vst [vmem:[%s508 + $0xc0] sm:$0xff] %v2926
        %2966 = vst [vmem:[%s508 + $0xc8] sm:$0xff] %v2928
        %2967 = vst [vmem:[%s508 + $0xd0] sm:$0xff] %v2930
        %2968 = vst [vmem:[%s508 + $0xd8] sm:$0xff] %v2932
        %2969 = vst [vmem:[%s508 + $0xe0] sm:$0xff] %v2934
        %2970 = vst [vmem:[%s508 + $0xe8] sm:$0xff] %v2936
        %2971 = vst [vmem:[%s508 + $0xf0] sm:$0xff] %v2938
        %2972 = vst [vmem:[%s508 + $0xf8] sm:$0xff] %v2940
        %2973 = vst [vmem:[%s515] sm:$0xff] %v1438
        %2974 = vst [vmem:[%s515 + $0x8] sm:$0xff] %v1441
        %2975 = vst [vmem:[%s515 + $0x10] sm:$0xff] %v1446
        %2976 = vst [vmem:[%s515 + $0x18] sm:$0xff] %v1449
        %2977 = vst [vmem:[%s515 + $0x20] sm:$0xff] %v1454
        %2978 = vst [vmem:[%s515 + $0x28] sm:$0xff] %v1457
        %2979 = vst [vmem:[%s515 + $0x30] sm:$0xff] %v1462
        %2980 = vst [vmem:[%s515 + $0x38] sm:$0xff] %v1465
        %2981 = vst [vmem:[%s515 + $0x40] sm:$0xff] %v1470
        %2982 = vst [vmem:[%s515 + $0x48] sm:$0xff] %v1473
        %2983 = vst [vmem:[%s515 + $0x50] sm:$0xff] %v1478
        %2984 = vst [vmem:[%s515 + $0x58] sm:$0xff] %v1481
        %2985 = vst [vmem:[%s515 + $0x60] sm:$0xff] %v1486
        %2986 = vst [vmem:[%s515 + $0x68] sm:$0xff] %v1489
        %2987 = vst [vmem:[%s515 + $0x70] sm:$0xff] %v1494
        %2988 = vst [vmem:[%s515 + $0x78] sm:$0xff] %v1497
        %2989 = vst [vmem:[%s515 + $0x80] sm:$0xff] %v1502
        %2990 = vst [vmem:[%s515 + $0x88] sm:$0xff] %v1505
        %2991 = vst [vmem:[%s515 + $0x90] sm:$0xff] %v1510
        %2992 = vst [vmem:[%s515 + $0x98] sm:$0xff] %v1513
        %2993 = vst [vmem:[%s515 + $0xa0] sm:$0xff] %v1518
        %2994 = vst [vmem:[%s515 + $0xa8] sm:$0xff] %v1521
        %2995 = vst [vmem:[%s515 + $0xb0] sm:$0xff] %v1526
        %2996 = vst [vmem:[%s515 + $0xb8] sm:$0xff] %v1529
        %2997 = vst [vmem:[%s515 + $0xc0] sm:$0xff] %v1534
        %2998 = vst [vmem:[%s515 + $0xc8] sm:$0xff] %v1537
        %2999 = vst [vmem:[%s515 + $0xd0] sm:$0xff] %v1542
        %3000 = vst [vmem:[%s515 + $0xd8] sm:$0xff] %v1545
        %3001 = vst [vmem:[%s515 + $0xe0] sm:$0xff] %v1550
        %3002 = vst [vmem:[%s515 + $0xe8] sm:$0xff] %v1553
        %3003 = vst [vmem:[%s515 + $0xf0] sm:$0xff] %v1558
        %3004 = vst [vmem:[%s515 + $0xf8] sm:$0xff] %v1561
        %s3005 = sand.u32 %s345, 1
        %s3006 = scalar_lea.sflag [#allocation3], %s3005
        %s3007 = sand.u32 %s345, 1
        %s3008 = smul.addr %s3007, 256
        %s3009 = scalar_lea.vmem [#allocation2], %s3008
        %s3010 = sand.u32 %s371, 1
        %s3011 = scalar_lea.sflag [#allocation5], %s3010
        %s3012 = sand.u32 %s371, 1
        %s3013 = smul.addr %s3012, 256
        %s3014 = scalar_lea.vmem [#allocation4], %s3013
        // Predicated region
        $region77: #{tpu_custom_call.1} parent=75 // pred_check
          %p3015 = pneg %p355
        $region78: #{tpu_custom_call.1} parent=75 // pred_check_branch
          %3017 = sbr.rel (%p3015) target = $region80
        $region79: #{tpu_custom_call.1} parent=75 // pred_region
          %s3018 = smul.u32 32, %s33
          %s3020 = ssub.s32 4096, 4096
          %3021 = vsyncadd %s3006, %s3020
          %s3022 = smul.addr %s3018, 128
          %s3023 = scalar_lea.hbm %s14, %s3022
          %s3024 = sshll.u32 %s3009, 4
          %s3025 = int_to_ptr.vmem [resolvable:$true] %s3024
          %3030 = dma.vmem_to_hbm [thread:$0]  %s3025, 4096, %s3023, %s3006, 128, 128, 8
        $region80: #{tpu_custom_call.1} parent=75 // pred_fallthru
          _
        // Predicated region
        $region81: #{tpu_custom_call.1} parent=75 // pred_check
          %p3031 = pneg %p381
        $region82: #{tpu_custom_call.1} parent=75 // pred_check_branch
          %3033 = sbr.rel (%p3031) target = $region84
        $region83: #{tpu_custom_call.1} parent=75 // pred_region
          %s3034 = smul.u32 32, %s33
          %s3036 = ssub.s32 4096, 4096
          %3037 = vsyncadd %s3011, %s3036
          %s3038 = smul.addr %s3034, 128
          %s3039 = scalar_lea.hbm %s15, %s3038
          %s3040 = sshll.u32 %s3014, 4
          %s3041 = int_to_ptr.vmem [resolvable:$true] %s3040
          %3046 = dma.vmem_to_hbm [thread:$0]  %s3041, 4096, %s3039, %s3011, 128, 128, 8
        $region84: #{tpu_custom_call.1} parent=75 // pred_fallthru
          _
      $region76: #{tpu_custom_call.1} parent=5 // pred_fallthru
        _
      %p3047 = scmp.le.s32.totalorder 2, %s28
      // Predicated region
      $region85: #{tpu_custom_call.1} parent=5 // pred_check
        %p3048 = pneg %p3047
      $region86: #{tpu_custom_call.1} parent=5 // pred_check_branch
        %3050 = sbr.rel (%p3048) target = $region88
      $region87: #{tpu_custom_call.1} parent=5 // pred_region
        %s3051 = ssub.s32 %s28, 2
        // Predicated region
        $region89: #{tpu_custom_call.1} parent=87 // pred_check
          %p3052 = pneg %p361
        $region90: #{tpu_custom_call.1} parent=87 // pred_check_branch
          %3054 = sbr.rel (%p3052) target = $region92
        $region91: #{tpu_custom_call.1} parent=87 // pred_region
          %s3055 = sand.u32 %s346, 1
          %s3056 = scalar_lea.sflag [#allocation3], %s3055
          %s3057 = sand.u32 %s346, 1
          %s3058 = smul.addr %s3057, 256
          %s3059 = scalar_lea.vmem [#allocation2], %s3058
          %3060 = dma.done %s3056, 4096
        $region92: #{tpu_custom_call.1} parent=87 // pred_fallthru
          _
        // Predicated region
        $region93: #{tpu_custom_call.1} parent=87 // pred_check
          %p3061 = pneg %p387
        $region94: #{tpu_custom_call.1} parent=87 // pred_check_branch
          %3063 = sbr.rel (%p3061) target = $region96
        $region95: #{tpu_custom_call.1} parent=87 // pred_region
          %s3064 = sand.u32 %s372, 1
          %s3065 = scalar_lea.sflag [#allocation5], %s3064
          %s3066 = sand.u32 %s372, 1
          %s3067 = smul.addr %s3066, 256
          %s3068 = scalar_lea.vmem [#allocation4], %s3067
          %3069 = dma.done %s3065, 4096
        $region96: #{tpu_custom_call.1} parent=87 // pred_fallthru
          _
      $region88: #{tpu_custom_call.1} parent=5 // pred_fallthru
        _
    $region6: #{tpu_custom_call.1} parent=1 // loop_footer
      %s32 = sadd.s32 1, %s28
    $region7: #{tpu_custom_call.1} parent=1 // loop_footer_branch
      %27 = sbr.rel target = $region3
    $region8: #{tpu_custom_call.1} parent=1 // loop_exit
      _
    %3070 = vsyncpa [#allocation3], 1
    %s3071 = scalar_lea.sflag [#allocation3], 1
    %3072 = vsyncpa %s3071, 1
    %3073 = vsyncpa [#allocation5], 1
    %s3074 = scalar_lea.sflag [#allocation5], 1
    %3075 = vsyncpa %s3074, 1

</llo_original>
